<compile_context>
chip_gen: v7x
topology: tpu7x:2x2x1
jax: 0.10.0
libtpu: 0.0.40
codegen_flags: <defaults>
</compile_context>

<pallas_src>
import functools

import jax
import jax.numpy as jnp
from jax.experimental import pallas as pl
from jax.experimental.pallas import tpu as pltpu

EPS = 1e-5


def _fused_kernel(x_ref, w1_ref, gamma_ref, beta_ref, res_ref, w2_ref, out_ref,
                  *, true_m):
    k = pl.program_id(1)  # Cmid block index (reduction axis of the 2nd conv)

    # conv2d81 (1x1, Cin -> this Cmid block): bf16 MXU, f32 accumulation.
    h = jnp.dot(w1_ref[...], x_ref[...],
                preferred_element_type=jnp.float32)            # [tcmid, M] f32

    # BatchNorm2d (training): biased batch statistics over the M = N*H*W
    # positions, all of which are present on the lane axis of this block, so
    # the stats are exact (no padded rows to correct for).  Mean-shifted
    # variance avoids the E[h^2] - mean^2 cancellation problem.
    inv_m = jnp.float32(1.0 / true_m)
    mean = jnp.sum(h, axis=1, keepdims=True) * inv_m            # [tcmid, 1]
    centered = h - mean
    var = jnp.sum(centered * centered, axis=1, keepdims=True) * inv_m
    scale = gamma_ref[...] * jax.lax.rsqrt(var + EPS)           # [tcmid, 1]

    # BN + residual add + ReLU epilogue (residual arrives bf16, upcast here).
    a = jnp.maximum(centered * scale + beta_ref[...]
                    + res_ref[...].astype(jnp.float32), 0.0)

    # conv2d82 (1x1, this Cmid block -> Cout block), accumulated over the
    # "arbitrary" Cmid grid axis directly into the VMEM-resident f32 output.
    part = jnp.dot(w2_ref[...], a.astype(jnp.bfloat16),
                   preferred_element_type=jnp.float32)          # [tcout, M]

    @pl.when(k == 0)
    def _():
        out_ref[...] = jnp.zeros_like(out_ref)

    out_ref[...] += part


def fused_block(x_cm, w1, gamma, beta, res_cm, w2, *, tcmid=256, cout_blocks=1):
    """x_cm: [Cin, M] bf16, w1: [Cmid, Cin] bf16, gamma/beta: [Cmid, 1] f32,
    res_cm: [Cmid, M] bf16, w2: [Cout, Cmid] bf16 -> [Cout, M] f32.

    cout_blocks > 1 adds a leading "parallel" grid axis over output channels
    (use 2 on v7x so both TensorCores are busy; keep 1 on v5e/v6e since it
    re-fetches W1/res once per output block)."""
    Cin, M = x_cm.shape
    Cmid = w1.shape[0]
    Cout = w2.shape[0]
    assert Cmid % tcmid == 0 and Cout % cout_blocks == 0
    tcout = Cout // cout_blocks

    # TODO(synk): for very large M (big batches) also tile M and switch BN to a
    # two-pass / partial-sum scheme; size tiles against v7x's 64 MiB VMEM.
    kernel = functools.partial(_fused_kernel, true_m=M)
    return pl.pallas_call(
        kernel,
        out_shape=jax.ShapeDtypeStruct((Cout, M), jnp.float32),
        grid=(cout_blocks, Cmid // tcmid),
        in_specs=[
            # x stays VMEM-resident across the whole grid (block index fixed).
            pl.BlockSpec((Cin, M), lambda j, k: (0, 0)),
            pl.BlockSpec((tcmid, Cin), lambda j, k: (k, 0)),    # W1 slice
            pl.BlockSpec((tcmid, 1), lambda j, k: (k, 0)),      # gamma slice
            pl.BlockSpec((tcmid, 1), lambda j, k: (k, 0)),      # beta slice
            pl.BlockSpec((tcmid, M), lambda j, k: (k, 0)),      # residual slice
            pl.BlockSpec((tcout, tcmid), lambda j, k: (j, k)),  # W2 slice
        ],
        out_specs=pl.BlockSpec((tcout, M), lambda j, k: (j, 0)),
        compiler_params=pltpu.CompilerParams(
            dimension_semantics=("parallel", "arbitrary")),
    )(x_cm, w1, gamma, beta, res_cm, w2)


def module_forward(x266, x260, params, *, cout_blocks=1):
    """NCHW adapter matching the PyTorch module signature.

    For N == 1 the NCHW -> [C, N*H*W] views below are pure reshapes (no data
    movement); the only wrapper-side work is the f32 -> bf16 casts, which in a
    real pipeline should be fused into (or removed from) the producing ops.
    Output stays f32 to match the module; emit bf16 here if the consumer
    accepts it."""
    N, Cin, H, W = x266.shape
    Cmid = x260.shape[1]
    M = N * H * W
    x_cm = jnp.transpose(x266, (1, 0, 2, 3)).reshape(Cin, M)
    r_cm = jnp.transpose(x260, (1, 0, 2, 3)).reshape(Cmid, M)
    out_cm = fused_block(x_cm.astype(jnp.bfloat16), params["w1"],
                         params["gamma"], params["beta"],
                         r_cm.astype(jnp.bfloat16), params["w2"],
                         cout_blocks=cout_blocks)
    Cout = params["w2"].shape[0]
    return jnp.transpose(out_cm.reshape(Cout, N, H, W), (1, 0, 2, 3))


def make_params(key, c_in=512, c_mid=1024, c_out=512):
    # TODO(synk): BatchNorm2d running_mean/running_var buffer updates (training
    # side effect) are not modeled; only the forward activation is reproduced.
    k1, k2 = jax.random.split(key)
    # conv2d81.weight: PyTorch [1024, 512, 1, 1] -> [Cmid, Cin] (native layout).
    w1 = jax.random.normal(k1, (c_mid, c_in), jnp.float32) / jnp.sqrt(c_in)
    # conv2d82.weight: PyTorch [512, 1024, 1, 1] -> [Cout, Cmid] (native layout).
    w2 = jax.random.normal(k2, (c_out, c_mid), jnp.float32) / jnp.sqrt(c_mid)
    gamma = jnp.ones((c_mid, 1), jnp.float32)
    beta = jnp.zeros((c_mid, 1), jnp.float32)
    # Weights feed the MXU directly; store them bf16 (halves weight HBM traffic,
    # full bf16 MXU rate with f32 accumulation).
    return {"w1": w1.astype(jnp.bfloat16), "w2": w2.astype(jnp.bfloat16),
            "gamma": gamma, "beta": beta}


def reference_forward(x266, x260, params, *, match_kernel_casts=True):
    """Pure-JAX reference.  match_kernel_casts=True applies the same bf16 casts
    as the kernel (tight check); False keeps the activation path f32 (semantic
    check against the original module's math)."""
    N, Cin, H, W = x266.shape
    Cmid = x260.shape[1]
    x_cm = jnp.transpose(x266, (1, 0, 2, 3)).reshape(Cin, -1)
    r_cm = jnp.transpose(x260, (1, 0, 2, 3)).reshape(Cmid, -1)
    if match_kernel_casts:
        h = jnp.dot(params["w1"], x_cm.astype(jnp.bfloat16),
                    preferred_element_type=jnp.float32)
        r = r_cm.astype(jnp.bfloat16).astype(jnp.float32)
    else:
        h = jnp.dot(params["w1"].astype(jnp.float32), x_cm,
                    preferred_element_type=jnp.float32)
        r = r_cm
    mean = jnp.mean(h, axis=1, keepdims=True)
    var = jnp.mean((h - mean) ** 2, axis=1, keepdims=True)
    hb = (h - mean) * jax.lax.rsqrt(var + EPS) * params["gamma"] + params["beta"]
    a = jnp.maximum(hb + r, 0.0)
    if match_kernel_casts:
        o = jnp.dot(params["w2"], a.astype(jnp.bfloat16),
                    preferred_element_type=jnp.float32)
    else:
        o = jnp.dot(params["w2"].astype(jnp.float32), a,
                    preferred_element_type=jnp.float32)
    Cout = params["w2"].shape[0]
    return jnp.transpose(o.reshape(Cout, N, H, W), (1, 0, 2, 3))


if __name__ == "__main__":
    key = jax.random.PRNGKey(0)
    kx, kr, kp = jax.random.split(key, 3)

    # Shapes from the module's forward: x266 [1,512,14,14], x260 [1,1024,14,14].
    x266 = jax.random.normal(kx, (1, 512, 14, 14), jnp.float32)
    x260 = jax.random.normal(kr, (1, 1024, 14, 14), jnp.float32)
    params = make_params(kp)

    fwd = jax.jit(module_forward, static_argnames=("cout_blocks",))

    ref_bits = reference_forward(x266, x260, params, match_kernel_casts=True)
    ref_f32 = reference_forward(x266, x260, params, match_kernel_casts=False)

    # Default path (single output block: the right choice for 1-TC v5e/v6e).
    out = jax.block_until_ready(fwd(x266, x260, params))
    assert out.shape == (1, 512, 14, 14)
    assert jnp.allclose(out, ref_bits, atol=2e-3, rtol=2e-3), \
        "mismatch vs matched reference"
    rel = jnp.linalg.norm(out - ref_f32) / jnp.linalg.norm(ref_f32)
    assert float(rel) < 3e-2, f"relative error vs f32 reference too high: {rel}"

    # v7x-style path: two output-channel blocks on the leading "parallel" grid
    # axis so both TensorCores get work.  Same math, different grid.
    out2 = jax.block_until_ready(fwd(x266, x260, params, cout_blocks=2))
    assert jnp.allclose(out2, ref_bits, atol=2e-3, rtol=2e-3), \
        "mismatch vs matched reference (cout_blocks=2)"

    print("KERNEL_OK")
</pallas_src>

<mosaic_0001>
module attributes {stable_mosaic.version = 11 : i64} {
  func.func @_fused_kernel(%arg0: i32, %arg1: i32, %arg2: memref<512x196xbf16, #tpu.memory_space<vmem>>, %arg3: memref<256x512xbf16, #tpu.memory_space<vmem>>, %arg4: memref<256x1xf32, #tpu.memory_space<vmem>>, %arg5: memref<256x1xf32, #tpu.memory_space<vmem>>, %arg6: memref<256x196xbf16, #tpu.memory_space<vmem>>, %arg7: memref<512x256xbf16, #tpu.memory_space<vmem>>, %arg8: memref<512x196xf32, #tpu.memory_space<vmem>>) attributes {dimension_semantics = [#tpu.dimension_semantics<parallel>, #tpu.dimension_semantics<arbitrary>], iteration_bounds = array<i64: 1, 4>, scalar_prefetch = 0 : i64, scratch_operands = 0 : i64, tpu.core_type = #tpu.core_type<tc>, window_params = [{pipeline_mode = #tpu.pipeline_mode<synchronous>, transform_indices = @transform_0, window_bounds = array<i64: 512, 196>}, {transform_indices = @transform_1, window_bounds = array<i64: 256, 512>}, {transform_indices = @transform_2, window_bounds = array<i64: 256, 1>}, {transform_indices = @transform_3, window_bounds = array<i64: 256, 1>}, {transform_indices = @transform_4, window_bounds = array<i64: 256, 196>}, {transform_indices = @transform_5, window_bounds = array<i64: 512, 256>}, {transform_indices = @transform_6, window_bounds = array<i64: 512, 196>}]} {
    %c0 = arith.constant 0 : index
    %c0_0 = arith.constant 0 : index
    %0 = vector.load %arg3[%c0, %c0_0] : memref<256x512xbf16, #tpu.memory_space<vmem>>, vector<256x512xbf16>
    %c0_1 = arith.constant 0 : index
    %c0_2 = arith.constant 0 : index
    %1 = vector.load %arg2[%c0_1, %c0_2] : memref<512x196xbf16, #tpu.memory_space<vmem>>, vector<512x196xbf16>
    %cst = arith.constant dense<0.000000e+00> : vector<256x196xf32>
    %2 = tpu.matmul %0, %1, %cst {dimension_numbers = #tpu.dot_dimension_numbers<[1], [0], [0], [1], [0, 0, 1, 1], [], []>} : vector<256x512xbf16>, vector<512x196xbf16>, vector<256x196xf32> -> vector<256x196xf32>
    %cst_3 = arith.constant dense<0.000000e+00> : vector<256xf32>
    %3 = vector.multi_reduction <add>, %2, %cst_3 [1] : vector<256x196xf32> to vector<256xf32>
    %4 = vector.shape_cast %3 : vector<256xf32> to vector<256x1xf32>
    %cst_4 = arith.constant 0.00510204071 : f32
    %5 = vector.broadcast %cst_4 : f32 to vector<256x1xf32>
    %6 = arith.mulf %4, %5 : vector<256x1xf32>
    %7 = vector.broadcast %6 : vector<256x1xf32> to vector<256x196xf32>
    %8 = arith.subf %2, %7 : vector<256x196xf32>
    %9 = arith.mulf %8, %8 : vector<256x196xf32>
    %cst_5 = arith.constant dense<0.000000e+00> : vector<256xf32>
    %10 = vector.multi_reduction <add>, %9, %cst_5 [1] : vector<256x196xf32> to vector<256xf32>
    %11 = vector.shape_cast %10 : vector<256xf32> to vector<256x1xf32>
    %cst_6 = arith.constant 0.00510204071 : f32
    %12 = vector.broadcast %cst_6 : f32 to vector<256x1xf32>
    %13 = arith.mulf %11, %12 : vector<256x1xf32>
    %c0_7 = arith.constant 0 : index
    %c0_8 = arith.constant 0 : index
    %14 = vector.load %arg4[%c0_7, %c0_8] : memref<256x1xf32, #tpu.memory_space<vmem>>, vector<256x1xf32>
    %cst_9 = arith.constant 9.99999974E-6 : f32
    %15 = vector.broadcast %cst_9 : f32 to vector<256x1xf32>
    %16 = arith.addf %13, %15 : vector<256x1xf32>
    %17 = math.rsqrt %16 : vector<256x1xf32>
    %18 = arith.mulf %14, %17 : vector<256x1xf32>
    %19 = vector.broadcast %18 : vector<256x1xf32> to vector<256x196xf32>
    %20 = arith.mulf %8, %19 : vector<256x196xf32>
    %c0_10 = arith.constant 0 : index
    %c0_11 = arith.constant 0 : index
    %21 = vector.load %arg5[%c0_10, %c0_11] : memref<256x1xf32, #tpu.memory_space<vmem>>, vector<256x1xf32>
    %22 = vector.broadcast %21 : vector<256x1xf32> to vector<256x196xf32>
    %23 = arith.addf %20, %22 : vector<256x196xf32>
    %c0_12 = arith.constant 0 : index
    %c0_13 = arith.constant 0 : index
    %24 = vector.load %arg6[%c0_12, %c0_13] : memref<256x196xbf16, #tpu.memory_space<vmem>>, vector<256x196xbf16>
    %25 = arith.extf %24 : vector<256x196xbf16> to vector<256x196xf32>
    %26 = arith.addf %23, %25 : vector<256x196xf32>
    %cst_14 = arith.constant 0.000000e+00 : f32
    %27 = vector.broadcast %cst_14 : f32 to vector<256x196xf32>
    %28 = arith.maximumf %26, %27 : vector<256x196xf32>
    %c0_15 = arith.constant 0 : index
    %c0_16 = arith.constant 0 : index
    %29 = vector.load %arg7[%c0_15, %c0_16] : memref<512x256xbf16, #tpu.memory_space<vmem>>, vector<512x256xbf16>
    %30 = arith.truncf %28 : vector<256x196xf32> to vector<256x196xbf16>
    %cst_17 = arith.constant dense<0.000000e+00> : vector<512x196xf32>
    %31 = tpu.matmul %29, %30, %cst_17 {dimension_numbers = #tpu.dot_dimension_numbers<[1], [0], [0], [1], [0, 0, 1, 1], [], []>} : vector<512x256xbf16>, vector<256x196xbf16>, vector<512x196xf32> -> vector<512x196xf32>
    %c0_i32 = arith.constant 0 : i32
    %32 = arith.cmpi eq, %arg1, %c0_i32 : i32
    %33 = arith.extui %32 : i1 to i32
    %c0_i32_18 = arith.constant 0 : i32
    %34 = arith.cmpi ne, %33, %c0_i32_18 : i32
    scf.if %34 {
      %cst_23 = arith.constant 0.000000e+00 : f32
      %38 = vector.broadcast %cst_23 : f32 to vector<512x196xf32>
      %c0_24 = arith.constant 0 : index
      %c0_25 = arith.constant 0 : index
      %39 = vector.load %arg8[%c0_24, %c0_25] : memref<512x196xf32, #tpu.memory_space<vmem>>, vector<512x196xf32>
      tpu.vector_store %arg8[%c0_24, %c0_25], %38 {strides = array<i32>} : memref<512x196xf32, #tpu.memory_space<vmem>>, vector<512x196xf32>,
    } else {
    }
    %c0_19 = arith.constant 0 : index
    %c0_20 = arith.constant 0 : index
    %35 = vector.load %arg8[%c0_19, %c0_20] : memref<512x196xf32, #tpu.memory_space<vmem>>, vector<512x196xf32>
    %36 = arith.addf %35, %31 : vector<512x196xf32>
    %c0_21 = arith.constant 0 : index
    %c0_22 = arith.constant 0 : index
    %37 = vector.load %arg8[%c0_21, %c0_22] : memref<512x196xf32, #tpu.memory_space<vmem>>, vector<512x196xf32>
    tpu.vector_store %arg8[%c0_21, %c0_22], %36 {strides = array<i32>} : memref<512x196xf32, #tpu.memory_space<vmem>>, vector<512x196xf32>,
    return
  }
  func.func @transform_0(%arg0: i32, %arg1: i32) -> (i32, i32) {
    %c0_i32 = arith.constant 0 : i32
    %c0_i32_0 = arith.constant 0 : i32
    %c0_i32_1 = arith.constant 0 : i32
    return %c0_i32, %c0_i32_0 : i32, i32
  }
  func.func @transform_1(%arg0: i32, %arg1: i32) -> (i32, i32) {
    %c0_i32 = arith.constant 0 : i32
    %c0_i32_0 = arith.constant 0 : i32
    return %arg1, %c0_i32 : i32, i32
  }
  func.func @transform_2(%arg0: i32, %arg1: i32) -> (i32, i32) {
    %c0_i32 = arith.constant 0 : i32
    %c0_i32_0 = arith.constant 0 : i32
    return %arg1, %c0_i32 : i32, i32
  }
  func.func @transform_3(%arg0: i32, %arg1: i32) -> (i32, i32) {
    %c0_i32 = arith.constant 0 : i32
    %c0_i32_0 = arith.constant 0 : i32
    return %arg1, %c0_i32 : i32, i32
  }
  func.func @transform_4(%arg0: i32, %arg1: i32) -> (i32, i32) {
    %c0_i32 = arith.constant 0 : i32
    %c0_i32_0 = arith.constant 0 : i32
    return %arg1, %c0_i32 : i32, i32
  }
  func.func @transform_5(%arg0: i32, %arg1: i32) -> (i32, i32) {
    %c0_i32 = arith.constant 0 : i32
    return %arg0, %arg1 : i32, i32
  }
  func.func @transform_6(%arg0: i32, %arg1: i32) -> (i32, i32) {
    %c0_i32 = arith.constant 0 : i32
    %c0_i32_0 = arith.constant 0 : i32
    return %arg0, %c0_i32 : i32, i32
  }
}

</mosaic_0001>

<llo_original>
// kernel: module_forward.1
$region0: #{module_forward.1}
  #allocation0 [shape = 'u32[]', space=smem, size = 0x4, offset = 0x4, fixed_abs, tag = 'smem constant byte address 0x4 - core index']
  #allocation1 [shape = 'u32[144,128]{1,0:T(1,128)}', space=vmem, size = 0x12000, scoped, tag = 'internal scratch']
  %s0 = inlined_call_operand.vmem [shape: bf16[512,196], index: 0, kind: input, shape index: {}]
  %s1 = inlined_call_operand.vmem [shape: bf16[1024,512], index: 1, kind: input, shape index: {}]
  %s2 = inlined_call_operand.vmem [shape: f32[1024,1], index: 2, kind: input, shape index: {}]
  %s3 = inlined_call_operand.vmem [shape: f32[1024,1], index: 3, kind: input, shape index: {}]
  %s4 = inlined_call_operand.vmem [shape: bf16[1024,196], index: 4, kind: input, shape index: {}]
  %s5 = inlined_call_operand.vmem [shape: bf16[512,1024], index: 5, kind: input, shape index: {}]
  %s6 = inlined_call_operand.vmem [shape: f32[512,196], index: 6, kind: output, shape index: {}]
  %s7 = sld [smem:[#allocation0]]
  $region99: #{module_forward.1} parent=0
    _
  %s9 = ssub.s32 1, %s7
  %s10 = scalar_select 0, %s9, %s7
  $region1: #{module_forward.1} parent=0
    #allocation2 [shape = 'u8[524288]{0}', space=vmem, size = 0x80000, scoped, tag = 'input window, operand 5']
    loop: start=0, step=1, limit=6
    $region2: #{module_forward.1} parent=1 // loop_pre_header
      _
    $region3: #{module_forward.1} parent=1 // loop_header
      %s12 = sphi 0, %s16
      %p13 = scmp.ge.s32.totalorder %s12, 6
      %s19 = sphi 0, %s31
      %s20 = sphi 0, %s27
      %s21 = sphi 0, %s19
      %s22 = sphi 0, %s20
      %s23 = sphi 0, %s21
      %s24 = sphi 0, %s22
      %s32 = sphi 0, %s32
      %s34 = sphi 0, %s32
      %s35 = sphi 0, %s34
      %s49 = sphi 0, %s35
      %s55 = sphi 0, %s57
      %s58 = sphi 0, %s55
      %s59 = sphi 0, %s58
      %s75 = sphi 0, %s59
      %s81 = sphi 0, %s83
      %s84 = sphi 0, %s81
      %s85 = sphi 0, %s84
      %s101 = sphi 0, %s85
      %s107 = sphi 0, %s109
      %s110 = sphi 0, %s107
      %s111 = sphi 0, %s110
      %s127 = sphi 0, %s111
      %s133 = sphi 0, %s135
      %s136 = sphi 0, %s133
      %s137 = sphi 0, %s136
      %s153 = sphi 0, %s137
      %s161 = sphi 0, %s163
      %s164 = sphi 0, %s161
      %s165 = sphi 0, %s164
      %s181 = sphi 0, %s165
      %s187 = sphi 0, %s189
      %s190 = sphi 0, %s187
      %s191 = sphi 0, %s190
      %s207 = sphi 0, %s191
    $region4: #{module_forward.1} parent=1 // loop_header_branch
      %15 = sbr.rel (%p13) target = $region8
    $region5: #{module_forward.1} parent=1 // loop_body
      %s17 = ssub.s32 %s12, 1
      %s18 = ssub.s32 %s12, 2
      %s25 = sadd.s32 1, %s20
      %p26 = scmp.ge.s32.totalorder %s25, 4
      %s27 = scalar_select %p26, 0, %s25
      %s28 = sadd.s32 1, %s19
      %s29 = scalar_select %p26, %s28, %s19
      %p30 = scmp.ge.s32.totalorder %s29, 1
      %s31 = scalar_select %p30, 0, %s29
      %s33 = sadd.s32 %s32, 1
      %p36 = scmp.eq.s32.totalorder %s12, 3
      %p37 = scmp.ne.s32.totalorder %s32, %s34
      %p38 = scmp.eq.s32.totalorder %s12, 0
      %p39 = por %p37, %p38
      %p40 = scmp.ne.s32.totalorder %s32, %s34
      %p41 = scmp.eq.s32.totalorder %s17, 3
      %p42 = por %p40, %p41
      %p43 = scmp.ne.s32.totalorder %s34, %s35
      %p44 = scmp.eq.s32.totalorder %s17, 0
      %p45 = por %p43, %p44
      %p46 = scmp.ne.s32.totalorder %s34, %s35
      %p47 = scmp.eq.s32.totalorder %s18, 3
      %p48 = por %p46, %p47
      %p50 = scmp.ne.s32.totalorder %s35, %s49
      %p51 = scmp.eq.s32.totalorder %s18, 0
      %p52 = por %p50, %p51
      %s53 = ssub.s32 %s20, %s27
      %p54 = scmp.eq.s32.totalorder %s53, 0
      %s56 = sadd.s32 %s55, 1
      %s57 = scalar_select %p54, %s55, %s56
      %p60 = pneg %p54
      %p61 = scmp.eq.s32.totalorder %s12, 3
      %p62 = por %p60, %p61
      %p63 = scmp.ne.s32.totalorder %s55, %s58
      %p64 = scmp.eq.s32.totalorder %s12, 0
      %p65 = por %p63, %p64
      %p66 = scmp.ne.s32.totalorder %s55, %s58
      %p67 = scmp.eq.s32.totalorder %s17, 3
      %p68 = por %p66, %p67
      %p69 = scmp.ne.s32.totalorder %s58, %s59
      %p70 = scmp.eq.s32.totalorder %s17, 0
      %p71 = por %p69, %p70
      %p72 = scmp.ne.s32.totalorder %s58, %s59
      %p73 = scmp.eq.s32.totalorder %s18, 3
      %p74 = por %p72, %p73
      %p76 = scmp.ne.s32.totalorder %s59, %s75
      %p77 = scmp.eq.s32.totalorder %s18, 0
      %p78 = por %p76, %p77
      %s79 = ssub.s32 %s20, %s27
      %p80 = scmp.eq.s32.totalorder %s79, 0
      %s82 = sadd.s32 %s81, 1
      %s83 = scalar_select %p80, %s81, %s82
      %p86 = pneg %p80
      %p87 = scmp.eq.s32.totalorder %s12, 3
      %p88 = por %p86, %p87
      %p89 = scmp.ne.s32.totalorder %s81, %s84
      %p90 = scmp.eq.s32.totalorder %s12, 0
      %p91 = por %p89, %p90
      %p92 = scmp.ne.s32.totalorder %s81, %s84
      %p93 = scmp.eq.s32.totalorder %s17, 3
      %p94 = por %p92, %p93
      %p95 = scmp.ne.s32.totalorder %s84, %s85
      %p96 = scmp.eq.s32.totalorder %s17, 0
      %p97 = por %p95, %p96
      %p98 = scmp.ne.s32.totalorder %s84, %s85
      %p99 = scmp.eq.s32.totalorder %s18, 3
      %p100 = por %p98, %p99
      %p102 = scmp.ne.s32.totalorder %s85, %s101
      %p103 = scmp.eq.s32.totalorder %s18, 0
      %p104 = por %p102, %p103
      %s105 = ssub.s32 %s20, %s27
      %p106 = scmp.eq.s32.totalorder %s105, 0
      %s108 = sadd.s32 %s107, 1
      %s109 = scalar_select %p106, %s107, %s108
      %p112 = pneg %p106
      %p113 = scmp.eq.s32.totalorder %s12, 3
      %p114 = por %p112, %p113
      %p115 = scmp.ne.s32.totalorder %s107, %s110
      %p116 = scmp.eq.s32.totalorder %s12, 0
      %p117 = por %p115, %p116
      %p118 = scmp.ne.s32.totalorder %s107, %s110
      %p119 = scmp.eq.s32.totalorder %s17, 3
      %p120 = por %p118, %p119
      %p121 = scmp.ne.s32.totalorder %s110, %s111
      %p122 = scmp.eq.s32.totalorder %s17, 0
      %p123 = por %p121, %p122
      %p124 = scmp.ne.s32.totalorder %s110, %s111
      %p125 = scmp.eq.s32.totalorder %s18, 3
      %p126 = por %p124, %p125
      %p128 = scmp.ne.s32.totalorder %s111, %s127
      %p129 = scmp.eq.s32.totalorder %s18, 0
      %p130 = por %p128, %p129
      %s131 = ssub.s32 %s20, %s27
      %p132 = scmp.eq.s32.totalorder %s131, 0
      %s134 = sadd.s32 %s133, 1
      %s135 = scalar_select %p132, %s133, %s134
      %p138 = pneg %p132
      %p139 = scmp.eq.s32.totalorder %s12, 3
      %p140 = por %p138, %p139
      %p141 = scmp.ne.s32.totalorder %s133, %s136
      %p142 = scmp.eq.s32.totalorder %s12, 0
      %p143 = por %p141, %p142
      %p144 = scmp.ne.s32.totalorder %s133, %s136
      %p145 = scmp.eq.s32.totalorder %s17, 3
      %p146 = por %p144, %p145
      %p147 = scmp.ne.s32.totalorder %s136, %s137
      %p148 = scmp.eq.s32.totalorder %s17, 0
      %p149 = por %p147, %p148
      %p150 = scmp.ne.s32.totalorder %s136, %s137
      %p151 = scmp.eq.s32.totalorder %s18, 3
      %p152 = por %p150, %p151
      %p154 = scmp.ne.s32.totalorder %s137, %s153
      %p155 = scmp.eq.s32.totalorder %s18, 0
      %p156 = por %p154, %p155
      %s157 = ssub.s32 %s19, %s31
      %s158 = ssub.s32 %s20, %s27
      %s159 = sor.u32 %s157, %s158
      %p160 = scmp.eq.s32.totalorder %s159, 0
      %s162 = sadd.s32 %s161, 1
      %s163 = scalar_select %p160, %s161, %s162
      %p166 = pneg %p160
      %p167 = scmp.eq.s32.totalorder %s12, 3
      %p168 = por %p166, %p167
      %p169 = scmp.ne.s32.totalorder %s161, %s164
      %p170 = scmp.eq.s32.totalorder %s12, 0
      %p171 = por %p169, %p170
      %p172 = scmp.ne.s32.totalorder %s161, %s164
      %p173 = scmp.eq.s32.totalorder %s17, 3
      %p174 = por %p172, %p173
      %p175 = scmp.ne.s32.totalorder %s164, %s165
      %p176 = scmp.eq.s32.totalorder %s17, 0
      %p177 = por %p175, %p176
      %p178 = scmp.ne.s32.totalorder %s164, %s165
      %p179 = scmp.eq.s32.totalorder %s18, 3
      %p180 = por %p178, %p179
      %p182 = scmp.ne.s32.totalorder %s165, %s181
      %p183 = scmp.eq.s32.totalorder %s18, 0
      %p184 = por %p182, %p183
      %s185 = ssub.s32 %s19, %s31
      %p186 = scmp.eq.s32.totalorder %s185, 0
      %s188 = sadd.s32 %s187, 1
      %s189 = scalar_select %p186, %s187, %s188
      %p192 = pneg %p186
      %p193 = scmp.eq.s32.totalorder %s12, 3
      %p194 = por %p192, %p193
      %p195 = scmp.ne.s32.totalorder %s187, %s190
      %p196 = scmp.eq.s32.totalorder %s12, 0
      %p197 = por %p195, %p196
      %p198 = scmp.ne.s32.totalorder %s187, %s190
      %p199 = scmp.eq.s32.totalorder %s17, 3
      %p200 = por %p198, %p199
      %p201 = scmp.ne.s32.totalorder %s190, %s191
      %p202 = scmp.eq.s32.totalorder %s17, 0
      %p203 = por %p201, %p202
      %p204 = scmp.ne.s32.totalorder %s190, %s191
      %p205 = scmp.eq.s32.totalorder %s18, 3
      %p206 = por %p204, %p205
      %p208 = scmp.ne.s32.totalorder %s191, %s207
      %p209 = scmp.eq.s32.totalorder %s18, 0
      %p210 = por %p208, %p209
      %p211 = scmp.le.s32.totalorder 1, %s12
      %p212 = scmp.lt.s32.totalorder %s12, 5
      %p213 = pnand %p211, %p212
      %p214 = pneg %p213
      // Predicated region
      $region9: #{module_forward.1} parent=5 // pred_check
        _
      $region10: #{module_forward.1} parent=5 // pred_check_branch
        %216 = sbr.rel (%p213) target = $region12
      $region11: #{module_forward.1} parent=5 // pred_region
        %s217 = ssub.s32 %s12, 1
        // Predicated region
        $region13: #{module_forward.1} parent=11 // pred_check
          %p218 = pneg %p45
        $region14: #{module_forward.1} parent=11 // pred_check_branch
          %220 = sbr.rel (%p218) target = $region16
        $region15: #{module_forward.1} parent=11 // pred_region
          _
        $region16: #{module_forward.1} parent=11 // pred_fallthru
          _
      $region12: #{module_forward.1} parent=5 // pred_fallthru
        _
      %p221 = scmp.lt.s32.totalorder %s12, 4
      // Predicated region
      $region17: #{module_forward.1} parent=5 // pred_check
        %p222 = pneg %p221
      $region18: #{module_forward.1} parent=5 // pred_check_branch
        %224 = sbr.rel (%p222) target = $region20
      $region19: #{module_forward.1} parent=5 // pred_region
        // Predicated region
        $region21: #{module_forward.1} parent=19 // pred_check
          %p225 = pneg %p65
        $region22: #{module_forward.1} parent=19 // pred_check_branch
          %227 = sbr.rel (%p225) target = $region24
        $region23: #{module_forward.1} parent=19 // pred_region
          %s228 = smul.u32 32, %s20
          %p229 = scmp.lt.s32.totalorder %s228, 127
          %s230 = scalar_select %p229, %s228, 127
          %s231 = smul.addr %s230, 4
          %s232 = smul.addr %s231, 4
          %s233 = scalar_lea.vmem %s1, %s232
          %s234 = smul.u32 32, %s20
        $region24: #{module_forward.1} parent=19 // pred_fallthru
          _
        // Predicated region
        $region25: #{module_forward.1} parent=19 // pred_check
          %p235 = pneg %p91
        $region26: #{module_forward.1} parent=19 // pred_check_branch
          %237 = sbr.rel (%p235) target = $region28
        $region27: #{module_forward.1} parent=19 // pred_region
          %s238 = smul.u32 32, %s20
          %p239 = scmp.lt.s32.totalorder %s238, 127
          %s240 = scalar_select %p239, %s238, 127
          %s241 = smul.addr %s240, 8
          %s242 = scalar_lea.vmem %s2, %s241
          %s243 = smul.u32 32, %s20
        $region28: #{module_forward.1} parent=19 // pred_fallthru
          _
        // Predicated region
        $region29: #{module_forward.1} parent=19 // pred_check
          %p244 = pneg %p117
        $region30: #{module_forward.1} parent=19 // pred_check_branch
          %246 = sbr.rel (%p244) target = $region32
        $region31: #{module_forward.1} parent=19 // pred_region
          %s247 = smul.u32 32, %s20
          %p248 = scmp.lt.s32.totalorder %s247, 127
          %s249 = scalar_select %p248, %s247, 127
          %s250 = smul.addr %s249, 8
          %s251 = scalar_lea.vmem %s3, %s250
          %s252 = smul.u32 32, %s20
        $region32: #{module_forward.1} parent=19 // pred_fallthru
          _
        // Predicated region
        $region33: #{module_forward.1} parent=19 // pred_check
          %p253 = pneg %p143
        $region34: #{module_forward.1} parent=19 // pred_check_branch
          %255 = sbr.rel (%p253) target = $region36
        $region35: #{module_forward.1} parent=19 // pred_region
          %s256 = smul.u32 32, %s20
          %p257 = scmp.lt.s32.totalorder %s256, 127
          %s258 = scalar_select %p257, %s256, 127
          %s259 = smul.addr %s258, 2
          %s260 = smul.addr %s259, 4
          %s261 = scalar_lea.vmem %s4, %s260
          %s262 = smul.u32 32, %s20
        $region36: #{module_forward.1} parent=19 // pred_fallthru
          _
        // Predicated region
        $region37: #{module_forward.1} parent=19 // pred_check
          %p263 = pneg %p171
        $region38: #{module_forward.1} parent=19 // pred_check_branch
          %265 = sbr.rel (%p263) target = $region40
        $region39: #{module_forward.1} parent=19 // pred_region
          %s266 = sand.u32 %s161, 1
          %s267 = sand.u32 %s161, 1
          %s268 = smul.addr %s267, 512
          %s269 = scalar_lea.vmem [#allocation2], %s268
          %s270 = smul.u32 64, %s19
          %s271 = smul.u32 2, %s20
          %s272 = smul.addr %s270, 8
          %s273 = sadd.s32 %s271, %s272
          %s274 = smul.addr %s273, 4
          %s275 = scalar_lea.vmem %s5, %s274
          // Predicated region
          $region41: #{module_forward.1} parent=39 // pred_check
            _
          $region42: #{module_forward.1} parent=39 // pred_check_branch
            %277 = sbr.rel (0) target = $region44
          $region43: #{module_forward.1} parent=39 // pred_region
            // Predicated region
            $region45: #{module_forward.1} parent=43 // pred_check
              _
            $region46: #{module_forward.1} parent=43 // pred_check_branch
              %279 = sbr.rel (0) target = $region48
            $region47: #{module_forward.1} parent=43 // pred_region
              // Predicated region
              $region60: #{module_forward.1} parent=47 // pred_check
                _
              $region61: #{module_forward.1} parent=47 // pred_check_branch
                %420 = sbr.rel (0) target = $region63
              $region62: #{module_forward.1} parent=47 // pred_region
                loop: start=0, step=1, limit=1
                $region64: #{module_forward.1} parent=62 // loop_pre_header
                  _
                $region65: #{module_forward.1} parent=62 // loop_header
                  %s422 = sphi 0, %s426
                  %p423 = scmp.ge.s32.totalorder %s422, 1
                  %s427 = sphi %s275, %s275
                  %s428 = sphi %s269, %s269
                $region66: #{module_forward.1} parent=62 // loop_header_branch
                  %425 = sbr.rel (%p423) target = $region70
                $region67: #{module_forward.1} parent=62 // loop_body
                  %v429 = vld [vmem:[%s427] sm:$0xff]
                  %430 = vst [vmem:[%s428] sm:$0xff] %v429
                  %v431 = vld [vmem:[%s427 + $0x20] sm:$0xff]
                  %432 = vst [vmem:[%s428 + $0x8] sm:$0xff] %v431
                  %v433 = vld [vmem:[%s427 + $0x40] sm:$0xff]
                  %434 = vst [vmem:[%s428 + $0x10] sm:$0xff] %v433
                  %v435 = vld [vmem:[%s427 + $0x60] sm:$0xff]
                  %436 = vst [vmem:[%s428 + $0x18] sm:$0xff] %v435
                  %v437 = vld [vmem:[%s427 + $0x80] sm:$0xff]
                  %438 = vst [vmem:[%s428 + $0x20] sm:$0xff] %v437
                  %v439 = vld [vmem:[%s427 + $0xa0] sm:$0xff]
                  %440 = vst [vmem:[%s428 + $0x28] sm:$0xff] %v439
                  %v441 = vld [vmem:[%s427 + $0xc0] sm:$0xff]
                  %442 = vst [vmem:[%s428 + $0x30] sm:$0xff] %v441
                  %v443 = vld [vmem:[%s427 + $0xe0] sm:$0xff]
                  %444 = vst [vmem:[%s428 + $0x38] sm:$0xff] %v443
                  %v445 = vld [vmem:[%s427 + $0x100] sm:$0xff]
                  %446 = vst [vmem:[%s428 + $0x40] sm:$0xff] %v445
                  %v447 = vld [vmem:[%s427 + $0x120] sm:$0xff]
                  %448 = vst [vmem:[%s428 + $0x48] sm:$0xff] %v447
                  %v449 = vld [vmem:[%s427 + $0x140] sm:$0xff]
                  %450 = vst [vmem:[%s428 + $0x50] sm:$0xff] %v449
                  %v451 = vld [vmem:[%s427 + $0x160] sm:$0xff]
                  %452 = vst [vmem:[%s428 + $0x58] sm:$0xff] %v451
                  %v453 = vld [vmem:[%s427 + $0x180] sm:$0xff]
                  %454 = vst [vmem:[%s428 + $0x60] sm:$0xff] %v453
                  %v455 = vld [vmem:[%s427 + $0x1a0] sm:$0xff]
                  %456 = vst [vmem:[%s428 + $0x68] sm:$0xff] %v455
                  %v457 = vld [vmem:[%s427 + $0x1c0] sm:$0xff]
                  %458 = vst [vmem:[%s428 + $0x70] sm:$0xff] %v457
                  %v459 = vld [vmem:[%s427 + $0x1e0] sm:$0xff]
                  %460 = vst [vmem:[%s428 + $0x78] sm:$0xff] %v459
                  %v461 = vld [vmem:[%s427 + $0x200] sm:$0xff]
                  %462 = vst [vmem:[%s428 + $0x80] sm:$0xff] %v461
                  %v463 = vld [vmem:[%s427 + $0x220] sm:$0xff]
                  %464 = vst [vmem:[%s428 + $0x88] sm:$0xff] %v463
                  %v465 = vld [vmem:[%s427 + $0x240] sm:$0xff]
                  %466 = vst [vmem:[%s428 + $0x90] sm:$0xff] %v465
                  %v467 = vld [vmem:[%s427 + $0x260] sm:$0xff]
                  %468 = vst [vmem:[%s428 + $0x98] sm:$0xff] %v467
                  %v469 = vld [vmem:[%s427 + $0x280] sm:$0xff]
                  %470 = vst [vmem:[%s428 + $0xa0] sm:$0xff] %v469
                  %v471 = vld [vmem:[%s427 + $0x2a0] sm:$0xff]
                  %472 = vst [vmem:[%s428 + $0xa8] sm:$0xff] %v471
                  %v473 = vld [vmem:[%s427 + $0x2c0] sm:$0xff]
                  %474 = vst [vmem:[%s428 + $0xb0] sm:$0xff] %v473
                  %v475 = vld [vmem:[%s427 + $0x2e0] sm:$0xff]
                  %476 = vst [vmem:[%s428 + $0xb8] sm:$0xff] %v475
                  %v477 = vld [vmem:[%s427 + $0x300] sm:$0xff]
                  %478 = vst [vmem:[%s428 + $0xc0] sm:$0xff] %v477
                  %v479 = vld [vmem:[%s427 + $0x320] sm:$0xff]
                  %480 = vst [vmem:[%s428 + $0xc8] sm:$0xff] %v479
                  %v481 = vld [vmem:[%s427 + $0x340] sm:$0xff]
                  %482 = vst [vmem:[%s428 + $0xd0] sm:$0xff] %v481
                  %v483 = vld [vmem:[%s427 + $0x360] sm:$0xff]
                  %484 = vst [vmem:[%s428 + $0xd8] sm:$0xff] %v483
                  %v485 = vld [vmem:[%s427 + $0x380] sm:$0xff]
                  %486 = vst [vmem:[%s428 + $0xe0] sm:$0xff] %v485
                  %v487 = vld [vmem:[%s427 + $0x3a0] sm:$0xff]
                  %488 = vst [vmem:[%s428 + $0xe8] sm:$0xff] %v487
                  %v489 = vld [vmem:[%s427 + $0x3c0] sm:$0xff]
                  %490 = vst [vmem:[%s428 + $0xf0] sm:$0xff] %v489
                  %v491 = vld [vmem:[%s427 + $0x3e0] sm:$0xff]
                  %492 = vst [vmem:[%s428 + $0xf8] sm:$0xff] %v491
                  %v493 = vld [vmem:[%s427 + $0x400] sm:$0xff]
                  %494 = vst [vmem:[%s428 + $0x100] sm:$0xff] %v493
                  %v495 = vld [vmem:[%s427 + $0x420] sm:$0xff]
                  %496 = vst [vmem:[%s428 + $0x108] sm:$0xff] %v495
                  %v497 = vld [vmem:[%s427 + $0x440] sm:$0xff]
                  %498 = vst [vmem:[%s428 + $0x110] sm:$0xff] %v497
                  %v499 = vld [vmem:[%s427 + $0x460] sm:$0xff]
                  %500 = vst [vmem:[%s428 + $0x118] sm:$0xff] %v499
                  %v501 = vld [vmem:[%s427 + $0x480] sm:$0xff]
                  %502 = vst [vmem:[%s428 + $0x120] sm:$0xff] %v501
                  %v503 = vld [vmem:[%s427 + $0x4a0] sm:$0xff]
                  %504 = vst [vmem:[%s428 + $0x128] sm:$0xff] %v503
                  %v505 = vld [vmem:[%s427 + $0x4c0] sm:$0xff]
                  %506 = vst [vmem:[%s428 + $0x130] sm:$0xff] %v505
                  %v507 = vld [vmem:[%s427 + $0x4e0] sm:$0xff]
                  %508 = vst [vmem:[%s428 + $0x138] sm:$0xff] %v507
                  %v509 = vld [vmem:[%s427 + $0x500] sm:$0xff]
                  %510 = vst [vmem:[%s428 + $0x140] sm:$0xff] %v509
                  %v511 = vld [vmem:[%s427 + $0x520] sm:$0xff]
                  %512 = vst [vmem:[%s428 + $0x148] sm:$0xff] %v511
                  %v513 = vld [vmem:[%s427 + $0x540] sm:$0xff]
                  %514 = vst [vmem:[%s428 + $0x150] sm:$0xff] %v513
                  %v515 = vld [vmem:[%s427 + $0x560] sm:$0xff]
                  %516 = vst [vmem:[%s428 + $0x158] sm:$0xff] %v515
                  %v517 = vld [vmem:[%s427 + $0x580] sm:$0xff]
                  %518 = vst [vmem:[%s428 + $0x160] sm:$0xff] %v517
                  %v519 = vld [vmem:[%s427 + $0x5a0] sm:$0xff]
                  %520 = vst [vmem:[%s428 + $0x168] sm:$0xff] %v519
                  %v521 = vld [vmem:[%s427 + $0x5c0] sm:$0xff]
                  %522 = vst [vmem:[%s428 + $0x170] sm:$0xff] %v521
                  %v523 = vld [vmem:[%s427 + $0x5e0] sm:$0xff]
                  %524 = vst [vmem:[%s428 + $0x178] sm:$0xff] %v523
                  %v525 = vld [vmem:[%s427 + $0x600] sm:$0xff]
                  %526 = vst [vmem:[%s428 + $0x180] sm:$0xff] %v525
                  %v527 = vld [vmem:[%s427 + $0x620] sm:$0xff]
                  %528 = vst [vmem:[%s428 + $0x188] sm:$0xff] %v527
                  %v529 = vld [vmem:[%s427 + $0x640] sm:$0xff]
                  %530 = vst [vmem:[%s428 + $0x190] sm:$0xff] %v529
                  %v531 = vld [vmem:[%s427 + $0x660] sm:$0xff]
                  %532 = vst [vmem:[%s428 + $0x198] sm:$0xff] %v531
                  %v533 = vld [vmem:[%s427 + $0x680] sm:$0xff]
                  %534 = vst [vmem:[%s428 + $0x1a0] sm:$0xff] %v533
                  %v535 = vld [vmem:[%s427 + $0x6a0] sm:$0xff]
                  %536 = vst [vmem:[%s428 + $0x1a8] sm:$0xff] %v535
                  %v537 = vld [vmem:[%s427 + $0x6c0] sm:$0xff]
                  %538 = vst [vmem:[%s428 + $0x1b0] sm:$0xff] %v537
                  %v539 = vld [vmem:[%s427 + $0x6e0] sm:$0xff]
                  %540 = vst [vmem:[%s428 + $0x1b8] sm:$0xff] %v539
                  %v541 = vld [vmem:[%s427 + $0x700] sm:$0xff]
                  %542 = vst [vmem:[%s428 + $0x1c0] sm:$0xff] %v541
                  %v543 = vld [vmem:[%s427 + $0x720] sm:$0xff]
                  %544 = vst [vmem:[%s428 + $0x1c8] sm:$0xff] %v543
                  %v545 = vld [vmem:[%s427 + $0x740] sm:$0xff]
                  %546 = vst [vmem:[%s428 + $0x1d0] sm:$0xff] %v545
                  %v547 = vld [vmem:[%s427 + $0x760] sm:$0xff]
                  %548 = vst [vmem:[%s428 + $0x1d8] sm:$0xff] %v547
                  %v549 = vld [vmem:[%s427 + $0x780] sm:$0xff]
                  %550 = vst [vmem:[%s428 + $0x1e0] sm:$0xff] %v549
                  %v551 = vld [vmem:[%s427 + $0x7a0] sm:$0xff]
                  %552 = vst [vmem:[%s428 + $0x1e8] sm:$0xff] %v551
                  %v553 = vld [vmem:[%s427 + $0x7c0] sm:$0xff]
                  %554 = vst [vmem:[%s428 + $0x1f0] sm:$0xff] %v553
                  %v555 = vld [vmem:[%s427 + $0x7e0] sm:$0xff]
                  %556 = vst [vmem:[%s428 + $0x1f8] sm:$0xff] %v555
                $region68: #{module_forward.1} parent=62 // loop_footer
                  %s426 = sadd.s32 1, %s422
                $region69: #{module_forward.1} parent=62 // loop_footer_branch
                  %421 = sbr.rel target = $region65
                $region70: #{module_forward.1} parent=62 // loop_exit
                  _
              $region63: #{module_forward.1} parent=47 // pred_fallthru
                _
              // Predicated region
              $region71: #{module_forward.1} parent=47 // pred_check
                _
              $region72: #{module_forward.1} parent=47 // pred_check_branch
                %558 = sbr.rel target = $region74
              $region73: #{module_forward.1} parent=47 // pred_region
                _
              $region74: #{module_forward.1} parent=47 // pred_fallthru
                _
            $region48: #{module_forward.1} parent=43 // pred_fallthru
              _
            // Predicated region
            $region49: #{module_forward.1} parent=43 // pred_check
              _
            $region50: #{module_forward.1} parent=43 // pred_check_branch
              %281 = sbr.rel target = $region52
            $region51: #{module_forward.1} parent=43 // pred_region
              loop: start=0, step=1, limit=1
              $region53: #{module_forward.1} parent=51 // loop_pre_header
                _
              $region54: #{module_forward.1} parent=51 // loop_header
                %s284 = sphi 0, %s288
                %p285 = scmp.ge.s32.totalorder %s284, 1
                %s289 = sphi %s275, %s275
                %s290 = sphi %s269, %s269
              $region55: #{module_forward.1} parent=51 // loop_header_branch
                %287 = sbr.rel (%p285) target = $region59
              $region56: #{module_forward.1} parent=51 // loop_body
                %v291 = vld [vmem:[%s289] sm:$0xff]
                %292 = vst [vmem:[%s290] sm:$0xff] %v291
                %v293 = vld [vmem:[%s289 + $0x20] sm:$0xff]
                %294 = vst [vmem:[%s290 + $0x8] sm:$0xff] %v293
                %v295 = vld [vmem:[%s289 + $0x40] sm:$0xff]
                %296 = vst [vmem:[%s290 + $0x10] sm:$0xff] %v295
                %v297 = vld [vmem:[%s289 + $0x60] sm:$0xff]
                %298 = vst [vmem:[%s290 + $0x18] sm:$0xff] %v297
                %v299 = vld [vmem:[%s289 + $0x80] sm:$0xff]
                %300 = vst [vmem:[%s290 + $0x20] sm:$0xff] %v299
                %v301 = vld [vmem:[%s289 + $0xa0] sm:$0xff]
                %302 = vst [vmem:[%s290 + $0x28] sm:$0xff] %v301
                %v303 = vld [vmem:[%s289 + $0xc0] sm:$0xff]
                %304 = vst [vmem:[%s290 + $0x30] sm:$0xff] %v303
                %v305 = vld [vmem:[%s289 + $0xe0] sm:$0xff]
                %306 = vst [vmem:[%s290 + $0x38] sm:$0xff] %v305
                %v307 = vld [vmem:[%s289 + $0x100] sm:$0xff]
                %308 = vst [vmem:[%s290 + $0x40] sm:$0xff] %v307
                %v309 = vld [vmem:[%s289 + $0x120] sm:$0xff]
                %310 = vst [vmem:[%s290 + $0x48] sm:$0xff] %v309
                %v311 = vld [vmem:[%s289 + $0x140] sm:$0xff]
                %312 = vst [vmem:[%s290 + $0x50] sm:$0xff] %v311
                %v313 = vld [vmem:[%s289 + $0x160] sm:$0xff]
                %314 = vst [vmem:[%s290 + $0x58] sm:$0xff] %v313
                %v315 = vld [vmem:[%s289 + $0x180] sm:$0xff]
                %316 = vst [vmem:[%s290 + $0x60] sm:$0xff] %v315
                %v317 = vld [vmem:[%s289 + $0x1a0] sm:$0xff]
                %318 = vst [vmem:[%s290 + $0x68] sm:$0xff] %v317
                %v319 = vld [vmem:[%s289 + $0x1c0] sm:$0xff]
                %320 = vst [vmem:[%s290 + $0x70] sm:$0xff] %v319
                %v321 = vld [vmem:[%s289 + $0x1e0] sm:$0xff]
                %322 = vst [vmem:[%s290 + $0x78] sm:$0xff] %v321
                %v323 = vld [vmem:[%s289 + $0x200] sm:$0xff]
                %324 = vst [vmem:[%s290 + $0x80] sm:$0xff] %v323
                %v325 = vld [vmem:[%s289 + $0x220] sm:$0xff]
                %326 = vst [vmem:[%s290 + $0x88] sm:$0xff] %v325
                %v327 = vld [vmem:[%s289 + $0x240] sm:$0xff]
                %328 = vst [vmem:[%s290 + $0x90] sm:$0xff] %v327
                %v329 = vld [vmem:[%s289 + $0x260] sm:$0xff]
                %330 = vst [vmem:[%s290 + $0x98] sm:$0xff] %v329
                %v331 = vld [vmem:[%s289 + $0x280] sm:$0xff]
                %332 = vst [vmem:[%s290 + $0xa0] sm:$0xff] %v331
                %v333 = vld [vmem:[%s289 + $0x2a0] sm:$0xff]
                %334 = vst [vmem:[%s290 + $0xa8] sm:$0xff] %v333
                %v335 = vld [vmem:[%s289 + $0x2c0] sm:$0xff]
                %336 = vst [vmem:[%s290 + $0xb0] sm:$0xff] %v335
                %v337 = vld [vmem:[%s289 + $0x2e0] sm:$0xff]
                %338 = vst [vmem:[%s290 + $0xb8] sm:$0xff] %v337
                %v339 = vld [vmem:[%s289 + $0x300] sm:$0xff]
                %340 = vst [vmem:[%s290 + $0xc0] sm:$0xff] %v339
                %v341 = vld [vmem:[%s289 + $0x320] sm:$0xff]
                %342 = vst [vmem:[%s290 + $0xc8] sm:$0xff] %v341
                %v343 = vld [vmem:[%s289 + $0x340] sm:$0xff]
                %344 = vst [vmem:[%s290 + $0xd0] sm:$0xff] %v343
                %v345 = vld [vmem:[%s289 + $0x360] sm:$0xff]
                %346 = vst [vmem:[%s290 + $0xd8] sm:$0xff] %v345
                %v347 = vld [vmem:[%s289 + $0x380] sm:$0xff]
                %348 = vst [vmem:[%s290 + $0xe0] sm:$0xff] %v347
                %v349 = vld [vmem:[%s289 + $0x3a0] sm:$0xff]
                %350 = vst [vmem:[%s290 + $0xe8] sm:$0xff] %v349
                %v351 = vld [vmem:[%s289 + $0x3c0] sm:$0xff]
                %352 = vst [vmem:[%s290 + $0xf0] sm:$0xff] %v351
                %v353 = vld [vmem:[%s289 + $0x3e0] sm:$0xff]
                %354 = vst [vmem:[%s290 + $0xf8] sm:$0xff] %v353
                %v355 = vld [vmem:[%s289 + $0x400] sm:$0xff]
                %356 = vst [vmem:[%s290 + $0x100] sm:$0xff] %v355
                %v357 = vld [vmem:[%s289 + $0x420] sm:$0xff]
                %358 = vst [vmem:[%s290 + $0x108] sm:$0xff] %v357
                %v359 = vld [vmem:[%s289 + $0x440] sm:$0xff]
                %360 = vst [vmem:[%s290 + $0x110] sm:$0xff] %v359
                %v361 = vld [vmem:[%s289 + $0x460] sm:$0xff]
                %362 = vst [vmem:[%s290 + $0x118] sm:$0xff] %v361
                %v363 = vld [vmem:[%s289 + $0x480] sm:$0xff]
                %364 = vst [vmem:[%s290 + $0x120] sm:$0xff] %v363
                %v365 = vld [vmem:[%s289 + $0x4a0] sm:$0xff]
                %366 = vst [vmem:[%s290 + $0x128] sm:$0xff] %v365
                %v367 = vld [vmem:[%s289 + $0x4c0] sm:$0xff]
                %368 = vst [vmem:[%s290 + $0x130] sm:$0xff] %v367
                %v369 = vld [vmem:[%s289 + $0x4e0] sm:$0xff]
                %370 = vst [vmem:[%s290 + $0x138] sm:$0xff] %v369
                %v371 = vld [vmem:[%s289 + $0x500] sm:$0xff]
                %372 = vst [vmem:[%s290 + $0x140] sm:$0xff] %v371
                %v373 = vld [vmem:[%s289 + $0x520] sm:$0xff]
                %374 = vst [vmem:[%s290 + $0x148] sm:$0xff] %v373
                %v375 = vld [vmem:[%s289 + $0x540] sm:$0xff]
                %376 = vst [vmem:[%s290 + $0x150] sm:$0xff] %v375
                %v377 = vld [vmem:[%s289 + $0x560] sm:$0xff]
                %378 = vst [vmem:[%s290 + $0x158] sm:$0xff] %v377
                %v379 = vld [vmem:[%s289 + $0x580] sm:$0xff]
                %380 = vst [vmem:[%s290 + $0x160] sm:$0xff] %v379
                %v381 = vld [vmem:[%s289 + $0x5a0] sm:$0xff]
                %382 = vst [vmem:[%s290 + $0x168] sm:$0xff] %v381
                %v383 = vld [vmem:[%s289 + $0x5c0] sm:$0xff]
                %384 = vst [vmem:[%s290 + $0x170] sm:$0xff] %v383
                %v385 = vld [vmem:[%s289 + $0x5e0] sm:$0xff]
                %386 = vst [vmem:[%s290 + $0x178] sm:$0xff] %v385
                %v387 = vld [vmem:[%s289 + $0x600] sm:$0xff]
                %388 = vst [vmem:[%s290 + $0x180] sm:$0xff] %v387
                %v389 = vld [vmem:[%s289 + $0x620] sm:$0xff]
                %390 = vst [vmem:[%s290 + $0x188] sm:$0xff] %v389
                %v391 = vld [vmem:[%s289 + $0x640] sm:$0xff]
                %392 = vst [vmem:[%s290 + $0x190] sm:$0xff] %v391
                %v393 = vld [vmem:[%s289 + $0x660] sm:$0xff]
                %394 = vst [vmem:[%s290 + $0x198] sm:$0xff] %v393
                %v395 = vld [vmem:[%s289 + $0x680] sm:$0xff]
                %396 = vst [vmem:[%s290 + $0x1a0] sm:$0xff] %v395
                %v397 = vld [vmem:[%s289 + $0x6a0] sm:$0xff]
                %398 = vst [vmem:[%s290 + $0x1a8] sm:$0xff] %v397
                %v399 = vld [vmem:[%s289 + $0x6c0] sm:$0xff]
                %400 = vst [vmem:[%s290 + $0x1b0] sm:$0xff] %v399
                %v401 = vld [vmem:[%s289 + $0x6e0] sm:$0xff]
                %402 = vst [vmem:[%s290 + $0x1b8] sm:$0xff] %v401
                %v403 = vld [vmem:[%s289 + $0x700] sm:$0xff]
                %404 = vst [vmem:[%s290 + $0x1c0] sm:$0xff] %v403
                %v405 = vld [vmem:[%s289 + $0x720] sm:$0xff]
                %406 = vst [vmem:[%s290 + $0x1c8] sm:$0xff] %v405
                %v407 = vld [vmem:[%s289 + $0x740] sm:$0xff]
                %408 = vst [vmem:[%s290 + $0x1d0] sm:$0xff] %v407
                %v409 = vld [vmem:[%s289 + $0x760] sm:$0xff]
                %410 = vst [vmem:[%s290 + $0x1d8] sm:$0xff] %v409
                %v411 = vld [vmem:[%s289 + $0x780] sm:$0xff]
                %412 = vst [vmem:[%s290 + $0x1e0] sm:$0xff] %v411
                %v413 = vld [vmem:[%s289 + $0x7a0] sm:$0xff]
                %414 = vst [vmem:[%s290 + $0x1e8] sm:$0xff] %v413
                %v415 = vld [vmem:[%s289 + $0x7c0] sm:$0xff]
                %416 = vst [vmem:[%s290 + $0x1f0] sm:$0xff] %v415
                %v417 = vld [vmem:[%s289 + $0x7e0] sm:$0xff]
                %418 = vst [vmem:[%s290 + $0x1f8] sm:$0xff] %v417
              $region57: #{module_forward.1} parent=51 // loop_footer
                %s288 = sadd.s32 1, %s284
              $region58: #{module_forward.1} parent=51 // loop_footer_branch
                %283 = sbr.rel target = $region54
              $region59: #{module_forward.1} parent=51 // loop_exit
                _
            $region52: #{module_forward.1} parent=43 // pred_fallthru
              _
          $region44: #{module_forward.1} parent=39 // pred_fallthru
            _
          %559 = vnop
        $region40: #{module_forward.1} parent=19 // pred_fallthru
          _
      $region20: #{module_forward.1} parent=5 // pred_fallthru
        _
      %p560 = scmp.le.s32.totalorder 1, %s12
      %p561 = scmp.lt.s32.totalorder %s12, 5
      %p562 = pnand %p560, %p561
      %p563 = pneg %p562
      // Predicated region
      $region75: #{module_forward.1} parent=5 // pred_check
        _
      $region76: #{module_forward.1} parent=5 // pred_check_branch
        %565 = sbr.rel (%p562) target = $region78
      $region77: #{module_forward.1} parent=5 // pred_region
        %s566 = ssub.s32 %s12, 1
        %s567 = sand.u32 %s164, 1
        %s568 = sand.u32 %s164, 1
        %s569 = smul.addr %s568, 512
        %s570 = scalar_lea.vmem [#allocation2], %s569
        // Predicated region
        $region79: #{module_forward.1} parent=77 // pred_check
          %p571 = pneg %p177
        $region80: #{module_forward.1} parent=77 // pred_check_branch
          %573 = sbr.rel (%p571) target = $region82
        $region81: #{module_forward.1} parent=77 // pred_region
          _
        $region82: #{module_forward.1} parent=77 // pred_fallthru
          _
        %p574 = pneg %p45
        %p575 = pneg %p42
        %s576 = smul.u32 32, %s22
        %p577 = scmp.lt.s32.totalorder %s576, 127
        %s578 = scalar_select %p577, %s576, 127
        %s579 = smul.addr %s578, 4
        %s580 = smul.addr %s579, 4
        %s581 = scalar_lea.vmem %s1, %s580
        %p582 = pneg %p71
        %p583 = pneg %p68
        %s584 = smul.u32 32, %s22
        %p585 = scmp.lt.s32.totalorder %s584, 127
        %s586 = scalar_select %p585, %s584, 127
        %s587 = smul.addr %s586, 8
        %s588 = scalar_lea.vmem %s2, %s587
        %p589 = pneg %p97
        %p590 = pneg %p94
        %s591 = smul.u32 32, %s22
        %p592 = scmp.lt.s32.totalorder %s591, 127
        %s593 = scalar_select %p592, %s591, 127
        %s594 = smul.addr %s593, 8
        %s595 = scalar_lea.vmem %s3, %s594
        %p596 = pneg %p123
        %p597 = pneg %p120
        %s598 = smul.u32 32, %s22
        %p599 = scmp.lt.s32.totalorder %s598, 127
        %s600 = scalar_select %p599, %s598, 127
        %s601 = smul.addr %s600, 2
        %s602 = smul.addr %s601, 4
        %s603 = scalar_lea.vmem %s4, %s602
        %p604 = pneg %p149
        %p605 = pneg %p146
        %s606 = sand.u32 %s164, 1
        %s607 = sand.u32 %s164, 1
        %s608 = smul.addr %s607, 512
        %s609 = scalar_lea.vmem [#allocation2], %s608
        %p610 = pneg %p177
        %p611 = pneg %p174
        %p612 = pneg %p203
        %p613 = pneg %p200
        %s614 = smul.u32 64, %s21
        %p615 = scmp.lt.s32.totalorder %s614, 63
        %s616 = scalar_select %p615, %s614, 63
        %s617 = smul.addr %s616, 2
        %s618 = smul.addr %s617, 8
        %s619 = scalar_lea.vmem %s6, %s618
        %s620 = smul.u32 32, %s22
        %p621 = scmp.lt.s32.totalorder %s620, 127
        %s622 = scalar_select %p621, %s620, 127
        %s623 = smul.addr %s622, 4
        %s624 = smul.addr %s623, 4
        %s625 = scalar_lea.vmem %s1, %s624
        %s626 = smul.u32 32, %s22
        %s627 = smul.u32 32, %s22
        %p628 = scmp.lt.s32.totalorder %s627, 127
        %s629 = scalar_select %p628, %s627, 127
        %s630 = smul.addr %s629, 8
        %s631 = scalar_lea.vmem %s2, %s630
        %s632 = smul.u32 32, %s22
        %s633 = smul.u32 32, %s22
        %p634 = scmp.lt.s32.totalorder %s633, 127
        %s635 = scalar_select %p634, %s633, 127
        %s636 = smul.addr %s635, 8
        %s637 = scalar_lea.vmem %s3, %s636
        %s638 = smul.u32 32, %s22
        %s639 = smul.u32 32, %s22
        %p640 = scmp.lt.s32.totalorder %s639, 127
        %s641 = scalar_select %p640, %s639, 127
        %s642 = smul.addr %s641, 2
        %s643 = smul.addr %s642, 4
        %s644 = scalar_lea.vmem %s4, %s643
        %s645 = smul.u32 32, %s22
        %s646 = smul.u32 64, %s21
        %s647 = smul.u32 2, %s22
        %s648 = smul.u32 64, %s21
        %p649 = scmp.lt.s32.totalorder %s648, 63
        %s650 = scalar_select %p649, %s648, 63
        %s651 = smul.addr %s650, 2
        %s652 = smul.addr %s651, 8
        %s653 = scalar_lea.vmem %s6, %s652
        %s654 = smul.u32 64, %s21
        %v655 = vld [vmem:[%s625] sm:$0xff]
        %v656 = vld [vmem:[%s625 + $0x8] sm:$0xff]
        %v657 = vld [vmem:[%s625 + $0x10] sm:$0xff]
        %v658 = vld [vmem:[%s625 + $0x18] sm:$0xff]
        %v659 = vld [vmem:[%s625 + $0x20] sm:$0xff]
        %v660 = vld [vmem:[%s625 + $0x28] sm:$0xff]
        %v661 = vld [vmem:[%s625 + $0x30] sm:$0xff]
        %v662 = vld [vmem:[%s625 + $0x38] sm:$0xff]
        %v663 = vld [vmem:[%s625 + $0x40] sm:$0xff]
        %v664 = vld [vmem:[%s625 + $0x48] sm:$0xff]
        %v665 = vld [vmem:[%s625 + $0x50] sm:$0xff]
        %v666 = vld [vmem:[%s625 + $0x58] sm:$0xff]
        %v667 = vld [vmem:[%s625 + $0x60] sm:$0xff]
        %v668 = vld [vmem:[%s625 + $0x68] sm:$0xff]
        %v669 = vld [vmem:[%s625 + $0x70] sm:$0xff]
        %v670 = vld [vmem:[%s625 + $0x78] sm:$0xff]
        %v671 = vld [vmem:[%s625 + $0x80] sm:$0xff]
        %v672 = vld [vmem:[%s625 + $0x88] sm:$0xff]
        %v673 = vld [vmem:[%s625 + $0x90] sm:$0xff]
        %v674 = vld [vmem:[%s625 + $0x98] sm:$0xff]
        %v675 = vld [vmem:[%s625 + $0xa0] sm:$0xff]
        %v676 = vld [vmem:[%s625 + $0xa8] sm:$0xff]
        %v677 = vld [vmem:[%s625 + $0xb0] sm:$0xff]
        %v678 = vld [vmem:[%s625 + $0xb8] sm:$0xff]
        %v679 = vld [vmem:[%s625 + $0xc0] sm:$0xff]
        %v680 = vld [vmem:[%s625 + $0xc8] sm:$0xff]
        %v681 = vld [vmem:[%s625 + $0xd0] sm:$0xff]
        %v682 = vld [vmem:[%s625 + $0xd8] sm:$0xff]
        %v683 = vld [vmem:[%s625 + $0xe0] sm:$0xff]
        %v684 = vld [vmem:[%s625 + $0xe8] sm:$0xff]
        %v685 = vld [vmem:[%s625 + $0xf0] sm:$0xff]
        %v686 = vld [vmem:[%s625 + $0xf8] sm:$0xff]
        %v687 = vld [vmem:[%s625 + $0x100] sm:$0xff]
        %v688 = vld [vmem:[%s625 + $0x108] sm:$0xff]
        %v689 = vld [vmem:[%s625 + $0x110] sm:$0xff]
        %v690 = vld [vmem:[%s625 + $0x118] sm:$0xff]
        %v691 = vld [vmem:[%s625 + $0x120] sm:$0xff]
        %v692 = vld [vmem:[%s625 + $0x128] sm:$0xff]
        %v693 = vld [vmem:[%s625 + $0x130] sm:$0xff]
        %v694 = vld [vmem:[%s625 + $0x138] sm:$0xff]
        %v695 = vld [vmem:[%s625 + $0x140] sm:$0xff]
        %v696 = vld [vmem:[%s625 + $0x148] sm:$0xff]
        %v697 = vld [vmem:[%s625 + $0x150] sm:$0xff]
        %v698 = vld [vmem:[%s625 + $0x158] sm:$0xff]
        %v699 = vld [vmem:[%s625 + $0x160] sm:$0xff]
        %v700 = vld [vmem:[%s625 + $0x168] sm:$0xff]
        %v701 = vld [vmem:[%s625 + $0x170] sm:$0xff]
        %v702 = vld [vmem:[%s625 + $0x178] sm:$0xff]
        %v703 = vld [vmem:[%s625 + $0x180] sm:$0xff]
        %v704 = vld [vmem:[%s625 + $0x188] sm:$0xff]
        %v705 = vld [vmem:[%s625 + $0x190] sm:$0xff]
        %v706 = vld [vmem:[%s625 + $0x198] sm:$0xff]
        %v707 = vld [vmem:[%s625 + $0x1a0] sm:$0xff]
        %v708 = vld [vmem:[%s625 + $0x1a8] sm:$0xff]
        %v709 = vld [vmem:[%s625 + $0x1b0] sm:$0xff]
        %v710 = vld [vmem:[%s625 + $0x1b8] sm:$0xff]
        %v711 = vld [vmem:[%s625 + $0x1c0] sm:$0xff]
        %v712 = vld [vmem:[%s625 + $0x1c8] sm:$0xff]
        %v713 = vld [vmem:[%s625 + $0x1d0] sm:$0xff]
        %v714 = vld [vmem:[%s625 + $0x1d8] sm:$0xff]
        %v715 = vld [vmem:[%s625 + $0x1e0] sm:$0xff]
        %v716 = vld [vmem:[%s625 + $0x1e8] sm:$0xff]
        %v717 = vld [vmem:[%s625 + $0x1f0] sm:$0xff]
        %v718 = vld [vmem:[%s625 + $0x1f8] sm:$0xff]
        %v719 = vld [vmem:[%s0] sm:$0xff]
        %v720 = vld [vmem:[%s0 + $0x8] sm:$0xff]
        %v721 = vld [vmem:[%s0 + $0x10] sm:$0xff]
        %v722 = vld [vmem:[%s0 + $0x18] sm:$0xff]
        %v723 = vld [vmem:[%s0 + $0x20] sm:$0xff]
        %v724 = vld [vmem:[%s0 + $0x28] sm:$0xff]
        %v725 = vld [vmem:[%s0 + $0x30] sm:$0xff]
        %v726 = vld [vmem:[%s0 + $0x38] sm:$0xff]
        %v727 = vld [vmem:[%s0 + $0x40] sm:$0xff]
        %v728 = vld [vmem:[%s0 + $0x48] sm:$0xff]
        %v729 = vld [vmem:[%s0 + $0x50] sm:$0xff]
        %v730 = vld [vmem:[%s0 + $0x58] sm:$0xff]
        %v731 = vld [vmem:[%s0 + $0x60] sm:$0xff]
        %v732 = vld [vmem:[%s0 + $0x68] sm:$0xff]
        %v733 = vld [vmem:[%s0 + $0x70] sm:$0xff]
        %v734 = vld [vmem:[%s0 + $0x78] sm:$0xff]
        %v735 = vld [vmem:[%s0 + $0x80] sm:$0xff]
        %v736 = vld [vmem:[%s0 + $0x88] sm:$0xff]
        %v737 = vld [vmem:[%s0 + $0x90] sm:$0xff]
        %v738 = vld [vmem:[%s0 + $0x98] sm:$0xff]
        %v739 = vld [vmem:[%s0 + $0xa0] sm:$0xff]
        %v740 = vld [vmem:[%s0 + $0xa8] sm:$0xff]
        %v741 = vld [vmem:[%s0 + $0xb0] sm:$0xff]
        %v742 = vld [vmem:[%s0 + $0xb8] sm:$0xff]
        %v743 = vld [vmem:[%s0 + $0xc0] sm:$0xff]
        %v744 = vld [vmem:[%s0 + $0xc8] sm:$0xff]
        %v745 = vld [vmem:[%s0 + $0xd0] sm:$0xff]
        %v746 = vld [vmem:[%s0 + $0xd8] sm:$0xff]
        %v747 = vld [vmem:[%s0 + $0xe0] sm:$0xff]
        %v748 = vld [vmem:[%s0 + $0xe8] sm:$0xff]
        %v749 = vld [vmem:[%s0 + $0xf0] sm:$0xff]
        %v750 = vld [vmem:[%s0 + $0xf8] sm:$0xff]
        %v751 = vld [vmem:[%s0 + $0x100] sm:$0xff]
        %v752 = vld [vmem:[%s0 + $0x108] sm:$0xff]
        %v753 = vld [vmem:[%s0 + $0x110] sm:$0xff]
        %v754 = vld [vmem:[%s0 + $0x118] sm:$0xff]
        %v755 = vld [vmem:[%s0 + $0x120] sm:$0xff]
        %v756 = vld [vmem:[%s0 + $0x128] sm:$0xff]
        %v757 = vld [vmem:[%s0 + $0x130] sm:$0xff]
        %v758 = vld [vmem:[%s0 + $0x138] sm:$0xff]
        %v759 = vld [vmem:[%s0 + $0x140] sm:$0xff]
        %v760 = vld [vmem:[%s0 + $0x148] sm:$0xff]
        %v761 = vld [vmem:[%s0 + $0x150] sm:$0xff]
        %v762 = vld [vmem:[%s0 + $0x158] sm:$0xff]
        %v763 = vld [vmem:[%s0 + $0x160] sm:$0xff]
        %v764 = vld [vmem:[%s0 + $0x168] sm:$0xff]
        %v765 = vld [vmem:[%s0 + $0x170] sm:$0xff]
        %v766 = vld [vmem:[%s0 + $0x178] sm:$0xff]
        %v767 = vld [vmem:[%s0 + $0x180] sm:$0xff]
        %v768 = vld [vmem:[%s0 + $0x188] sm:$0xff]
        %v769 = vld [vmem:[%s0 + $0x190] sm:$0xff]
        %v770 = vld [vmem:[%s0 + $0x198] sm:$0xff]
        %v771 = vld [vmem:[%s0 + $0x1a0] sm:$0xff]
        %v772 = vld [vmem:[%s0 + $0x1a8] sm:$0xff]
        %v773 = vld [vmem:[%s0 + $0x1b0] sm:$0xff]
        %v774 = vld [vmem:[%s0 + $0x1b8] sm:$0xff]
        %v775 = vld [vmem:[%s0 + $0x1c0] sm:$0xff]
        %v776 = vld [vmem:[%s0 + $0x1c8] sm:$0xff]
        %v777 = vld [vmem:[%s0 + $0x1d0] sm:$0xff]
        %v778 = vld [vmem:[%s0 + $0x1d8] sm:$0xff]
        %v779 = vld [vmem:[%s0 + $0x1e0] sm:$0xff]
        %v780 = vld [vmem:[%s0 + $0x1e8] sm:$0xff]
        %v781 = vld [vmem:[%s0 + $0x1f0] sm:$0xff]
        %v782 = vld [vmem:[%s0 + $0x1f8] sm:$0xff]
        %v847 = vunpack.c.l.b16 %v655
        %v848 = vunpack.c.h.b16 %v655
        %v849 = vunpack.c.l.b16 %v656
        %v850 = vunpack.c.h.b16 %v656
        %v851 = vunpack.c.l.b16 %v657
        %v852 = vunpack.c.h.b16 %v657
        %v853 = vunpack.c.l.b16 %v658
        %v854 = vunpack.c.h.b16 %v658
        %v855 = vunpack.c.l.b16 %v659
        %v856 = vunpack.c.h.b16 %v659
        %v857 = vunpack.c.l.b16 %v660
        %v858 = vunpack.c.h.b16 %v660
        %v859 = vunpack.c.l.b16 %v661
        %v860 = vunpack.c.h.b16 %v661
        %v861 = vunpack.c.l.b16 %v662
        %v862 = vunpack.c.h.b16 %v662
        %v863 = vunpack.c.l.b16 %v663
        %v864 = vunpack.c.h.b16 %v663
        %v865 = vunpack.c.l.b16 %v664
        %v866 = vunpack.c.h.b16 %v664
        %v867 = vunpack.c.l.b16 %v665
        %v868 = vunpack.c.h.b16 %v665
        %v869 = vunpack.c.l.b16 %v666
        %v870 = vunpack.c.h.b16 %v666
        %v871 = vunpack.c.l.b16 %v667
        %v872 = vunpack.c.h.b16 %v667
        %v873 = vunpack.c.l.b16 %v668
        %v874 = vunpack.c.h.b16 %v668
        %v875 = vunpack.c.l.b16 %v669
        %v876 = vunpack.c.h.b16 %v669
        %v877 = vunpack.c.l.b16 %v670
        %v878 = vunpack.c.h.b16 %v670
        %v879 = vunpack.c.l.b16 %v671
        %v880 = vunpack.c.h.b16 %v671
        %v881 = vunpack.c.l.b16 %v672
        %v882 = vunpack.c.h.b16 %v672
        %v883 = vunpack.c.l.b16 %v673
        %v884 = vunpack.c.h.b16 %v673
        %v885 = vunpack.c.l.b16 %v674
        %v886 = vunpack.c.h.b16 %v674
        %v887 = vunpack.c.l.b16 %v675
        %v888 = vunpack.c.h.b16 %v675
        %v889 = vunpack.c.l.b16 %v676
        %v890 = vunpack.c.h.b16 %v676
        %v891 = vunpack.c.l.b16 %v677
        %v892 = vunpack.c.h.b16 %v677
        %v893 = vunpack.c.l.b16 %v678
        %v894 = vunpack.c.h.b16 %v678
        %v895 = vunpack.c.l.b16 %v679
        %v896 = vunpack.c.h.b16 %v679
        %v897 = vunpack.c.l.b16 %v680
        %v898 = vunpack.c.h.b16 %v680
        %v899 = vunpack.c.l.b16 %v681
        %v900 = vunpack.c.h.b16 %v681
        %v901 = vunpack.c.l.b16 %v682
        %v902 = vunpack.c.h.b16 %v682
        %v903 = vunpack.c.l.b16 %v683
        %v904 = vunpack.c.h.b16 %v683
        %v905 = vunpack.c.l.b16 %v684
        %v906 = vunpack.c.h.b16 %v684
        %v907 = vunpack.c.l.b16 %v685
        %v908 = vunpack.c.h.b16 %v685
        %v909 = vunpack.c.l.b16 %v686
        %v910 = vunpack.c.h.b16 %v686
        %v911 = vunpack.c.l.b16 %v687
        %v912 = vunpack.c.h.b16 %v687
        %v913 = vunpack.c.l.b16 %v688
        %v914 = vunpack.c.h.b16 %v688
        %v915 = vunpack.c.l.b16 %v689
        %v916 = vunpack.c.h.b16 %v689
        %v917 = vunpack.c.l.b16 %v690
        %v918 = vunpack.c.h.b16 %v690
        %v919 = vunpack.c.l.b16 %v691
        %v920 = vunpack.c.h.b16 %v691
        %v921 = vunpack.c.l.b16 %v692
        %v922 = vunpack.c.h.b16 %v692
        %v923 = vunpack.c.l.b16 %v693
        %v924 = vunpack.c.h.b16 %v693
        %v925 = vunpack.c.l.b16 %v694
        %v926 = vunpack.c.h.b16 %v694
        %v927 = vunpack.c.l.b16 %v695
        %v928 = vunpack.c.h.b16 %v695
        %v929 = vunpack.c.l.b16 %v696
        %v930 = vunpack.c.h.b16 %v696
        %v931 = vunpack.c.l.b16 %v697
        %v932 = vunpack.c.h.b16 %v697
        %v933 = vunpack.c.l.b16 %v698
        %v934 = vunpack.c.h.b16 %v698
        %v935 = vunpack.c.l.b16 %v699
        %v936 = vunpack.c.h.b16 %v699
        %v937 = vunpack.c.l.b16 %v700
        %v938 = vunpack.c.h.b16 %v700
        %v939 = vunpack.c.l.b16 %v701
        %v940 = vunpack.c.h.b16 %v701
        %v941 = vunpack.c.l.b16 %v702
        %v942 = vunpack.c.h.b16 %v702
        %v943 = vunpack.c.l.b16 %v703
        %v944 = vunpack.c.h.b16 %v703
        %v945 = vunpack.c.l.b16 %v704
        %v946 = vunpack.c.h.b16 %v704
        %v947 = vunpack.c.l.b16 %v705
        %v948 = vunpack.c.h.b16 %v705
        %v949 = vunpack.c.l.b16 %v706
        %v950 = vunpack.c.h.b16 %v706
        %v951 = vunpack.c.l.b16 %v707
        %v952 = vunpack.c.h.b16 %v707
        %v953 = vunpack.c.l.b16 %v708
        %v954 = vunpack.c.h.b16 %v708
        %v955 = vunpack.c.l.b16 %v709
        %v956 = vunpack.c.h.b16 %v709
        %v957 = vunpack.c.l.b16 %v710
        %v958 = vunpack.c.h.b16 %v710
        %v959 = vunpack.c.l.b16 %v711
        %v960 = vunpack.c.h.b16 %v711
        %v961 = vunpack.c.l.b16 %v712
        %v962 = vunpack.c.h.b16 %v712
        %v963 = vunpack.c.l.b16 %v713
        %v964 = vunpack.c.h.b16 %v713
        %v965 = vunpack.c.l.b16 %v714
        %v966 = vunpack.c.h.b16 %v714
        %v967 = vunpack.c.l.b16 %v715
        %v968 = vunpack.c.h.b16 %v715
        %v969 = vunpack.c.l.b16 %v716
        %v970 = vunpack.c.h.b16 %v716
        %v971 = vunpack.c.l.b16 %v717
        %v972 = vunpack.c.h.b16 %v717
        %v973 = vunpack.c.l.b16 %v718
        %v974 = vunpack.c.h.b16 %v718
        %v975 = vpack.c.b16 %v851, %v847
        %v976 = vpack.c.b16 %v852, %v848
        %v977 = vpack.c.b16 %v853, %v849
        %v978 = vpack.c.b16 %v854, %v850
        %v979 = vpack.c.b16 %v859, %v855
        %v980 = vpack.c.b16 %v860, %v856
        %v981 = vpack.c.b16 %v861, %v857
        %v982 = vpack.c.b16 %v862, %v858
        %v983 = vpack.c.b16 %v867, %v863
        %v984 = vpack.c.b16 %v868, %v864
        %v985 = vpack.c.b16 %v869, %v865
        %v986 = vpack.c.b16 %v870, %v866
        %v987 = vpack.c.b16 %v875, %v871
        %v988 = vpack.c.b16 %v876, %v872
        %v989 = vpack.c.b16 %v877, %v873
        %v990 = vpack.c.b16 %v878, %v874
        %v991 = vpack.c.b16 %v883, %v879
        %v992 = vpack.c.b16 %v884, %v880
        %v993 = vpack.c.b16 %v885, %v881
        %v994 = vpack.c.b16 %v886, %v882
        %v995 = vpack.c.b16 %v891, %v887
        %v996 = vpack.c.b16 %v892, %v888
        %v997 = vpack.c.b16 %v893, %v889
        %v998 = vpack.c.b16 %v894, %v890
        %v999 = vpack.c.b16 %v899, %v895
        %v1000 = vpack.c.b16 %v900, %v896
        %v1001 = vpack.c.b16 %v901, %v897
        %v1002 = vpack.c.b16 %v902, %v898
        %v1003 = vpack.c.b16 %v907, %v903
        %v1004 = vpack.c.b16 %v908, %v904
        %v1005 = vpack.c.b16 %v909, %v905
        %v1006 = vpack.c.b16 %v910, %v906
        %v1007 = vpack.c.b16 %v915, %v911
        %v1008 = vpack.c.b16 %v916, %v912
        %v1009 = vpack.c.b16 %v917, %v913
        %v1010 = vpack.c.b16 %v918, %v914
        %v1011 = vpack.c.b16 %v923, %v919
        %v1012 = vpack.c.b16 %v924, %v920
        %v1013 = vpack.c.b16 %v925, %v921
        %v1014 = vpack.c.b16 %v926, %v922
        %v1015 = vpack.c.b16 %v931, %v927
        %v1016 = vpack.c.b16 %v932, %v928
        %v1017 = vpack.c.b16 %v933, %v929
        %v1018 = vpack.c.b16 %v934, %v930
        %v1019 = vpack.c.b16 %v939, %v935
        %v1020 = vpack.c.b16 %v940, %v936
        %v1021 = vpack.c.b16 %v941, %v937
        %v1022 = vpack.c.b16 %v942, %v938
        %v1023 = vpack.c.b16 %v947, %v943
        %v1024 = vpack.c.b16 %v948, %v944
        %v1025 = vpack.c.b16 %v949, %v945
        %v1026 = vpack.c.b16 %v950, %v946
        %v1027 = vpack.c.b16 %v955, %v951
        %v1028 = vpack.c.b16 %v956, %v952
        %v1029 = vpack.c.b16 %v957, %v953
        %v1030 = vpack.c.b16 %v958, %v954
        %v1031 = vpack.c.b16 %v963, %v959
        %v1032 = vpack.c.b16 %v964, %v960
        %v1033 = vpack.c.b16 %v965, %v961
        %v1034 = vpack.c.b16 %v966, %v962
        %v1035 = vpack.c.b16 %v971, %v967
        %v1036 = vpack.c.b16 %v972, %v968
        %v1037 = vpack.c.b16 %v973, %v969
        %v1038 = vpack.c.b16 %v974, %v970
        %v1167 = vunpack.c.l.b16 %v719
        %v1168 = vunpack.c.h.b16 %v719
        %v1169 = vunpack.c.l.b16 %v720
        %v1170 = vunpack.c.h.b16 %v720
        %v1171 = vunpack.c.l.b16 %v721
        %v1172 = vunpack.c.h.b16 %v721
        %v1173 = vunpack.c.l.b16 %v722
        %v1174 = vunpack.c.h.b16 %v722
        %v1175 = vunpack.c.l.b16 %v723
        %v1176 = vunpack.c.h.b16 %v723
        %v1177 = vunpack.c.l.b16 %v724
        %v1178 = vunpack.c.h.b16 %v724
        %v1179 = vunpack.c.l.b16 %v725
        %v1180 = vunpack.c.h.b16 %v725
        %v1181 = vunpack.c.l.b16 %v726
        %v1182 = vunpack.c.h.b16 %v726
        %v1183 = vunpack.c.l.b16 %v727
        %v1184 = vunpack.c.h.b16 %v727
        %v1185 = vunpack.c.l.b16 %v728
        %v1186 = vunpack.c.h.b16 %v728
        %v1187 = vunpack.c.l.b16 %v729
        %v1188 = vunpack.c.h.b16 %v729
        %v1189 = vunpack.c.l.b16 %v730
        %v1190 = vunpack.c.h.b16 %v730
        %v1191 = vunpack.c.l.b16 %v731
        %v1192 = vunpack.c.h.b16 %v731
        %v1193 = vunpack.c.l.b16 %v732
        %v1194 = vunpack.c.h.b16 %v732
        %v1195 = vunpack.c.l.b16 %v733
        %v1196 = vunpack.c.h.b16 %v733
        %v1197 = vunpack.c.l.b16 %v734
        %v1198 = vunpack.c.h.b16 %v734
        %v1199 = vunpack.c.l.b16 %v735
        %v1200 = vunpack.c.h.b16 %v735
        %v1201 = vunpack.c.l.b16 %v736
        %v1202 = vunpack.c.h.b16 %v736
        %v1203 = vunpack.c.l.b16 %v737
        %v1204 = vunpack.c.h.b16 %v737
        %v1205 = vunpack.c.l.b16 %v738
        %v1206 = vunpack.c.h.b16 %v738
        %v1207 = vunpack.c.l.b16 %v739
        %v1208 = vunpack.c.h.b16 %v739
        %v1209 = vunpack.c.l.b16 %v740
        %v1210 = vunpack.c.h.b16 %v740
        %v1211 = vunpack.c.l.b16 %v741
        %v1212 = vunpack.c.h.b16 %v741
        %v1213 = vunpack.c.l.b16 %v742
        %v1214 = vunpack.c.h.b16 %v742
        %v1215 = vunpack.c.l.b16 %v743
        %v1216 = vunpack.c.h.b16 %v743
        %v1217 = vunpack.c.l.b16 %v744
        %v1218 = vunpack.c.h.b16 %v744
        %v1219 = vunpack.c.l.b16 %v745
        %v1220 = vunpack.c.h.b16 %v745
        %v1221 = vunpack.c.l.b16 %v746
        %v1222 = vunpack.c.h.b16 %v746
        %v1223 = vunpack.c.l.b16 %v747
        %v1224 = vunpack.c.h.b16 %v747
        %v1225 = vunpack.c.l.b16 %v748
        %v1226 = vunpack.c.h.b16 %v748
        %v1227 = vunpack.c.l.b16 %v749
        %v1228 = vunpack.c.h.b16 %v749
        %v1229 = vunpack.c.l.b16 %v750
        %v1230 = vunpack.c.h.b16 %v750
        %v1231 = vunpack.c.l.b16 %v751
        %v1232 = vunpack.c.h.b16 %v751
        %v1233 = vunpack.c.l.b16 %v752
        %v1234 = vunpack.c.h.b16 %v752
        %v1235 = vunpack.c.l.b16 %v753
        %v1236 = vunpack.c.h.b16 %v753
        %v1237 = vunpack.c.l.b16 %v754
        %v1238 = vunpack.c.h.b16 %v754
        %v1239 = vunpack.c.l.b16 %v755
        %v1240 = vunpack.c.h.b16 %v755
        %v1241 = vunpack.c.l.b16 %v756
        %v1242 = vunpack.c.h.b16 %v756
        %v1243 = vunpack.c.l.b16 %v757
        %v1244 = vunpack.c.h.b16 %v757
        %v1245 = vunpack.c.l.b16 %v758
        %v1246 = vunpack.c.h.b16 %v758
        %v1247 = vunpack.c.l.b16 %v759
        %v1248 = vunpack.c.h.b16 %v759
        %v1249 = vunpack.c.l.b16 %v760
        %v1250 = vunpack.c.h.b16 %v760
        %v1251 = vunpack.c.l.b16 %v761
        %v1252 = vunpack.c.h.b16 %v761
        %v1253 = vunpack.c.l.b16 %v762
        %v1254 = vunpack.c.h.b16 %v762
        %v1255 = vunpack.c.l.b16 %v763
        %v1256 = vunpack.c.h.b16 %v763
        %v1257 = vunpack.c.l.b16 %v764
        %v1258 = vunpack.c.h.b16 %v764
        %v1259 = vunpack.c.l.b16 %v765
        %v1260 = vunpack.c.h.b16 %v765
        %v1261 = vunpack.c.l.b16 %v766
        %v1262 = vunpack.c.h.b16 %v766
        %v1263 = vunpack.c.l.b16 %v767
        %v1264 = vunpack.c.h.b16 %v767
        %v1265 = vunpack.c.l.b16 %v768
        %v1266 = vunpack.c.h.b16 %v768
        %v1267 = vunpack.c.l.b16 %v769
        %v1268 = vunpack.c.h.b16 %v769
        %v1269 = vunpack.c.l.b16 %v770
        %v1270 = vunpack.c.h.b16 %v770
        %v1271 = vunpack.c.l.b16 %v771
        %v1272 = vunpack.c.h.b16 %v771
        %v1273 = vunpack.c.l.b16 %v772
        %v1274 = vunpack.c.h.b16 %v772
        %v1275 = vunpack.c.l.b16 %v773
        %v1276 = vunpack.c.h.b16 %v773
        %v1277 = vunpack.c.l.b16 %v774
        %v1278 = vunpack.c.h.b16 %v774
        %v1279 = vunpack.c.l.b16 %v775
        %v1280 = vunpack.c.h.b16 %v775
        %v1281 = vunpack.c.l.b16 %v776
        %v1282 = vunpack.c.h.b16 %v776
        %v1283 = vunpack.c.l.b16 %v777
        %v1284 = vunpack.c.h.b16 %v777
        %v1285 = vunpack.c.l.b16 %v778
        %v1286 = vunpack.c.h.b16 %v778
        %v1287 = vunpack.c.l.b16 %v779
        %v1288 = vunpack.c.h.b16 %v779
        %v1289 = vunpack.c.l.b16 %v780
        %v1290 = vunpack.c.h.b16 %v780
        %v1291 = vunpack.c.l.b16 %v781
        %v1292 = vunpack.c.h.b16 %v781
        %v1293 = vunpack.c.l.b16 %v782
        %v1294 = vunpack.c.h.b16 %v782
        %v1295 = vpack.c.b16 %v1169, %v1167
        %v1296 = vpack.c.b16 %v1170, %v1168
        %v1297 = vpack.c.b16 %v1173, %v1171
        %v1298 = vpack.c.b16 %v1174, %v1172
        %v1299 = vpack.c.b16 %v1177, %v1175
        %v1300 = vpack.c.b16 %v1178, %v1176
        %v1301 = vpack.c.b16 %v1181, %v1179
        %v1302 = vpack.c.b16 %v1182, %v1180
        %v1303 = vpack.c.b16 %v1185, %v1183
        %v1304 = vpack.c.b16 %v1186, %v1184
        %v1305 = vpack.c.b16 %v1189, %v1187
        %v1306 = vpack.c.b16 %v1190, %v1188
        %v1307 = vpack.c.b16 %v1193, %v1191
        %v1308 = vpack.c.b16 %v1194, %v1192
        %v1309 = vpack.c.b16 %v1197, %v1195
        %v1310 = vpack.c.b16 %v1198, %v1196
        %v1311 = vpack.c.b16 %v1201, %v1199
        %v1312 = vpack.c.b16 %v1202, %v1200
        %v1313 = vpack.c.b16 %v1205, %v1203
        %v1314 = vpack.c.b16 %v1206, %v1204
        %v1315 = vpack.c.b16 %v1209, %v1207
        %v1316 = vpack.c.b16 %v1210, %v1208
        %v1317 = vpack.c.b16 %v1213, %v1211
        %v1318 = vpack.c.b16 %v1214, %v1212
        %v1319 = vpack.c.b16 %v1217, %v1215
        %v1320 = vpack.c.b16 %v1218, %v1216
        %v1321 = vpack.c.b16 %v1221, %v1219
        %v1322 = vpack.c.b16 %v1222, %v1220
        %v1323 = vpack.c.b16 %v1225, %v1223
        %v1324 = vpack.c.b16 %v1226, %v1224
        %v1325 = vpack.c.b16 %v1229, %v1227
        %v1326 = vpack.c.b16 %v1230, %v1228
        %v1327 = vpack.c.b16 %v1233, %v1231
        %v1328 = vpack.c.b16 %v1234, %v1232
        %v1329 = vpack.c.b16 %v1237, %v1235
        %v1330 = vpack.c.b16 %v1238, %v1236
        %v1331 = vpack.c.b16 %v1241, %v1239
        %v1332 = vpack.c.b16 %v1242, %v1240
        %v1333 = vpack.c.b16 %v1245, %v1243
        %v1334 = vpack.c.b16 %v1246, %v1244
        %v1335 = vpack.c.b16 %v1249, %v1247
        %v1336 = vpack.c.b16 %v1250, %v1248
        %v1337 = vpack.c.b16 %v1253, %v1251
        %v1338 = vpack.c.b16 %v1254, %v1252
        %v1339 = vpack.c.b16 %v1257, %v1255
        %v1340 = vpack.c.b16 %v1258, %v1256
        %v1341 = vpack.c.b16 %v1261, %v1259
        %v1342 = vpack.c.b16 %v1262, %v1260
        %v1343 = vpack.c.b16 %v1265, %v1263
        %v1344 = vpack.c.b16 %v1266, %v1264
        %v1345 = vpack.c.b16 %v1269, %v1267
        %v1346 = vpack.c.b16 %v1270, %v1268
        %v1347 = vpack.c.b16 %v1273, %v1271
        %v1348 = vpack.c.b16 %v1274, %v1272
        %v1349 = vpack.c.b16 %v1277, %v1275
        %v1350 = vpack.c.b16 %v1278, %v1276
        %v1351 = vpack.c.b16 %v1281, %v1279
        %v1352 = vpack.c.b16 %v1282, %v1280
        %v1353 = vpack.c.b16 %v1285, %v1283
        %v1354 = vpack.c.b16 %v1286, %v1284
        %v1355 = vpack.c.b16 %v1289, %v1287
        %v1356 = vpack.c.b16 %v1290, %v1288
        %v1357 = vpack.c.b16 %v1293, %v1291
        %v1358 = vpack.c.b16 %v1294, %v1292
        %1423 = vmatprep.subr.bf16.mxu0 %v1296
        %1424 = vmatpush1.bf16.msra.mxu0 %v1295
        %1425 = vmatprep.subr.bf16.mxu0 %v1298
        %1426 = vmatpush1.bf16.msra.mxu0 %v1297
        %1427 = vmatprep.subr.bf16.mxu0 %v1300
        %1428 = vmatpush1.bf16.msra.mxu0 %v1299
        %1429 = vmatprep.subr.bf16.mxu0 %v1302
        %1430 = vmatpush1.bf16.msra.mxu0 %v1301
        %1431 = vmatprep.subr.bf16.mxu0 %v1304
        %1432 = vmatpush1.bf16.msra.mxu0 %v1303
        %1433 = vmatprep.subr.bf16.mxu0 %v1306
        %1434 = vmatpush1.bf16.msra.mxu0 %v1305
        %1435 = vmatprep.subr.bf16.mxu0 %v1308
        %1436 = vmatpush1.bf16.msra.mxu0 %v1307
        %1437 = vmatprep.subr.bf16.mxu0 %v1310
        %1438 = vmatpush1.bf16.msra.mxu0 %v1309
        %1439 = vmatprep.subr.bf16.mxu0 %v1312
        %1440 = vmatpush1.bf16.msra.mxu0 %v1311
        %1441 = vmatprep.subr.bf16.mxu0 %v1314
        %1442 = vmatpush1.bf16.msra.mxu0 %v1313
        %1443 = vmatprep.subr.bf16.mxu0 %v1316
        %1444 = vmatpush1.bf16.msra.mxu0 %v1315
        %1445 = vmatprep.subr.bf16.mxu0 %v1318
        %1446 = vmatpush1.bf16.msra.mxu0 %v1317
        %1447 = vmatprep.subr.bf16.mxu0 %v1320
        %1448 = vmatpush1.bf16.msra.mxu0 %v1319
        %1449 = vmatprep.subr.bf16.mxu0 %v1322
        %1450 = vmatpush1.bf16.msra.mxu0 %v1321
        %1451 = vmatprep.subr.bf16.mxu0 %v1324
        %1452 = vmatpush1.bf16.msra.mxu0 %v1323
        %1453 = vmatprep.subr.bf16.mxu0 %v1326
        %1454 = vmatpush1.bf16.msra.mxu0 %v1325
        %1455 = vmatprep.mubr.bf16.mxu0 %v976
        %1456 = vmatmul.mubr.bf16.gmra.mrb[0].mxu0 %v975
        %v1457 = vpop.f32.mrb[0].mxu0
        %v1458 = vadd.f32 0.0, %v1457
        %v1459 = vpop.f32.mrb[0].mxu0
        %v1460 = vadd.f32 0.0, %v1459
        %v1461 = vpop.f32.mrb[0].mxu0
        %v1462 = vadd.f32 0.0, %v1461
        %v1463 = vpop.f32.mrb[0].mxu0
        %v1464 = vadd.f32 0.0, %v1463
        %1465 = vmatprep.mubr.bf16.mxu0 %v980
        %1466 = vmatmul.mubr.bf16.gmra.mrb[0].mxu0 %v979
        %v1467 = vpop.f32.mrb[0].mxu0
        %v1468 = vadd.f32 0.0, %v1467
        %v1469 = vpop.f32.mrb[0].mxu0
        %v1470 = vadd.f32 0.0, %v1469
        %v1471 = vpop.f32.mrb[0].mxu0
        %v1472 = vadd.f32 0.0, %v1471
        %v1473 = vpop.f32.mrb[0].mxu0
        %v1474 = vadd.f32 0.0, %v1473
        %1475 = vmatprep.mubr.bf16.mxu0 %v984
        %1476 = vmatmul.mubr.bf16.gmra.mrb[0].mxu0 %v983
        %v1477 = vpop.f32.mrb[0].mxu0
        %v1478 = vadd.f32 0.0, %v1477
        %v1479 = vpop.f32.mrb[0].mxu0
        %v1480 = vadd.f32 0.0, %v1479
        %v1481 = vpop.f32.mrb[0].mxu0
        %v1482 = vadd.f32 0.0, %v1481
        %v1483 = vpop.f32.mrb[0].mxu0
        %v1484 = vadd.f32 0.0, %v1483
        %1485 = vmatprep.mubr.bf16.mxu0 %v988
        %1486 = vmatmul.mubr.bf16.gmra.mrb[0].mxu0 %v987
        %v1487 = vpop.f32.mrb[0].mxu0
        %v1488 = vadd.f32 0.0, %v1487
        %v1489 = vpop.f32.mrb[0].mxu0
        %v1490 = vadd.f32 0.0, %v1489
        %v1491 = vpop.f32.mrb[0].mxu0
        %v1492 = vadd.f32 0.0, %v1491
        %v1493 = vpop.f32.mrb[0].mxu0
        %v1494 = vadd.f32 0.0, %v1493
        %1495 = vmatprep.mubr.bf16.mxu0 %v992
        %1496 = vmatmul.mubr.bf16.gmra.mrb[0].mxu0 %v991
        %v1497 = vpop.f32.mrb[0].mxu0
        %v1498 = vadd.f32 0.0, %v1497
        %v1499 = vpop.f32.mrb[0].mxu0
        %v1500 = vadd.f32 0.0, %v1499
        %v1501 = vpop.f32.mrb[0].mxu0
        %v1502 = vadd.f32 0.0, %v1501
        %v1503 = vpop.f32.mrb[0].mxu0
        %v1504 = vadd.f32 0.0, %v1503
        %1505 = vmatprep.mubr.bf16.mxu0 %v996
        %1506 = vmatmul.mubr.bf16.gmra.mrb[0].mxu0 %v995
        %v1507 = vpop.f32.mrb[0].mxu0
        %v1508 = vadd.f32 0.0, %v1507
        %v1509 = vpop.f32.mrb[0].mxu0
        %v1510 = vadd.f32 0.0, %v1509
        %v1511 = vpop.f32.mrb[0].mxu0
        %v1512 = vadd.f32 0.0, %v1511
        %v1513 = vpop.f32.mrb[0].mxu0
        %v1514 = vadd.f32 0.0, %v1513
        %1515 = vmatprep.mubr.bf16.mxu0 %v1000
        %1516 = vmatmul.mubr.bf16.gmra.mrb[0].mxu0 %v999
        %v1517 = vpop.f32.mrb[0].mxu0
        %v1518 = vadd.f32 0.0, %v1517
        %v1519 = vpop.f32.mrb[0].mxu0
        %v1520 = vadd.f32 0.0, %v1519
        %v1521 = vpop.f32.mrb[0].mxu0
        %v1522 = vadd.f32 0.0, %v1521
        %v1523 = vpop.f32.mrb[0].mxu0
        %v1524 = vadd.f32 0.0, %v1523
        %1525 = vmatprep.mubr.bf16.mxu0 %v1004
        %1526 = vmatmul.mubr.bf16.gmra.mrb[0].mxu0 %v1003
        %v1527 = vpop.f32.mrb[0].mxu0
        %v1528 = vadd.f32 0.0, %v1527
        %v1529 = vpop.f32.mrb[0].mxu0
        %v1530 = vadd.f32 0.0, %v1529
        %v1531 = vpop.f32.mrb[0].mxu0
        %v1532 = vadd.f32 0.0, %v1531
        %v1533 = vpop.f32.mrb[0].mxu0
        %v1534 = vadd.f32 0.0, %v1533
        %1535 = vmatprep.mubr.bf16.mxu0 %v1008
        %1536 = vmatmul.mubr.bf16.gmra.mrb[0].mxu0 %v1007
        %v1537 = vpop.f32.mrb[0].mxu0
        %v1538 = vadd.f32 0.0, %v1537
        %v1539 = vpop.f32.mrb[0].mxu0
        %v1540 = vadd.f32 0.0, %v1539
        %v1541 = vpop.f32.mrb[0].mxu0
        %v1542 = vadd.f32 0.0, %v1541
        %v1543 = vpop.f32.mrb[0].mxu0
        %v1544 = vadd.f32 0.0, %v1543
        %1545 = vmatprep.mubr.bf16.mxu0 %v1012
        %1546 = vmatmul.mubr.bf16.gmra.mrb[0].mxu0 %v1011
        %v1547 = vpop.f32.mrb[0].mxu0
        %v1548 = vadd.f32 0.0, %v1547
        %v1549 = vpop.f32.mrb[0].mxu0
        %v1550 = vadd.f32 0.0, %v1549
        %v1551 = vpop.f32.mrb[0].mxu0
        %v1552 = vadd.f32 0.0, %v1551
        %v1553 = vpop.f32.mrb[0].mxu0
        %v1554 = vadd.f32 0.0, %v1553
        %1555 = vmatprep.mubr.bf16.mxu0 %v1016
        %1556 = vmatmul.mubr.bf16.gmra.mrb[0].mxu0 %v1015
        %v1557 = vpop.f32.mrb[0].mxu0
        %v1558 = vadd.f32 0.0, %v1557
        %v1559 = vpop.f32.mrb[0].mxu0
        %v1560 = vadd.f32 0.0, %v1559
        %v1561 = vpop.f32.mrb[0].mxu0
        %v1562 = vadd.f32 0.0, %v1561
        %v1563 = vpop.f32.mrb[0].mxu0
        %v1564 = vadd.f32 0.0, %v1563
        %1565 = vmatprep.mubr.bf16.mxu0 %v1020
        %1566 = vmatmul.mubr.bf16.gmra.mrb[0].mxu0 %v1019
        %v1567 = vpop.f32.mrb[0].mxu0
        %v1568 = vadd.f32 0.0, %v1567
        %v1569 = vpop.f32.mrb[0].mxu0
        %v1570 = vadd.f32 0.0, %v1569
        %v1571 = vpop.f32.mrb[0].mxu0
        %v1572 = vadd.f32 0.0, %v1571
        %v1573 = vpop.f32.mrb[0].mxu0
        %v1574 = vadd.f32 0.0, %v1573
        %1575 = vmatprep.mubr.bf16.mxu0 %v1024
        %1576 = vmatmul.mubr.bf16.gmra.mrb[0].mxu0 %v1023
        %v1577 = vpop.f32.mrb[0].mxu0
        %v1578 = vadd.f32 0.0, %v1577
        %v1579 = vpop.f32.mrb[0].mxu0
        %v1580 = vadd.f32 0.0, %v1579
        %v1581 = vpop.f32.mrb[0].mxu0
        %v1582 = vadd.f32 0.0, %v1581
        %v1583 = vpop.f32.mrb[0].mxu0
        %v1584 = vadd.f32 0.0, %v1583
        %1585 = vmatprep.mubr.bf16.mxu0 %v1028
        %1586 = vmatmul.mubr.bf16.gmra.mrb[0].mxu0 %v1027
        %v1587 = vpop.f32.mrb[0].mxu0
        %v1588 = vadd.f32 0.0, %v1587
        %v1589 = vpop.f32.mrb[0].mxu0
        %v1590 = vadd.f32 0.0, %v1589
        %v1591 = vpop.f32.mrb[0].mxu0
        %v1592 = vadd.f32 0.0, %v1591
        %v1593 = vpop.f32.mrb[0].mxu0
        %v1594 = vadd.f32 0.0, %v1593
        %1595 = vmatprep.mubr.bf16.mxu0 %v1032
        %1596 = vmatmul.mubr.bf16.gmra.mrb[0].mxu0 %v1031
        %v1597 = vpop.f32.mrb[0].mxu0
        %v1598 = vadd.f32 0.0, %v1597
        %v1599 = vpop.f32.mrb[0].mxu0
        %v1600 = vadd.f32 0.0, %v1599
        %v1601 = vpop.f32.mrb[0].mxu0
        %v1602 = vadd.f32 0.0, %v1601
        %v1603 = vpop.f32.mrb[0].mxu0
        %v1604 = vadd.f32 0.0, %v1603
        %1605 = vmatprep.mubr.bf16.mxu0 %v1036
        %1606 = vmatmul.mubr.bf16.gmra.mrb[0].mxu0 %v1035
        %v1607 = vpop.f32.mrb[0].mxu0
        %v1608 = vadd.f32 0.0, %v1607
        %v1609 = vpop.f32.mrb[0].mxu0
        %v1610 = vadd.f32 0.0, %v1609
        %v1611 = vpop.f32.mrb[0].mxu0
        %v1612 = vadd.f32 0.0, %v1611
        %v1613 = vpop.f32.mrb[0].mxu0
        %v1614 = vadd.f32 0.0, %v1613
        %1615 = vdwg.mxu0
        %1616 = vmatprep.subr.bf16.mxu0 %v1328
        %1617 = vmatpush1.bf16.msra.mxu0 %v1327
        %1618 = vmatprep.subr.bf16.mxu0 %v1330
        %1619 = vmatpush1.bf16.msra.mxu0 %v1329
        %1620 = vmatprep.subr.bf16.mxu0 %v1332
        %1621 = vmatpush1.bf16.msra.mxu0 %v1331
        %1622 = vmatprep.subr.bf16.mxu0 %v1334
        %1623 = vmatpush1.bf16.msra.mxu0 %v1333
        %1624 = vmatprep.subr.bf16.mxu0 %v1336
        %1625 = vmatpush1.bf16.msra.mxu0 %v1335
        %1626 = vmatprep.subr.bf16.mxu0 %v1338
        %1627 = vmatpush1.bf16.msra.mxu0 %v1337
        %1628 = vmatprep.subr.bf16.mxu0 %v1340
        %1629 = vmatpush1.bf16.msra.mxu0 %v1339
        %1630 = vmatprep.subr.bf16.mxu0 %v1342
        %1631 = vmatpush1.bf16.msra.mxu0 %v1341
        %1632 = vmatprep.subr.bf16.mxu0 %v1344
        %1633 = vmatpush1.bf16.msra.mxu0 %v1343
        %1634 = vmatprep.subr.bf16.mxu0 %v1346
        %1635 = vmatpush1.bf16.msra.mxu0 %v1345
        %1636 = vmatprep.subr.bf16.mxu0 %v1348
        %1637 = vmatpush1.bf16.msra.mxu0 %v1347
        %1638 = vmatprep.subr.bf16.mxu0 %v1350
        %1639 = vmatpush1.bf16.msra.mxu0 %v1349
        %1640 = vmatprep.subr.bf16.mxu0 %v1352
        %1641 = vmatpush1.bf16.msra.mxu0 %v1351
        %1642 = vmatprep.subr.bf16.mxu0 %v1354
        %1643 = vmatpush1.bf16.msra.mxu0 %v1353
        %1644 = vmatprep.subr.bf16.mxu0 %v1356
        %1645 = vmatpush1.bf16.msra.mxu0 %v1355
        %1646 = vmatprep.subr.bf16.mxu0 %v1358
        %1647 = vmatpush1.bf16.msra.mxu0 %v1357
        %1648 = vmatprep.mubr.bf16.mxu0 %v978
        %1649 = vmatmul.mubr.bf16.gmra.mrb[0].mxu0 %v977
        %v1650 = vpop.f32.mrb[0].mxu0
        %v1651 = vadd.f32 %v1458, %v1650
        %v1652 = vpop.f32.mrb[0].mxu0
        %v1653 = vadd.f32 %v1460, %v1652
        %v1654 = vpop.f32.mrb[0].mxu0
        %v1655 = vadd.f32 %v1462, %v1654
        %v1656 = vpop.f32.mrb[0].mxu0
        %v1657 = vadd.f32 %v1464, %v1656
        %1658 = vmatprep.mubr.bf16.mxu0 %v982
        %1659 = vmatmul.mubr.bf16.gmra.mrb[0].mxu0 %v981
        %v1660 = vpop.f32.mrb[0].mxu0
        %v1661 = vadd.f32 %v1468, %v1660
        %v1662 = vpop.f32.mrb[0].mxu0
        %v1663 = vadd.f32 %v1470, %v1662
        %v1664 = vpop.f32.mrb[0].mxu0
        %v1665 = vadd.f32 %v1472, %v1664
        %v1666 = vpop.f32.mrb[0].mxu0
        %v1667 = vadd.f32 %v1474, %v1666
        %1668 = vmatprep.mubr.bf16.mxu0 %v986
        %1669 = vmatmul.mubr.bf16.gmra.mrb[0].mxu0 %v985
        %v1670 = vpop.f32.mrb[0].mxu0
        %v1671 = vadd.f32 %v1478, %v1670
        %v1672 = vpop.f32.mrb[0].mxu0
        %v1673 = vadd.f32 %v1480, %v1672
        %v1674 = vpop.f32.mrb[0].mxu0
        %v1675 = vadd.f32 %v1482, %v1674
        %v1676 = vpop.f32.mrb[0].mxu0
        %v1677 = vadd.f32 %v1484, %v1676
        %1678 = vmatprep.mubr.bf16.mxu0 %v990
        %1679 = vmatmul.mubr.bf16.gmra.mrb[0].mxu0 %v989
        %v1680 = vpop.f32.mrb[0].mxu0
        %v1681 = vadd.f32 %v1488, %v1680
        %v1682 = vpop.f32.mrb[0].mxu0
        %v1683 = vadd.f32 %v1490, %v1682
        %v1684 = vpop.f32.mrb[0].mxu0
        %v1685 = vadd.f32 %v1492, %v1684
        %v1686 = vpop.f32.mrb[0].mxu0
        %v1687 = vadd.f32 %v1494, %v1686
        %1688 = vmatprep.mubr.bf16.mxu0 %v994
        %1689 = vmatmul.mubr.bf16.gmra.mrb[0].mxu0 %v993
        %v1690 = vpop.f32.mrb[0].mxu0
        %v1691 = vadd.f32 %v1498, %v1690
        %v1692 = vpop.f32.mrb[0].mxu0
        %v1693 = vadd.f32 %v1500, %v1692
        %v1694 = vpop.f32.mrb[0].mxu0
        %v1695 = vadd.f32 %v1502, %v1694
        %v1696 = vpop.f32.mrb[0].mxu0
        %v1697 = vadd.f32 %v1504, %v1696
        %1698 = vmatprep.mubr.bf16.mxu0 %v998
        %1699 = vmatmul.mubr.bf16.gmra.mrb[0].mxu0 %v997
        %v1700 = vpop.f32.mrb[0].mxu0
        %v1701 = vadd.f32 %v1508, %v1700
        %v1702 = vpop.f32.mrb[0].mxu0
        %v1703 = vadd.f32 %v1510, %v1702
        %v1704 = vpop.f32.mrb[0].mxu0
        %v1705 = vadd.f32 %v1512, %v1704
        %v1706 = vpop.f32.mrb[0].mxu0
        %v1707 = vadd.f32 %v1514, %v1706
        %1708 = vmatprep.mubr.bf16.mxu0 %v1002
        %1709 = vmatmul.mubr.bf16.gmra.mrb[0].mxu0 %v1001
        %v1710 = vpop.f32.mrb[0].mxu0
        %v1711 = vadd.f32 %v1518, %v1710
        %v1712 = vpop.f32.mrb[0].mxu0
        %v1713 = vadd.f32 %v1520, %v1712
        %v1714 = vpop.f32.mrb[0].mxu0
        %v1715 = vadd.f32 %v1522, %v1714
        %v1716 = vpop.f32.mrb[0].mxu0
        %v1717 = vadd.f32 %v1524, %v1716
        %1718 = vmatprep.mubr.bf16.mxu0 %v1006
        %1719 = vmatmul.mubr.bf16.gmra.mrb[0].mxu0 %v1005
        %v1720 = vpop.f32.mrb[0].mxu0
        %v1721 = vadd.f32 %v1528, %v1720
        %v1722 = vpop.f32.mrb[0].mxu0
        %v1723 = vadd.f32 %v1530, %v1722
        %v1724 = vpop.f32.mrb[0].mxu0
        %v1725 = vadd.f32 %v1532, %v1724
        %v1726 = vpop.f32.mrb[0].mxu0
        %v1727 = vadd.f32 %v1534, %v1726
        %1728 = vmatprep.mubr.bf16.mxu0 %v1010
        %1729 = vmatmul.mubr.bf16.gmra.mrb[0].mxu0 %v1009
        %v1730 = vpop.f32.mrb[0].mxu0
        %v1731 = vadd.f32 %v1538, %v1730
        %v1732 = vpop.f32.mrb[0].mxu0
        %v1733 = vadd.f32 %v1540, %v1732
        %v1734 = vpop.f32.mrb[0].mxu0
        %v1735 = vadd.f32 %v1542, %v1734
        %v1736 = vpop.f32.mrb[0].mxu0
        %v1737 = vadd.f32 %v1544, %v1736
        %1738 = vmatprep.mubr.bf16.mxu0 %v1014
        %1739 = vmatmul.mubr.bf16.gmra.mrb[0].mxu0 %v1013
        %v1740 = vpop.f32.mrb[0].mxu0
        %v1741 = vadd.f32 %v1548, %v1740
        %v1742 = vpop.f32.mrb[0].mxu0
        %v1743 = vadd.f32 %v1550, %v1742
        %v1744 = vpop.f32.mrb[0].mxu0
        %v1745 = vadd.f32 %v1552, %v1744
        %v1746 = vpop.f32.mrb[0].mxu0
        %v1747 = vadd.f32 %v1554, %v1746
        %1748 = vmatprep.mubr.bf16.mxu0 %v1018
        %1749 = vmatmul.mubr.bf16.gmra.mrb[0].mxu0 %v1017
        %v1750 = vpop.f32.mrb[0].mxu0
        %v1751 = vadd.f32 %v1558, %v1750
        %v1752 = vpop.f32.mrb[0].mxu0
        %v1753 = vadd.f32 %v1560, %v1752
        %v1754 = vpop.f32.mrb[0].mxu0
        %v1755 = vadd.f32 %v1562, %v1754
        %v1756 = vpop.f32.mrb[0].mxu0
        %v1757 = vadd.f32 %v1564, %v1756
        %1758 = vmatprep.mubr.bf16.mxu0 %v1022
        %1759 = vmatmul.mubr.bf16.gmra.mrb[0].mxu0 %v1021
        %v1760 = vpop.f32.mrb[0].mxu0
        %v1761 = vadd.f32 %v1568, %v1760
        %v1762 = vpop.f32.mrb[0].mxu0
        %v1763 = vadd.f32 %v1570, %v1762
        %v1764 = vpop.f32.mrb[0].mxu0
        %v1765 = vadd.f32 %v1572, %v1764
        %v1766 = vpop.f32.mrb[0].mxu0
        %v1767 = vadd.f32 %v1574, %v1766
        %1768 = vmatprep.mubr.bf16.mxu0 %v1026
        %1769 = vmatmul.mubr.bf16.gmra.mrb[0].mxu0 %v1025
        %v1770 = vpop.f32.mrb[0].mxu0
        %v1771 = vadd.f32 %v1578, %v1770
        %v1772 = vpop.f32.mrb[0].mxu0
        %v1773 = vadd.f32 %v1580, %v1772
        %v1774 = vpop.f32.mrb[0].mxu0
        %v1775 = vadd.f32 %v1582, %v1774
        %v1776 = vpop.f32.mrb[0].mxu0
        %v1777 = vadd.f32 %v1584, %v1776
        %1778 = vmatprep.mubr.bf16.mxu0 %v1030
        %1779 = vmatmul.mubr.bf16.gmra.mrb[0].mxu0 %v1029
        %v1780 = vpop.f32.mrb[0].mxu0
        %v1781 = vadd.f32 %v1588, %v1780
        %v1782 = vpop.f32.mrb[0].mxu0
        %v1783 = vadd.f32 %v1590, %v1782
        %v1784 = vpop.f32.mrb[0].mxu0
        %v1785 = vadd.f32 %v1592, %v1784
        %v1786 = vpop.f32.mrb[0].mxu0
        %v1787 = vadd.f32 %v1594, %v1786
        %1788 = vmatprep.mubr.bf16.mxu0 %v1034
        %1789 = vmatmul.mubr.bf16.gmra.mrb[0].mxu0 %v1033
        %v1790 = vpop.f32.mrb[0].mxu0
        %v1791 = vadd.f32 %v1598, %v1790
        %v1792 = vpop.f32.mrb[0].mxu0
        %v1793 = vadd.f32 %v1600, %v1792
        %v1794 = vpop.f32.mrb[0].mxu0
        %v1795 = vadd.f32 %v1602, %v1794
        %v1796 = vpop.f32.mrb[0].mxu0
        %v1797 = vadd.f32 %v1604, %v1796
        %1798 = vmatprep.mubr.bf16.mxu0 %v1038
        %1799 = vmatmul.mubr.bf16.gmra.mrb[0].mxu0 %v1037
        %v1800 = vpop.f32.mrb[0].mxu0
        %v1801 = vadd.f32 %v1608, %v1800
        %v1802 = vpop.f32.mrb[0].mxu0
        %v1803 = vadd.f32 %v1610, %v1802
        %v1804 = vpop.f32.mrb[0].mxu0
        %v1805 = vadd.f32 %v1612, %v1804
        %v1806 = vpop.f32.mrb[0].mxu0
        %v1807 = vadd.f32 %v1614, %v1806
        %1808 = vdwg.mxu0
        %vm1809 = vcmask 556032
        %v1810 = vsel %vm1809, %v1653, 0.0
        %v1811 = vadd.f32 %v1651, %v1810
        %1812 = vadd.xlane.f32.xlu0 %v1811
        %v1813 = vpop.xlane.xlu0 %1812
        %v1814 = vsel %vm1809, %v1657, 0.0
        %v1815 = vadd.f32 %v1655, %v1814
        %1816 = vadd.xlane.f32.xlu0 %v1815
        %v1817 = vpop.xlane.xlu0 %1816
        %v1818 = vsel %vm1809, %v1663, 0.0
        %v1819 = vadd.f32 %v1661, %v1818
        %1820 = vadd.xlane.f32.xlu0 %v1819
        %v1821 = vpop.xlane.xlu0 %1820
        %v1822 = vsel %vm1809, %v1667, 0.0
        %v1823 = vadd.f32 %v1665, %v1822
        %1824 = vadd.xlane.f32.xlu0 %v1823
        %v1825 = vpop.xlane.xlu0 %1824
        %v1826 = vsel %vm1809, %v1673, 0.0
        %v1827 = vadd.f32 %v1671, %v1826
        %1828 = vadd.xlane.f32.xlu0 %v1827
        %v1829 = vpop.xlane.xlu0 %1828
        %v1830 = vsel %vm1809, %v1677, 0.0
        %v1831 = vadd.f32 %v1675, %v1830
        %1832 = vadd.xlane.f32.xlu0 %v1831
        %v1833 = vpop.xlane.xlu0 %1832
        %v1834 = vsel %vm1809, %v1683, 0.0
        %v1835 = vadd.f32 %v1681, %v1834
        %1836 = vadd.xlane.f32.xlu0 %v1835
        %v1837 = vpop.xlane.xlu0 %1836
        %v1838 = vsel %vm1809, %v1687, 0.0
        %v1839 = vadd.f32 %v1685, %v1838
        %1840 = vadd.xlane.f32.xlu0 %v1839
        %v1841 = vpop.xlane.xlu0 %1840
        %v1842 = vsel %vm1809, %v1693, 0.0
        %v1843 = vadd.f32 %v1691, %v1842
        %1844 = vadd.xlane.f32.xlu0 %v1843
        %v1845 = vpop.xlane.xlu0 %1844
        %v1846 = vsel %vm1809, %v1697, 0.0
        %v1847 = vadd.f32 %v1695, %v1846
        %1848 = vadd.xlane.f32.xlu0 %v1847
        %v1849 = vpop.xlane.xlu0 %1848
        %v1850 = vsel %vm1809, %v1703, 0.0
        %v1851 = vadd.f32 %v1701, %v1850
        %1852 = vadd.xlane.f32.xlu0 %v1851
        %v1853 = vpop.xlane.xlu0 %1852
        %v1854 = vsel %vm1809, %v1707, 0.0
        %v1855 = vadd.f32 %v1705, %v1854
        %1856 = vadd.xlane.f32.xlu0 %v1855
        %v1857 = vpop.xlane.xlu0 %1856
        %v1858 = vsel %vm1809, %v1713, 0.0
        %v1859 = vadd.f32 %v1711, %v1858
        %1860 = vadd.xlane.f32.xlu0 %v1859
        %v1861 = vpop.xlane.xlu0 %1860
        %v1862 = vsel %vm1809, %v1717, 0.0
        %v1863 = vadd.f32 %v1715, %v1862
        %1864 = vadd.xlane.f32.xlu0 %v1863
        %v1865 = vpop.xlane.xlu0 %1864
        %v1866 = vsel %vm1809, %v1723, 0.0
        %v1867 = vadd.f32 %v1721, %v1866
        %1868 = vadd.xlane.f32.xlu0 %v1867
        %v1869 = vpop.xlane.xlu0 %1868
        %v1870 = vsel %vm1809, %v1727, 0.0
        %v1871 = vadd.f32 %v1725, %v1870
        %1872 = vadd.xlane.f32.xlu0 %v1871
        %v1873 = vpop.xlane.xlu0 %1872
        %v1874 = vsel %vm1809, %v1733, 0.0
        %v1875 = vadd.f32 %v1731, %v1874
        %1876 = vadd.xlane.f32.xlu0 %v1875
        %v1877 = vpop.xlane.xlu0 %1876
        %v1878 = vsel %vm1809, %v1737, 0.0
        %v1879 = vadd.f32 %v1735, %v1878
        %1880 = vadd.xlane.f32.xlu0 %v1879
        %v1881 = vpop.xlane.xlu0 %1880
        %v1882 = vsel %vm1809, %v1743, 0.0
        %v1883 = vadd.f32 %v1741, %v1882
        %1884 = vadd.xlane.f32.xlu0 %v1883
        %v1885 = vpop.xlane.xlu0 %1884
        %v1886 = vsel %vm1809, %v1747, 0.0
        %v1887 = vadd.f32 %v1745, %v1886
        %1888 = vadd.xlane.f32.xlu0 %v1887
        %v1889 = vpop.xlane.xlu0 %1888
        %v1890 = vsel %vm1809, %v1753, 0.0
        %v1891 = vadd.f32 %v1751, %v1890
        %1892 = vadd.xlane.f32.xlu0 %v1891
        %v1893 = vpop.xlane.xlu0 %1892
        %v1894 = vsel %vm1809, %v1757, 0.0
        %v1895 = vadd.f32 %v1755, %v1894
        %1896 = vadd.xlane.f32.xlu0 %v1895
        %v1897 = vpop.xlane.xlu0 %1896
        %v1898 = vsel %vm1809, %v1763, 0.0
        %v1899 = vadd.f32 %v1761, %v1898
        %1900 = vadd.xlane.f32.xlu0 %v1899
        %v1901 = vpop.xlane.xlu0 %1900
        %v1902 = vsel %vm1809, %v1767, 0.0
        %v1903 = vadd.f32 %v1765, %v1902
        %1904 = vadd.xlane.f32.xlu0 %v1903
        %v1905 = vpop.xlane.xlu0 %1904
        %v1906 = vsel %vm1809, %v1773, 0.0
        %v1907 = vadd.f32 %v1771, %v1906
        %1908 = vadd.xlane.f32.xlu0 %v1907
        %v1909 = vpop.xlane.xlu0 %1908
        %v1910 = vsel %vm1809, %v1777, 0.0
        %v1911 = vadd.f32 %v1775, %v1910
        %1912 = vadd.xlane.f32.xlu0 %v1911
        %v1913 = vpop.xlane.xlu0 %1912
        %v1914 = vsel %vm1809, %v1783, 0.0
        %v1915 = vadd.f32 %v1781, %v1914
        %1916 = vadd.xlane.f32.xlu0 %v1915
        %v1917 = vpop.xlane.xlu0 %1916
        %v1918 = vsel %vm1809, %v1787, 0.0
        %v1919 = vadd.f32 %v1785, %v1918
        %1920 = vadd.xlane.f32.xlu0 %v1919
        %v1921 = vpop.xlane.xlu0 %1920
        %v1922 = vsel %vm1809, %v1793, 0.0
        %v1923 = vadd.f32 %v1791, %v1922
        %1924 = vadd.xlane.f32.xlu0 %v1923
        %v1925 = vpop.xlane.xlu0 %1924
        %v1926 = vsel %vm1809, %v1797, 0.0
        %v1927 = vadd.f32 %v1795, %v1926
        %1928 = vadd.xlane.f32.xlu0 %v1927
        %v1929 = vpop.xlane.xlu0 %1928
        %v1930 = vsel %vm1809, %v1803, 0.0
        %v1931 = vadd.f32 %v1801, %v1930
        %1932 = vadd.xlane.f32.xlu0 %v1931
        %v1933 = vpop.xlane.xlu0 %1932
        %v1934 = vsel %vm1809, %v1807, 0.0
        %v1935 = vadd.f32 %v1805, %v1934
        %1936 = vadd.xlane.f32.xlu0 %v1935
        %v1937 = vpop.xlane.xlu0 %1936
        %v1938 = vmul.f32 %v1813, 0.0051020407
        %v1939 = vmul.f32 %v1817, 0.0051020407
        %v1940 = vmul.f32 %v1821, 0.0051020407
        %v1941 = vmul.f32 %v1825, 0.0051020407
        %v1942 = vmul.f32 %v1829, 0.0051020407
        %v1943 = vmul.f32 %v1833, 0.0051020407
        %v1944 = vmul.f32 %v1837, 0.0051020407
        %v1945 = vmul.f32 %v1841, 0.0051020407
        %v1946 = vmul.f32 %v1845, 0.0051020407
        %v1947 = vmul.f32 %v1849, 0.0051020407
        %v1948 = vmul.f32 %v1853, 0.0051020407
        %v1949 = vmul.f32 %v1857, 0.0051020407
        %v1950 = vmul.f32 %v1861, 0.0051020407
        %v1951 = vmul.f32 %v1865, 0.0051020407
        %v1952 = vmul.f32 %v1869, 0.0051020407
        %v1953 = vmul.f32 %v1873, 0.0051020407
        %v1954 = vmul.f32 %v1877, 0.0051020407
        %v1955 = vmul.f32 %v1881, 0.0051020407
        %v1956 = vmul.f32 %v1885, 0.0051020407
        %v1957 = vmul.f32 %v1889, 0.0051020407
        %v1958 = vmul.f32 %v1893, 0.0051020407
        %v1959 = vmul.f32 %v1897, 0.0051020407
        %v1960 = vmul.f32 %v1901, 0.0051020407
        %v1961 = vmul.f32 %v1905, 0.0051020407
        %v1962 = vmul.f32 %v1909, 0.0051020407
        %v1963 = vmul.f32 %v1913, 0.0051020407
        %v1964 = vmul.f32 %v1917, 0.0051020407
        %v1965 = vmul.f32 %v1921, 0.0051020407
        %v1966 = vmul.f32 %v1925, 0.0051020407
        %v1967 = vmul.f32 %v1929, 0.0051020407
        %v1968 = vmul.f32 %v1933, 0.0051020407
        %v1969 = vmul.f32 %v1937, 0.0051020407
        %v1970 = vsub.f32 %v1651, %v1938
        %v1971 = vsub.f32 %v1653, %v1938
        %v1972 = vsub.f32 %v1655, %v1939
        %v1973 = vsub.f32 %v1657, %v1939
        %v1974 = vsub.f32 %v1661, %v1940
        %v1975 = vsub.f32 %v1663, %v1940
        %v1976 = vsub.f32 %v1665, %v1941
        %v1977 = vsub.f32 %v1667, %v1941
        %v1978 = vsub.f32 %v1671, %v1942
        %v1979 = vsub.f32 %v1673, %v1942
        %v1980 = vsub.f32 %v1675, %v1943
        %v1981 = vsub.f32 %v1677, %v1943
        %v1982 = vsub.f32 %v1681, %v1944
        %v1983 = vsub.f32 %v1683, %v1944
        %v1984 = vsub.f32 %v1685, %v1945
        %v1985 = vsub.f32 %v1687, %v1945
        %v1986 = vsub.f32 %v1691, %v1946
        %v1987 = vsub.f32 %v1693, %v1946
        %v1988 = vsub.f32 %v1695, %v1947
        %v1989 = vsub.f32 %v1697, %v1947
        %v1990 = vsub.f32 %v1701, %v1948
        %v1991 = vsub.f32 %v1703, %v1948
        %v1992 = vsub.f32 %v1705, %v1949
        %v1993 = vsub.f32 %v1707, %v1949
        %v1994 = vsub.f32 %v1711, %v1950
        %v1995 = vsub.f32 %v1713, %v1950
        %v1996 = vsub.f32 %v1715, %v1951
        %v1997 = vsub.f32 %v1717, %v1951
        %v1998 = vsub.f32 %v1721, %v1952
        %v1999 = vsub.f32 %v1723, %v1952
        %v2000 = vsub.f32 %v1725, %v1953
        %v2001 = vsub.f32 %v1727, %v1953
        %v2002 = vsub.f32 %v1731, %v1954
        %v2003 = vsub.f32 %v1733, %v1954
        %v2004 = vsub.f32 %v1735, %v1955
        %v2005 = vsub.f32 %v1737, %v1955
        %v2006 = vsub.f32 %v1741, %v1956
        %v2007 = vsub.f32 %v1743, %v1956
        %v2008 = vsub.f32 %v1745, %v1957
        %v2009 = vsub.f32 %v1747, %v1957
        %v2010 = vsub.f32 %v1751, %v1958
        %v2011 = vsub.f32 %v1753, %v1958
        %v2012 = vsub.f32 %v1755, %v1959
        %v2013 = vsub.f32 %v1757, %v1959
        %v2014 = vsub.f32 %v1761, %v1960
        %v2015 = vsub.f32 %v1763, %v1960
        %v2016 = vsub.f32 %v1765, %v1961
        %v2017 = vsub.f32 %v1767, %v1961
        %v2018 = vsub.f32 %v1771, %v1962
        %v2019 = vsub.f32 %v1773, %v1962
        %v2020 = vsub.f32 %v1775, %v1963
        %v2021 = vsub.f32 %v1777, %v1963
        %v2022 = vsub.f32 %v1781, %v1964
        %v2023 = vsub.f32 %v1783, %v1964
        %v2024 = vsub.f32 %v1785, %v1965
        %v2025 = vsub.f32 %v1787, %v1965
        %v2026 = vsub.f32 %v1791, %v1966
        %v2027 = vsub.f32 %v1793, %v1966
        %v2028 = vsub.f32 %v1795, %v1967
        %v2029 = vsub.f32 %v1797, %v1967
        %v2030 = vsub.f32 %v1801, %v1968
        %v2031 = vsub.f32 %v1803, %v1968
        %v2032 = vsub.f32 %v1805, %v1969
        %v2033 = vsub.f32 %v1807, %v1969
        %v2034 = vmul.f32 %v1970, %v1970
        %v2035 = vmul.f32 %v1971, %v1971
        %v2036 = vmul.f32 %v1972, %v1972
        %v2037 = vmul.f32 %v1973, %v1973
        %v2038 = vmul.f32 %v1974, %v1974
        %v2039 = vmul.f32 %v1975, %v1975
        %v2040 = vmul.f32 %v1976, %v1976
        %v2041 = vmul.f32 %v1977, %v1977
        %v2042 = vmul.f32 %v1978, %v1978
        %v2043 = vmul.f32 %v1979, %v1979
        %v2044 = vmul.f32 %v1980, %v1980
        %v2045 = vmul.f32 %v1981, %v1981
        %v2046 = vmul.f32 %v1982, %v1982
        %v2047 = vmul.f32 %v1983, %v1983
        %v2048 = vmul.f32 %v1984, %v1984
        %v2049 = vmul.f32 %v1985, %v1985
        %v2050 = vmul.f32 %v1986, %v1986
        %v2051 = vmul.f32 %v1987, %v1987
        %v2052 = vmul.f32 %v1988, %v1988
        %v2053 = vmul.f32 %v1989, %v1989
        %v2054 = vmul.f32 %v1990, %v1990
        %v2055 = vmul.f32 %v1991, %v1991
        %v2056 = vmul.f32 %v1992, %v1992
        %v2057 = vmul.f32 %v1993, %v1993
        %v2058 = vmul.f32 %v1994, %v1994
        %v2059 = vmul.f32 %v1995, %v1995
        %v2060 = vmul.f32 %v1996, %v1996
        %v2061 = vmul.f32 %v1997, %v1997
        %v2062 = vmul.f32 %v1998, %v1998
        %v2063 = vmul.f32 %v1999, %v1999
        %v2064 = vmul.f32 %v2000, %v2000
        %v2065 = vmul.f32 %v2001, %v2001
        %v2066 = vmul.f32 %v2002, %v2002
        %v2067 = vmul.f32 %v2003, %v2003
        %v2068 = vmul.f32 %v2004, %v2004
        %v2069 = vmul.f32 %v2005, %v2005
        %v2070 = vmul.f32 %v2006, %v2006
        %v2071 = vmul.f32 %v2007, %v2007
        %v2072 = vmul.f32 %v2008, %v2008
        %v2073 = vmul.f32 %v2009, %v2009
        %v2074 = vmul.f32 %v2010, %v2010
        %v2075 = vmul.f32 %v2011, %v2011
        %v2076 = vmul.f32 %v2012, %v2012
        %v2077 = vmul.f32 %v2013, %v2013
        %v2078 = vmul.f32 %v2014, %v2014
        %v2079 = vmul.f32 %v2015, %v2015
        %v2080 = vmul.f32 %v2016, %v2016
        %v2081 = vmul.f32 %v2017, %v2017
        %v2082 = vmul.f32 %v2018, %v2018
        %v2083 = vmul.f32 %v2019, %v2019
        %v2084 = vmul.f32 %v2020, %v2020
        %v2085 = vmul.f32 %v2021, %v2021
        %v2086 = vmul.f32 %v2022, %v2022
        %v2087 = vmul.f32 %v2023, %v2023
        %v2088 = vmul.f32 %v2024, %v2024
        %v2089 = vmul.f32 %v2025, %v2025
        %v2090 = vmul.f32 %v2026, %v2026
        %v2091 = vmul.f32 %v2027, %v2027
        %v2092 = vmul.f32 %v2028, %v2028
        %v2093 = vmul.f32 %v2029, %v2029
        %v2094 = vmul.f32 %v2030, %v2030
        %v2095 = vmul.f32 %v2031, %v2031
        %v2096 = vmul.f32 %v2032, %v2032
        %v2097 = vmul.f32 %v2033, %v2033
        %v2098 = vsel %vm1809, %v2035, 0.0
        %v2099 = vadd.f32 %v2034, %v2098
        %2100 = vadd.xlane.f32.xlu0 %v2099
        %v2101 = vpop.xlane.xlu0 %2100
        %v2102 = vsel %vm1809, %v2037, 0.0
        %v2103 = vadd.f32 %v2036, %v2102
        %2104 = vadd.xlane.f32.xlu0 %v2103
        %v2105 = vpop.xlane.xlu0 %2104
        %v2106 = vsel %vm1809, %v2039, 0.0
        %v2107 = vadd.f32 %v2038, %v2106
        %2108 = vadd.xlane.f32.xlu0 %v2107
        %v2109 = vpop.xlane.xlu0 %2108
        %v2110 = vsel %vm1809, %v2041, 0.0
        %v2111 = vadd.f32 %v2040, %v2110
        %2112 = vadd.xlane.f32.xlu0 %v2111
        %v2113 = vpop.xlane.xlu0 %2112
        %v2114 = vsel %vm1809, %v2043, 0.0
        %v2115 = vadd.f32 %v2042, %v2114
        %2116 = vadd.xlane.f32.xlu0 %v2115
        %v2117 = vpop.xlane.xlu0 %2116
        %v2118 = vsel %vm1809, %v2045, 0.0
        %v2119 = vadd.f32 %v2044, %v2118
        %2120 = vadd.xlane.f32.xlu0 %v2119
        %v2121 = vpop.xlane.xlu0 %2120
        %v2122 = vsel %vm1809, %v2047, 0.0
        %v2123 = vadd.f32 %v2046, %v2122
        %2124 = vadd.xlane.f32.xlu0 %v2123
        %v2125 = vpop.xlane.xlu0 %2124
        %v2126 = vsel %vm1809, %v2049, 0.0
        %v2127 = vadd.f32 %v2048, %v2126
        %2128 = vadd.xlane.f32.xlu0 %v2127
        %v2129 = vpop.xlane.xlu0 %2128
        %v2130 = vsel %vm1809, %v2051, 0.0
        %v2131 = vadd.f32 %v2050, %v2130
        %2132 = vadd.xlane.f32.xlu0 %v2131
        %v2133 = vpop.xlane.xlu0 %2132
        %v2134 = vsel %vm1809, %v2053, 0.0
        %v2135 = vadd.f32 %v2052, %v2134
        %2136 = vadd.xlane.f32.xlu0 %v2135
        %v2137 = vpop.xlane.xlu0 %2136
        %v2138 = vsel %vm1809, %v2055, 0.0
        %v2139 = vadd.f32 %v2054, %v2138
        %2140 = vadd.xlane.f32.xlu0 %v2139
        %v2141 = vpop.xlane.xlu0 %2140
        %v2142 = vsel %vm1809, %v2057, 0.0
        %v2143 = vadd.f32 %v2056, %v2142
        %2144 = vadd.xlane.f32.xlu0 %v2143
        %v2145 = vpop.xlane.xlu0 %2144
        %v2146 = vsel %vm1809, %v2059, 0.0
        %v2147 = vadd.f32 %v2058, %v2146
        %2148 = vadd.xlane.f32.xlu0 %v2147
        %v2149 = vpop.xlane.xlu0 %2148
        %v2150 = vsel %vm1809, %v2061, 0.0
        %v2151 = vadd.f32 %v2060, %v2150
        %2152 = vadd.xlane.f32.xlu0 %v2151
        %v2153 = vpop.xlane.xlu0 %2152
        %v2154 = vsel %vm1809, %v2063, 0.0
        %v2155 = vadd.f32 %v2062, %v2154
        %2156 = vadd.xlane.f32.xlu0 %v2155
        %v2157 = vpop.xlane.xlu0 %2156
        %v2158 = vsel %vm1809, %v2065, 0.0
        %v2159 = vadd.f32 %v2064, %v2158
        %2160 = vadd.xlane.f32.xlu0 %v2159
        %v2161 = vpop.xlane.xlu0 %2160
        %v2162 = vsel %vm1809, %v2067, 0.0
        %v2163 = vadd.f32 %v2066, %v2162
        %2164 = vadd.xlane.f32.xlu0 %v2163
        %v2165 = vpop.xlane.xlu0 %2164
        %v2166 = vsel %vm1809, %v2069, 0.0
        %v2167 = vadd.f32 %v2068, %v2166
        %2168 = vadd.xlane.f32.xlu0 %v2167
        %v2169 = vpop.xlane.xlu0 %2168
        %v2170 = vsel %vm1809, %v2071, 0.0
        %v2171 = vadd.f32 %v2070, %v2170
        %2172 = vadd.xlane.f32.xlu0 %v2171
        %v2173 = vpop.xlane.xlu0 %2172
        %v2174 = vsel %vm1809, %v2073, 0.0
        %v2175 = vadd.f32 %v2072, %v2174
        %2176 = vadd.xlane.f32.xlu0 %v2175
        %v2177 = vpop.xlane.xlu0 %2176
        %v2178 = vsel %vm1809, %v2075, 0.0
        %v2179 = vadd.f32 %v2074, %v2178
        %2180 = vadd.xlane.f32.xlu0 %v2179
        %v2181 = vpop.xlane.xlu0 %2180
        %v2182 = vsel %vm1809, %v2077, 0.0
        %v2183 = vadd.f32 %v2076, %v2182
        %2184 = vadd.xlane.f32.xlu0 %v2183
        %v2185 = vpop.xlane.xlu0 %2184
        %v2186 = vsel %vm1809, %v2079, 0.0
        %v2187 = vadd.f32 %v2078, %v2186
        %2188 = vadd.xlane.f32.xlu0 %v2187
        %v2189 = vpop.xlane.xlu0 %2188
        %v2190 = vsel %vm1809, %v2081, 0.0
        %v2191 = vadd.f32 %v2080, %v2190
        %2192 = vadd.xlane.f32.xlu0 %v2191
        %v2193 = vpop.xlane.xlu0 %2192
        %v2194 = vsel %vm1809, %v2083, 0.0
        %v2195 = vadd.f32 %v2082, %v2194
        %2196 = vadd.xlane.f32.xlu0 %v2195
        %v2197 = vpop.xlane.xlu0 %2196
        %v2198 = vsel %vm1809, %v2085, 0.0
        %v2199 = vadd.f32 %v2084, %v2198
        %2200 = vadd.xlane.f32.xlu0 %v2199
        %v2201 = vpop.xlane.xlu0 %2200
        %v2202 = vsel %vm1809, %v2087, 0.0
        %v2203 = vadd.f32 %v2086, %v2202
        %2204 = vadd.xlane.f32.xlu0 %v2203
        %v2205 = vpop.xlane.xlu0 %2204
        %v2206 = vsel %vm1809, %v2089, 0.0
        %v2207 = vadd.f32 %v2088, %v2206
        %2208 = vadd.xlane.f32.xlu0 %v2207
        %v2209 = vpop.xlane.xlu0 %2208
        %v2210 = vsel %vm1809, %v2091, 0.0
        %v2211 = vadd.f32 %v2090, %v2210
        %2212 = vadd.xlane.f32.xlu0 %v2211
        %v2213 = vpop.xlane.xlu0 %2212
        %v2214 = vsel %vm1809, %v2093, 0.0
        %v2215 = vadd.f32 %v2092, %v2214
        %2216 = vadd.xlane.f32.xlu0 %v2215
        %v2217 = vpop.xlane.xlu0 %2216
        %v2218 = vsel %vm1809, %v2095, 0.0
        %v2219 = vadd.f32 %v2094, %v2218
        %2220 = vadd.xlane.f32.xlu0 %v2219
        %v2221 = vpop.xlane.xlu0 %2220
        %v2222 = vsel %vm1809, %v2097, 0.0
        %v2223 = vadd.f32 %v2096, %v2222
        %2224 = vadd.xlane.f32.xlu0 %v2223
        %v2225 = vpop.xlane.xlu0 %2224
        %v2226 = vmul.f32 %v2101, 0.0051020407
        %v2227 = vmul.f32 %v2105, 0.0051020407
        %v2228 = vmul.f32 %v2109, 0.0051020407
        %v2229 = vmul.f32 %v2113, 0.0051020407
        %v2230 = vmul.f32 %v2117, 0.0051020407
        %v2231 = vmul.f32 %v2121, 0.0051020407
        %v2232 = vmul.f32 %v2125, 0.0051020407
        %v2233 = vmul.f32 %v2129, 0.0051020407
        %v2234 = vmul.f32 %v2133, 0.0051020407
        %v2235 = vmul.f32 %v2137, 0.0051020407
        %v2236 = vmul.f32 %v2141, 0.0051020407
        %v2237 = vmul.f32 %v2145, 0.0051020407
        %v2238 = vmul.f32 %v2149, 0.0051020407
        %v2239 = vmul.f32 %v2153, 0.0051020407
        %v2240 = vmul.f32 %v2157, 0.0051020407
        %v2241 = vmul.f32 %v2161, 0.0051020407
        %v2242 = vmul.f32 %v2165, 0.0051020407
        %v2243 = vmul.f32 %v2169, 0.0051020407
        %v2244 = vmul.f32 %v2173, 0.0051020407
        %v2245 = vmul.f32 %v2177, 0.0051020407
        %v2246 = vmul.f32 %v2181, 0.0051020407
        %v2247 = vmul.f32 %v2185, 0.0051020407
        %v2248 = vmul.f32 %v2189, 0.0051020407
        %v2249 = vmul.f32 %v2193, 0.0051020407
        %v2250 = vmul.f32 %v2197, 0.0051020407
        %v2251 = vmul.f32 %v2201, 0.0051020407
        %v2252 = vmul.f32 %v2205, 0.0051020407
        %v2253 = vmul.f32 %v2209, 0.0051020407
        %v2254 = vmul.f32 %v2213, 0.0051020407
        %v2255 = vmul.f32 %v2217, 0.0051020407
        %v2256 = vmul.f32 %v2221, 0.0051020407
        %v2257 = vmul.f32 %v2225, 0.0051020407
        %v2258 = vld [vmem:[%s631] sm:$0xff]
        %v2259 = vld [vmem:[%s631 + $0x8] sm:$0xff]
        %v2260 = vld [vmem:[%s631 + $0x10] sm:$0xff]
        %v2261 = vld [vmem:[%s631 + $0x18] sm:$0xff]
        %v2262 = vld [vmem:[%s631 + $0x20] sm:$0xff]
        %v2263 = vld [vmem:[%s631 + $0x28] sm:$0xff]
        %v2264 = vld [vmem:[%s631 + $0x30] sm:$0xff]
        %v2265 = vld [vmem:[%s631 + $0x38] sm:$0xff]
        %v2266 = vld [vmem:[%s631 + $0x40] sm:$0xff]
        %v2267 = vld [vmem:[%s631 + $0x48] sm:$0xff]
        %v2268 = vld [vmem:[%s631 + $0x50] sm:$0xff]
        %v2269 = vld [vmem:[%s631 + $0x58] sm:$0xff]
        %v2270 = vld [vmem:[%s631 + $0x60] sm:$0xff]
        %v2271 = vld [vmem:[%s631 + $0x68] sm:$0xff]
        %v2272 = vld [vmem:[%s631 + $0x70] sm:$0xff]
        %v2273 = vld [vmem:[%s631 + $0x78] sm:$0xff]
        %v2274 = vld [vmem:[%s631 + $0x80] sm:$0xff]
        %v2275 = vld [vmem:[%s631 + $0x88] sm:$0xff]
        %v2276 = vld [vmem:[%s631 + $0x90] sm:$0xff]
        %v2277 = vld [vmem:[%s631 + $0x98] sm:$0xff]
        %v2278 = vld [vmem:[%s631 + $0xa0] sm:$0xff]
        %v2279 = vld [vmem:[%s631 + $0xa8] sm:$0xff]
        %v2280 = vld [vmem:[%s631 + $0xb0] sm:$0xff]
        %v2281 = vld [vmem:[%s631 + $0xb8] sm:$0xff]
        %v2282 = vld [vmem:[%s631 + $0xc0] sm:$0xff]
        %v2283 = vld [vmem:[%s631 + $0xc8] sm:$0xff]
        %v2284 = vld [vmem:[%s631 + $0xd0] sm:$0xff]
        %v2285 = vld [vmem:[%s631 + $0xd8] sm:$0xff]
        %v2286 = vld [vmem:[%s631 + $0xe0] sm:$0xff]
        %v2287 = vld [vmem:[%s631 + $0xe8] sm:$0xff]
        %v2288 = vld [vmem:[%s631 + $0xf0] sm:$0xff]
        %v2289 = vld [vmem:[%s631 + $0xf8] sm:$0xff]
        %v2290 = vadd.f32 %v2226, 1e-05
        %v2291 = vadd.f32 %v2227, 1e-05
        %v2292 = vadd.f32 %v2228, 1e-05
        %v2293 = vadd.f32 %v2229, 1e-05
        %v2294 = vadd.f32 %v2230, 1e-05
        %v2295 = vadd.f32 %v2231, 1e-05
        %v2296 = vadd.f32 %v2232, 1e-05
        %v2297 = vadd.f32 %v2233, 1e-05
        %v2298 = vadd.f32 %v2234, 1e-05
        %v2299 = vadd.f32 %v2235, 1e-05
        %v2300 = vadd.f32 %v2236, 1e-05
        %v2301 = vadd.f32 %v2237, 1e-05
        %v2302 = vadd.f32 %v2238, 1e-05
        %v2303 = vadd.f32 %v2239, 1e-05
        %v2304 = vadd.f32 %v2240, 1e-05
        %v2305 = vadd.f32 %v2241, 1e-05
        %v2306 = vadd.f32 %v2242, 1e-05
        %v2307 = vadd.f32 %v2243, 1e-05
        %v2308 = vadd.f32 %v2244, 1e-05
        %v2309 = vadd.f32 %v2245, 1e-05
        %v2310 = vadd.f32 %v2246, 1e-05
        %v2311 = vadd.f32 %v2247, 1e-05
        %v2312 = vadd.f32 %v2248, 1e-05
        %v2313 = vadd.f32 %v2249, 1e-05
        %v2314 = vadd.f32 %v2250, 1e-05
        %v2315 = vadd.f32 %v2251, 1e-05
        %v2316 = vadd.f32 %v2252, 1e-05
        %v2317 = vadd.f32 %v2253, 1e-05
        %v2318 = vadd.f32 %v2254, 1e-05
        %v2319 = vadd.f32 %v2255, 1e-05
        %v2320 = vadd.f32 %v2256, 1e-05
        %v2321 = vadd.f32 %v2257, 1e-05
        %v2322 = vrsqrt.pop %v2290
        %v2323 = vrsqrt.pop %v2291
        %v2324 = vrsqrt.pop %v2292
        %v2325 = vrsqrt.pop %v2293
        %v2326 = vrsqrt.pop %v2294
        %v2327 = vrsqrt.pop %v2295
        %v2328 = vrsqrt.pop %v2296
        %v2329 = vrsqrt.pop %v2297
        %v2330 = vrsqrt.pop %v2298
        %v2331 = vrsqrt.pop %v2299
        %v2332 = vrsqrt.pop %v2300
        %v2333 = vrsqrt.pop %v2301
        %v2334 = vrsqrt.pop %v2302
        %v2335 = vrsqrt.pop %v2303
        %v2336 = vrsqrt.pop %v2304
        %v2337 = vrsqrt.pop %v2305
        %v2338 = vrsqrt.pop %v2306
        %v2339 = vrsqrt.pop %v2307
        %v2340 = vrsqrt.pop %v2308
        %v2341 = vrsqrt.pop %v2309
        %v2342 = vrsqrt.pop %v2310
        %v2343 = vrsqrt.pop %v2311
        %v2344 = vrsqrt.pop %v2312
        %v2345 = vrsqrt.pop %v2313
        %v2346 = vrsqrt.pop %v2314
        %v2347 = vrsqrt.pop %v2315
        %v2348 = vrsqrt.pop %v2316
        %v2349 = vrsqrt.pop %v2317
        %v2350 = vrsqrt.pop %v2318
        %v2351 = vrsqrt.pop %v2319
        %v2352 = vrsqrt.pop %v2320
        %v2353 = vrsqrt.pop %v2321
        %v2354 = vmul.f32 %v2258, %v2322
        %v2355 = vmul.f32 %v2259, %v2323
        %v2356 = vmul.f32 %v2260, %v2324
        %v2357 = vmul.f32 %v2261, %v2325
        %v2358 = vmul.f32 %v2262, %v2326
        %v2359 = vmul.f32 %v2263, %v2327
        %v2360 = vmul.f32 %v2264, %v2328
        %v2361 = vmul.f32 %v2265, %v2329
        %v2362 = vmul.f32 %v2266, %v2330
        %v2363 = vmul.f32 %v2267, %v2331
        %v2364 = vmul.f32 %v2268, %v2332
        %v2365 = vmul.f32 %v2269, %v2333
        %v2366 = vmul.f32 %v2270, %v2334
        %v2367 = vmul.f32 %v2271, %v2335
        %v2368 = vmul.f32 %v2272, %v2336
        %v2369 = vmul.f32 %v2273, %v2337
        %v2370 = vmul.f32 %v2274, %v2338
        %v2371 = vmul.f32 %v2275, %v2339
        %v2372 = vmul.f32 %v2276, %v2340
        %v2373 = vmul.f32 %v2277, %v2341
        %v2374 = vmul.f32 %v2278, %v2342
        %v2375 = vmul.f32 %v2279, %v2343
        %v2376 = vmul.f32 %v2280, %v2344
        %v2377 = vmul.f32 %v2281, %v2345
        %v2378 = vmul.f32 %v2282, %v2346
        %v2379 = vmul.f32 %v2283, %v2347
        %v2380 = vmul.f32 %v2284, %v2348
        %v2381 = vmul.f32 %v2285, %v2349
        %v2382 = vmul.f32 %v2286, %v2350
        %v2383 = vmul.f32 %v2287, %v2351
        %v2384 = vmul.f32 %v2288, %v2352
        %v2385 = vmul.f32 %v2289, %v2353
        %2387 = vset.pattern.permute.xlu0 0
        %2388 = vperm.xlu0 %2387, %v2354
        %v2389 = vpop.permute.xlu0 %2388
        %2392 = vset.pattern.permute.xlu0 0
        %2393 = vperm.xlu0 %2392, %v2355
        %v2394 = vpop.permute.xlu0 %2393
        %2397 = vset.pattern.permute.xlu0 0
        %2398 = vperm.xlu0 %2397, %v2356
        %v2399 = vpop.permute.xlu0 %2398
        %2402 = vset.pattern.permute.xlu0 0
        %2403 = vperm.xlu0 %2402, %v2357
        %v2404 = vpop.permute.xlu0 %2403
        %2407 = vset.pattern.permute.xlu0 0
        %2408 = vperm.xlu0 %2407, %v2358
        %v2409 = vpop.permute.xlu0 %2408
        %2412 = vset.pattern.permute.xlu0 0
        %2413 = vperm.xlu0 %2412, %v2359
        %v2414 = vpop.permute.xlu0 %2413
        %2417 = vset.pattern.permute.xlu0 0
        %2418 = vperm.xlu0 %2417, %v2360
        %v2419 = vpop.permute.xlu0 %2418
        %2422 = vset.pattern.permute.xlu0 0
        %2423 = vperm.xlu0 %2422, %v2361
        %v2424 = vpop.permute.xlu0 %2423
        %2427 = vset.pattern.permute.xlu0 0
        %2428 = vperm.xlu0 %2427, %v2362
        %v2429 = vpop.permute.xlu0 %2428
        %2432 = vset.pattern.permute.xlu0 0
        %2433 = vperm.xlu0 %2432, %v2363
        %v2434 = vpop.permute.xlu0 %2433
        %2437 = vset.pattern.permute.xlu0 0
        %2438 = vperm.xlu0 %2437, %v2364
        %v2439 = vpop.permute.xlu0 %2438
        %2442 = vset.pattern.permute.xlu0 0
        %2443 = vperm.xlu0 %2442, %v2365
        %v2444 = vpop.permute.xlu0 %2443
        %2447 = vset.pattern.permute.xlu0 0
        %2448 = vperm.xlu0 %2447, %v2366
        %v2449 = vpop.permute.xlu0 %2448
        %2452 = vset.pattern.permute.xlu0 0
        %2453 = vperm.xlu0 %2452, %v2367
        %v2454 = vpop.permute.xlu0 %2453
        %2457 = vset.pattern.permute.xlu0 0
        %2458 = vperm.xlu0 %2457, %v2368
        %v2459 = vpop.permute.xlu0 %2458
        %2462 = vset.pattern.permute.xlu0 0
        %2463 = vperm.xlu0 %2462, %v2369
        %v2464 = vpop.permute.xlu0 %2463
        %2467 = vset.pattern.permute.xlu0 0
        %2468 = vperm.xlu0 %2467, %v2370
        %v2469 = vpop.permute.xlu0 %2468
        %2472 = vset.pattern.permute.xlu0 0
        %2473 = vperm.xlu0 %2472, %v2371
        %v2474 = vpop.permute.xlu0 %2473
        %2477 = vset.pattern.permute.xlu0 0
        %2478 = vperm.xlu0 %2477, %v2372
        %v2479 = vpop.permute.xlu0 %2478
        %2482 = vset.pattern.permute.xlu0 0
        %2483 = vperm.xlu0 %2482, %v2373
        %v2484 = vpop.permute.xlu0 %2483
        %2487 = vset.pattern.permute.xlu0 0
        %2488 = vperm.xlu0 %2487, %v2374
        %v2489 = vpop.permute.xlu0 %2488
        %2492 = vset.pattern.permute.xlu0 0
        %2493 = vperm.xlu0 %2492, %v2375
        %v2494 = vpop.permute.xlu0 %2493
        %2497 = vset.pattern.permute.xlu0 0
        %2498 = vperm.xlu0 %2497, %v2376
        %v2499 = vpop.permute.xlu0 %2498
        %2502 = vset.pattern.permute.xlu0 0
        %2503 = vperm.xlu0 %2502, %v2377
        %v2504 = vpop.permute.xlu0 %2503
        %2507 = vset.pattern.permute.xlu0 0
        %2508 = vperm.xlu0 %2507, %v2378
        %v2509 = vpop.permute.xlu0 %2508
        %2512 = vset.pattern.permute.xlu0 0
        %2513 = vperm.xlu0 %2512, %v2379
        %v2514 = vpop.permute.xlu0 %2513
        %2517 = vset.pattern.permute.xlu0 0
        %2518 = vperm.xlu0 %2517, %v2380
        %v2519 = vpop.permute.xlu0 %2518
        %2522 = vset.pattern.permute.xlu0 0
        %2523 = vperm.xlu0 %2522, %v2381
        %v2524 = vpop.permute.xlu0 %2523
        %2527 = vset.pattern.permute.xlu0 0
        %2528 = vperm.xlu0 %2527, %v2382
        %v2529 = vpop.permute.xlu0 %2528
        %2532 = vset.pattern.permute.xlu0 0
        %2533 = vperm.xlu0 %2532, %v2383
        %v2534 = vpop.permute.xlu0 %2533
        %2537 = vset.pattern.permute.xlu0 0
        %2538 = vperm.xlu0 %2537, %v2384
        %v2539 = vpop.permute.xlu0 %2538
        %2542 = vset.pattern.permute.xlu0 0
        %2543 = vperm.xlu0 %2542, %v2385
        %v2544 = vpop.permute.xlu0 %2543
        %v2546 = vmul.f32 %v1970, %v2389
        %v2547 = vmul.f32 %v1971, %v2389
        %v2548 = vmul.f32 %v1972, %v2394
        %v2549 = vmul.f32 %v1973, %v2394
        %v2550 = vmul.f32 %v1974, %v2399
        %v2551 = vmul.f32 %v1975, %v2399
        %v2552 = vmul.f32 %v1976, %v2404
        %v2553 = vmul.f32 %v1977, %v2404
        %v2554 = vmul.f32 %v1978, %v2409
        %v2555 = vmul.f32 %v1979, %v2409
        %v2556 = vmul.f32 %v1980, %v2414
        %v2557 = vmul.f32 %v1981, %v2414
        %v2558 = vmul.f32 %v1982, %v2419
        %v2559 = vmul.f32 %v1983, %v2419
        %v2560 = vmul.f32 %v1984, %v2424
        %v2561 = vmul.f32 %v1985, %v2424
        %v2562 = vmul.f32 %v1986, %v2429
        %v2563 = vmul.f32 %v1987, %v2429
        %v2564 = vmul.f32 %v1988, %v2434
        %v2565 = vmul.f32 %v1989, %v2434
        %v2566 = vmul.f32 %v1990, %v2439
        %v2567 = vmul.f32 %v1991, %v2439
        %v2568 = vmul.f32 %v1992, %v2444
        %v2569 = vmul.f32 %v1993, %v2444
        %v2570 = vmul.f32 %v1994, %v2449
        %v2571 = vmul.f32 %v1995, %v2449
        %v2572 = vmul.f32 %v1996, %v2454
        %v2573 = vmul.f32 %v1997, %v2454
        %v2574 = vmul.f32 %v1998, %v2459
        %v2575 = vmul.f32 %v1999, %v2459
        %v2576 = vmul.f32 %v2000, %v2464
        %v2577 = vmul.f32 %v2001, %v2464
        %v2578 = vmul.f32 %v2002, %v2469
        %v2579 = vmul.f32 %v2003, %v2469
        %v2580 = vmul.f32 %v2004, %v2474
        %v2581 = vmul.f32 %v2005, %v2474
        %v2582 = vmul.f32 %v2006, %v2479
        %v2583 = vmul.f32 %v2007, %v2479
        %v2584 = vmul.f32 %v2008, %v2484
        %v2585 = vmul.f32 %v2009, %v2484
        %v2586 = vmul.f32 %v2010, %v2489
        %v2587 = vmul.f32 %v2011, %v2489
        %v2588 = vmul.f32 %v2012, %v2494
        %v2589 = vmul.f32 %v2013, %v2494
        %v2590 = vmul.f32 %v2014, %v2499
        %v2591 = vmul.f32 %v2015, %v2499
        %v2592 = vmul.f32 %v2016, %v2504
        %v2593 = vmul.f32 %v2017, %v2504
        %v2594 = vmul.f32 %v2018, %v2509
        %v2595 = vmul.f32 %v2019, %v2509
        %v2596 = vmul.f32 %v2020, %v2514
        %v2597 = vmul.f32 %v2021, %v2514
        %v2598 = vmul.f32 %v2022, %v2519
        %v2599 = vmul.f32 %v2023, %v2519
        %v2600 = vmul.f32 %v2024, %v2524
        %v2601 = vmul.f32 %v2025, %v2524
        %v2602 = vmul.f32 %v2026, %v2529
        %v2603 = vmul.f32 %v2027, %v2529
        %v2604 = vmul.f32 %v2028, %v2534
        %v2605 = vmul.f32 %v2029, %v2534
        %v2606 = vmul.f32 %v2030, %v2539
        %v2607 = vmul.f32 %v2031, %v2539
        %v2608 = vmul.f32 %v2032, %v2544
        %v2609 = vmul.f32 %v2033, %v2544
        %v2610 = vld [vmem:[%s637] sm:$0xff]
        %v2611 = vld [vmem:[%s637 + $0x8] sm:$0xff]
        %v2612 = vld [vmem:[%s637 + $0x10] sm:$0xff]
        %v2613 = vld [vmem:[%s637 + $0x18] sm:$0xff]
        %v2614 = vld [vmem:[%s637 + $0x20] sm:$0xff]
        %v2615 = vld [vmem:[%s637 + $0x28] sm:$0xff]
        %v2616 = vld [vmem:[%s637 + $0x30] sm:$0xff]
        %v2617 = vld [vmem:[%s637 + $0x38] sm:$0xff]
        %v2618 = vld [vmem:[%s637 + $0x40] sm:$0xff]
        %v2619 = vld [vmem:[%s637 + $0x48] sm:$0xff]
        %v2620 = vld [vmem:[%s637 + $0x50] sm:$0xff]
        %v2621 = vld [vmem:[%s637 + $0x58] sm:$0xff]
        %v2622 = vld [vmem:[%s637 + $0x60] sm:$0xff]
        %v2623 = vld [vmem:[%s637 + $0x68] sm:$0xff]
        %v2624 = vld [vmem:[%s637 + $0x70] sm:$0xff]
        %v2625 = vld [vmem:[%s637 + $0x78] sm:$0xff]
        %v2626 = vld [vmem:[%s637 + $0x80] sm:$0xff]
        %v2627 = vld [vmem:[%s637 + $0x88] sm:$0xff]
        %v2628 = vld [vmem:[%s637 + $0x90] sm:$0xff]
        %v2629 = vld [vmem:[%s637 + $0x98] sm:$0xff]
        %v2630 = vld [vmem:[%s637 + $0xa0] sm:$0xff]
        %v2631 = vld [vmem:[%s637 + $0xa8] sm:$0xff]
        %v2632 = vld [vmem:[%s637 + $0xb0] sm:$0xff]
        %v2633 = vld [vmem:[%s637 + $0xb8] sm:$0xff]
        %v2634 = vld [vmem:[%s637 + $0xc0] sm:$0xff]
        %v2635 = vld [vmem:[%s637 + $0xc8] sm:$0xff]
        %v2636 = vld [vmem:[%s637 + $0xd0] sm:$0xff]
        %v2637 = vld [vmem:[%s637 + $0xd8] sm:$0xff]
        %v2638 = vld [vmem:[%s637 + $0xe0] sm:$0xff]
        %v2639 = vld [vmem:[%s637 + $0xe8] sm:$0xff]
        %v2640 = vld [vmem:[%s637 + $0xf0] sm:$0xff]
        %v2641 = vld [vmem:[%s637 + $0xf8] sm:$0xff]
        %2643 = vset.pattern.permute.xlu0 0
        %2644 = vperm.xlu0 %2643, %v2610
        %v2645 = vpop.permute.xlu0 %2644
        %2648 = vset.pattern.permute.xlu0 0
        %2649 = vperm.xlu0 %2648, %v2611
        %v2650 = vpop.permute.xlu0 %2649
        %2653 = vset.pattern.permute.xlu0 0
        %2654 = vperm.xlu0 %2653, %v2612
        %v2655 = vpop.permute.xlu0 %2654
        %2658 = vset.pattern.permute.xlu0 0
        %2659 = vperm.xlu0 %2658, %v2613
        %v2660 = vpop.permute.xlu0 %2659
        %2663 = vset.pattern.permute.xlu0 0
        %2664 = vperm.xlu0 %2663, %v2614
        %v2665 = vpop.permute.xlu0 %2664
        %2668 = vset.pattern.permute.xlu0 0
        %2669 = vperm.xlu0 %2668, %v2615
        %v2670 = vpop.permute.xlu0 %2669
        %2673 = vset.pattern.permute.xlu0 0
        %2674 = vperm.xlu0 %2673, %v2616
        %v2675 = vpop.permute.xlu0 %2674
        %2678 = vset.pattern.permute.xlu0 0
        %2679 = vperm.xlu0 %2678, %v2617
        %v2680 = vpop.permute.xlu0 %2679
        %2683 = vset.pattern.permute.xlu0 0
        %2684 = vperm.xlu0 %2683, %v2618
        %v2685 = vpop.permute.xlu0 %2684
        %2688 = vset.pattern.permute.xlu0 0
        %2689 = vperm.xlu0 %2688, %v2619
        %v2690 = vpop.permute.xlu0 %2689
        %2693 = vset.pattern.permute.xlu0 0
        %2694 = vperm.xlu0 %2693, %v2620
        %v2695 = vpop.permute.xlu0 %2694
        %2698 = vset.pattern.permute.xlu0 0
        %2699 = vperm.xlu0 %2698, %v2621
        %v2700 = vpop.permute.xlu0 %2699
        %2703 = vset.pattern.permute.xlu0 0
        %2704 = vperm.xlu0 %2703, %v2622
        %v2705 = vpop.permute.xlu0 %2704
        %2708 = vset.pattern.permute.xlu0 0
        %2709 = vperm.xlu0 %2708, %v2623
        %v2710 = vpop.permute.xlu0 %2709
        %2713 = vset.pattern.permute.xlu0 0
        %2714 = vperm.xlu0 %2713, %v2624
        %v2715 = vpop.permute.xlu0 %2714
        %2718 = vset.pattern.permute.xlu0 0
        %2719 = vperm.xlu0 %2718, %v2625
        %v2720 = vpop.permute.xlu0 %2719
        %2723 = vset.pattern.permute.xlu0 0
        %2724 = vperm.xlu0 %2723, %v2626
        %v2725 = vpop.permute.xlu0 %2724
        %2728 = vset.pattern.permute.xlu0 0
        %2729 = vperm.xlu0 %2728, %v2627
        %v2730 = vpop.permute.xlu0 %2729
        %2733 = vset.pattern.permute.xlu0 0
        %2734 = vperm.xlu0 %2733, %v2628
        %v2735 = vpop.permute.xlu0 %2734
        %2738 = vset.pattern.permute.xlu0 0
        %2739 = vperm.xlu0 %2738, %v2629
        %v2740 = vpop.permute.xlu0 %2739
        %2743 = vset.pattern.permute.xlu0 0
        %2744 = vperm.xlu0 %2743, %v2630
        %v2745 = vpop.permute.xlu0 %2744
        %2748 = vset.pattern.permute.xlu0 0
        %2749 = vperm.xlu0 %2748, %v2631
        %v2750 = vpop.permute.xlu0 %2749
        %2753 = vset.pattern.permute.xlu0 0
        %2754 = vperm.xlu0 %2753, %v2632
        %v2755 = vpop.permute.xlu0 %2754
        %2758 = vset.pattern.permute.xlu0 0
        %2759 = vperm.xlu0 %2758, %v2633
        %v2760 = vpop.permute.xlu0 %2759
        %2763 = vset.pattern.permute.xlu0 0
        %2764 = vperm.xlu0 %2763, %v2634
        %v2765 = vpop.permute.xlu0 %2764
        %2768 = vset.pattern.permute.xlu0 0
        %2769 = vperm.xlu0 %2768, %v2635
        %v2770 = vpop.permute.xlu0 %2769
        %2773 = vset.pattern.permute.xlu0 0
        %2774 = vperm.xlu0 %2773, %v2636
        %v2775 = vpop.permute.xlu0 %2774
        %2778 = vset.pattern.permute.xlu0 0
        %2779 = vperm.xlu0 %2778, %v2637
        %v2780 = vpop.permute.xlu0 %2779
        %2783 = vset.pattern.permute.xlu0 0
        %2784 = vperm.xlu0 %2783, %v2638
        %v2785 = vpop.permute.xlu0 %2784
        %2788 = vset.pattern.permute.xlu0 0
        %2789 = vperm.xlu0 %2788, %v2639
        %v2790 = vpop.permute.xlu0 %2789
        %2793 = vset.pattern.permute.xlu0 0
        %2794 = vperm.xlu0 %2793, %v2640
        %v2795 = vpop.permute.xlu0 %2794
        %2798 = vset.pattern.permute.xlu0 0
        %2799 = vperm.xlu0 %2798, %v2641
        %v2800 = vpop.permute.xlu0 %2799
        %v2802 = vadd.f32 %v2546, %v2645
        %v2803 = vadd.f32 %v2547, %v2645
        %v2804 = vadd.f32 %v2548, %v2650
        %v2805 = vadd.f32 %v2549, %v2650
        %v2806 = vadd.f32 %v2550, %v2655
        %v2807 = vadd.f32 %v2551, %v2655
        %v2808 = vadd.f32 %v2552, %v2660
        %v2809 = vadd.f32 %v2553, %v2660
        %v2810 = vadd.f32 %v2554, %v2665
        %v2811 = vadd.f32 %v2555, %v2665
        %v2812 = vadd.f32 %v2556, %v2670
        %v2813 = vadd.f32 %v2557, %v2670
        %v2814 = vadd.f32 %v2558, %v2675
        %v2815 = vadd.f32 %v2559, %v2675
        %v2816 = vadd.f32 %v2560, %v2680
        %v2817 = vadd.f32 %v2561, %v2680
        %v2818 = vadd.f32 %v2562, %v2685
        %v2819 = vadd.f32 %v2563, %v2685
        %v2820 = vadd.f32 %v2564, %v2690
        %v2821 = vadd.f32 %v2565, %v2690
        %v2822 = vadd.f32 %v2566, %v2695
        %v2823 = vadd.f32 %v2567, %v2695
        %v2824 = vadd.f32 %v2568, %v2700
        %v2825 = vadd.f32 %v2569, %v2700
        %v2826 = vadd.f32 %v2570, %v2705
        %v2827 = vadd.f32 %v2571, %v2705
        %v2828 = vadd.f32 %v2572, %v2710
        %v2829 = vadd.f32 %v2573, %v2710
        %v2830 = vadd.f32 %v2574, %v2715
        %v2831 = vadd.f32 %v2575, %v2715
        %v2832 = vadd.f32 %v2576, %v2720
        %v2833 = vadd.f32 %v2577, %v2720
        %v2834 = vadd.f32 %v2578, %v2725
        %v2835 = vadd.f32 %v2579, %v2725
        %v2836 = vadd.f32 %v2580, %v2730
        %v2837 = vadd.f32 %v2581, %v2730
        %v2838 = vadd.f32 %v2582, %v2735
        %v2839 = vadd.f32 %v2583, %v2735
        %v2840 = vadd.f32 %v2584, %v2740
        %v2841 = vadd.f32 %v2585, %v2740
        %v2842 = vadd.f32 %v2586, %v2745
        %v2843 = vadd.f32 %v2587, %v2745
        %v2844 = vadd.f32 %v2588, %v2750
        %v2845 = vadd.f32 %v2589, %v2750
        %v2846 = vadd.f32 %v2590, %v2755
        %v2847 = vadd.f32 %v2591, %v2755
        %v2848 = vadd.f32 %v2592, %v2760
        %v2849 = vadd.f32 %v2593, %v2760
        %v2850 = vadd.f32 %v2594, %v2765
        %v2851 = vadd.f32 %v2595, %v2765
        %v2852 = vadd.f32 %v2596, %v2770
        %v2853 = vadd.f32 %v2597, %v2770
        %v2854 = vadd.f32 %v2598, %v2775
        %v2855 = vadd.f32 %v2599, %v2775
        %v2856 = vadd.f32 %v2600, %v2780
        %v2857 = vadd.f32 %v2601, %v2780
        %v2858 = vadd.f32 %v2602, %v2785
        %v2859 = vadd.f32 %v2603, %v2785
        %v2860 = vadd.f32 %v2604, %v2790
        %v2861 = vadd.f32 %v2605, %v2790
        %v2862 = vadd.f32 %v2606, %v2795
        %v2863 = vadd.f32 %v2607, %v2795
        %v2864 = vadd.f32 %v2608, %v2800
        %v2865 = vadd.f32 %v2609, %v2800
        %v2866 = vld [vmem:[%s644] sm:$0xff]
        %v2867 = vld [vmem:[%s644 + $0x8] sm:$0xff]
        %v2868 = vld [vmem:[%s644 + $0x10] sm:$0xff]
        %v2869 = vld [vmem:[%s644 + $0x18] sm:$0xff]
        %v2870 = vld [vmem:[%s644 + $0x20] sm:$0xff]
        %v2871 = vld [vmem:[%s644 + $0x28] sm:$0xff]
        %v2872 = vld [vmem:[%s644 + $0x30] sm:$0xff]
        %v2873 = vld [vmem:[%s644 + $0x38] sm:$0xff]
        %v2874 = vld [vmem:[%s644 + $0x40] sm:$0xff]
        %v2875 = vld [vmem:[%s644 + $0x48] sm:$0xff]
        %v2876 = vld [vmem:[%s644 + $0x50] sm:$0xff]
        %v2877 = vld [vmem:[%s644 + $0x58] sm:$0xff]
        %v2878 = vld [vmem:[%s644 + $0x60] sm:$0xff]
        %v2879 = vld [vmem:[%s644 + $0x68] sm:$0xff]
        %v2880 = vld [vmem:[%s644 + $0x70] sm:$0xff]
        %v2881 = vld [vmem:[%s644 + $0x78] sm:$0xff]
        %v2882 = vld [vmem:[%s644 + $0x80] sm:$0xff]
        %v2883 = vld [vmem:[%s644 + $0x88] sm:$0xff]
        %v2884 = vld [vmem:[%s644 + $0x90] sm:$0xff]
        %v2885 = vld [vmem:[%s644 + $0x98] sm:$0xff]
        %v2886 = vld [vmem:[%s644 + $0xa0] sm:$0xff]
        %v2887 = vld [vmem:[%s644 + $0xa8] sm:$0xff]
        %v2888 = vld [vmem:[%s644 + $0xb0] sm:$0xff]
        %v2889 = vld [vmem:[%s644 + $0xb8] sm:$0xff]
        %v2890 = vld [vmem:[%s644 + $0xc0] sm:$0xff]
        %v2891 = vld [vmem:[%s644 + $0xc8] sm:$0xff]
        %v2892 = vld [vmem:[%s644 + $0xd0] sm:$0xff]
        %v2893 = vld [vmem:[%s644 + $0xd8] sm:$0xff]
        %v2894 = vld [vmem:[%s644 + $0xe0] sm:$0xff]
        %v2895 = vld [vmem:[%s644 + $0xe8] sm:$0xff]
        %v2896 = vld [vmem:[%s644 + $0xf0] sm:$0xff]
        %v2897 = vld [vmem:[%s644 + $0xf8] sm:$0xff]
        %v2898 = vunpack.c.l.bf16 %v2866
        %v2899 = vunpack.c.h.bf16 %v2866
        %v2900 = vunpack.c.l.bf16 %v2867
        %v2901 = vunpack.c.h.bf16 %v2867
        %v2902 = vunpack.c.l.bf16 %v2868
        %v2903 = vunpack.c.h.bf16 %v2868
        %v2904 = vunpack.c.l.bf16 %v2869
        %v2905 = vunpack.c.h.bf16 %v2869
        %v2906 = vunpack.c.l.bf16 %v2870
        %v2907 = vunpack.c.h.bf16 %v2870
        %v2908 = vunpack.c.l.bf16 %v2871
        %v2909 = vunpack.c.h.bf16 %v2871
        %v2910 = vunpack.c.l.bf16 %v2872
        %v2911 = vunpack.c.h.bf16 %v2872
        %v2912 = vunpack.c.l.bf16 %v2873
        %v2913 = vunpack.c.h.bf16 %v2873
        %v2914 = vunpack.c.l.bf16 %v2874
        %v2915 = vunpack.c.h.bf16 %v2874
        %v2916 = vunpack.c.l.bf16 %v2875
        %v2917 = vunpack.c.h.bf16 %v2875
        %v2918 = vunpack.c.l.bf16 %v2876
        %v2919 = vunpack.c.h.bf16 %v2876
        %v2920 = vunpack.c.l.bf16 %v2877
        %v2921 = vunpack.c.h.bf16 %v2877
        %v2922 = vunpack.c.l.bf16 %v2878
        %v2923 = vunpack.c.h.bf16 %v2878
        %v2924 = vunpack.c.l.bf16 %v2879
        %v2925 = vunpack.c.h.bf16 %v2879
        %v2926 = vunpack.c.l.bf16 %v2880
        %v2927 = vunpack.c.h.bf16 %v2880
        %v2928 = vunpack.c.l.bf16 %v2881
        %v2929 = vunpack.c.h.bf16 %v2881
        %v2930 = vunpack.c.l.bf16 %v2882
        %v2931 = vunpack.c.h.bf16 %v2882
        %v2932 = vunpack.c.l.bf16 %v2883
        %v2933 = vunpack.c.h.bf16 %v2883
        %v2934 = vunpack.c.l.bf16 %v2884
        %v2935 = vunpack.c.h.bf16 %v2884
        %v2936 = vunpack.c.l.bf16 %v2885
        %v2937 = vunpack.c.h.bf16 %v2885
        %v2938 = vunpack.c.l.bf16 %v2886
        %v2939 = vunpack.c.h.bf16 %v2886
        %v2940 = vunpack.c.l.bf16 %v2887
        %v2941 = vunpack.c.h.bf16 %v2887
        %v2942 = vunpack.c.l.bf16 %v2888
        %v2943 = vunpack.c.h.bf16 %v2888
        %v2944 = vunpack.c.l.bf16 %v2889
        %v2945 = vunpack.c.h.bf16 %v2889
        %v2946 = vunpack.c.l.bf16 %v2890
        %v2947 = vunpack.c.h.bf16 %v2890
        %v2948 = vunpack.c.l.bf16 %v2891
        %v2949 = vunpack.c.h.bf16 %v2891
        %v2950 = vunpack.c.l.bf16 %v2892
        %v2951 = vunpack.c.h.bf16 %v2892
        %v2952 = vunpack.c.l.bf16 %v2893
        %v2953 = vunpack.c.h.bf16 %v2893
        %v2954 = vunpack.c.l.bf16 %v2894
        %v2955 = vunpack.c.h.bf16 %v2894
        %v2956 = vunpack.c.l.bf16 %v2895
        %v2957 = vunpack.c.h.bf16 %v2895
        %v2958 = vunpack.c.l.bf16 %v2896
        %v2959 = vunpack.c.h.bf16 %v2896
        %v2960 = vunpack.c.l.bf16 %v2897
        %v2961 = vunpack.c.h.bf16 %v2897
        %v2962 = vadd.f32 %v2802, %v2898
        %v2963 = vadd.f32 %v2803, %v2899
        %v2964 = vadd.f32 %v2804, %v2900
        %v2965 = vadd.f32 %v2805, %v2901
        %v2966 = vadd.f32 %v2806, %v2902
        %v2967 = vadd.f32 %v2807, %v2903
        %v2968 = vadd.f32 %v2808, %v2904
        %v2969 = vadd.f32 %v2809, %v2905
        %v2970 = vadd.f32 %v2810, %v2906
        %v2971 = vadd.f32 %v2811, %v2907
        %v2972 = vadd.f32 %v2812, %v2908
        %v2973 = vadd.f32 %v2813, %v2909
        %v2974 = vadd.f32 %v2814, %v2910
        %v2975 = vadd.f32 %v2815, %v2911
        %v2976 = vadd.f32 %v2816, %v2912
        %v2977 = vadd.f32 %v2817, %v2913
        %v2978 = vadd.f32 %v2818, %v2914
        %v2979 = vadd.f32 %v2819, %v2915
        %v2980 = vadd.f32 %v2820, %v2916
        %v2981 = vadd.f32 %v2821, %v2917
        %v2982 = vadd.f32 %v2822, %v2918
        %v2983 = vadd.f32 %v2823, %v2919
        %v2984 = vadd.f32 %v2824, %v2920
        %v2985 = vadd.f32 %v2825, %v2921
        %v2986 = vadd.f32 %v2826, %v2922
        %v2987 = vadd.f32 %v2827, %v2923
        %v2988 = vadd.f32 %v2828, %v2924
        %v2989 = vadd.f32 %v2829, %v2925
        %v2990 = vadd.f32 %v2830, %v2926
        %v2991 = vadd.f32 %v2831, %v2927
        %v2992 = vadd.f32 %v2832, %v2928
        %v2993 = vadd.f32 %v2833, %v2929
        %v2994 = vadd.f32 %v2834, %v2930
        %v2995 = vadd.f32 %v2835, %v2931
        %v2996 = vadd.f32 %v2836, %v2932
        %v2997 = vadd.f32 %v2837, %v2933
        %v2998 = vadd.f32 %v2838, %v2934
        %v2999 = vadd.f32 %v2839, %v2935
        %v3000 = vadd.f32 %v2840, %v2936
        %v3001 = vadd.f32 %v2841, %v2937
        %v3002 = vadd.f32 %v2842, %v2938
        %v3003 = vadd.f32 %v2843, %v2939
        %v3004 = vadd.f32 %v2844, %v2940
        %v3005 = vadd.f32 %v2845, %v2941
        %v3006 = vadd.f32 %v2846, %v2942
        %v3007 = vadd.f32 %v2847, %v2943
        %v3008 = vadd.f32 %v2848, %v2944
        %v3009 = vadd.f32 %v2849, %v2945
        %v3010 = vadd.f32 %v2850, %v2946
        %v3011 = vadd.f32 %v2851, %v2947
        %v3012 = vadd.f32 %v2852, %v2948
        %v3013 = vadd.f32 %v2853, %v2949
        %v3014 = vadd.f32 %v2854, %v2950
        %v3015 = vadd.f32 %v2855, %v2951
        %v3016 = vadd.f32 %v2856, %v2952
        %v3017 = vadd.f32 %v2857, %v2953
        %v3018 = vadd.f32 %v2858, %v2954
        %v3019 = vadd.f32 %v2859, %v2955
        %v3020 = vadd.f32 %v2860, %v2956
        %v3021 = vadd.f32 %v2861, %v2957
        %v3022 = vadd.f32 %v2862, %v2958
        %v3023 = vadd.f32 %v2863, %v2959
        %v3024 = vadd.f32 %v2864, %v2960
        %v3025 = vadd.f32 %v2865, %v2961
        %v3026 = vmax.f32 %v2962, 0.0
        %v3027 = vmax.f32 %v2963, 0.0
        %v3028 = vmax.f32 %v2964, 0.0
        %v3029 = vmax.f32 %v2965, 0.0
        %v3030 = vmax.f32 %v2966, 0.0
        %v3031 = vmax.f32 %v2967, 0.0
        %v3032 = vmax.f32 %v2968, 0.0
        %v3033 = vmax.f32 %v2969, 0.0
        %v3034 = vmax.f32 %v2970, 0.0
        %v3035 = vmax.f32 %v2971, 0.0
        %v3036 = vmax.f32 %v2972, 0.0
        %v3037 = vmax.f32 %v2973, 0.0
        %v3038 = vmax.f32 %v2974, 0.0
        %v3039 = vmax.f32 %v2975, 0.0
        %v3040 = vmax.f32 %v2976, 0.0
        %v3041 = vmax.f32 %v2977, 0.0
        %v3042 = vmax.f32 %v2978, 0.0
        %v3043 = vmax.f32 %v2979, 0.0
        %v3044 = vmax.f32 %v2980, 0.0
        %v3045 = vmax.f32 %v2981, 0.0
        %v3046 = vmax.f32 %v2982, 0.0
        %v3047 = vmax.f32 %v2983, 0.0
        %v3048 = vmax.f32 %v2984, 0.0
        %v3049 = vmax.f32 %v2985, 0.0
        %v3050 = vmax.f32 %v2986, 0.0
        %v3051 = vmax.f32 %v2987, 0.0
        %v3052 = vmax.f32 %v2988, 0.0
        %v3053 = vmax.f32 %v2989, 0.0
        %v3054 = vmax.f32 %v2990, 0.0
        %v3055 = vmax.f32 %v2991, 0.0
        %v3056 = vmax.f32 %v2992, 0.0
        %v3057 = vmax.f32 %v2993, 0.0
        %v3058 = vmax.f32 %v2994, 0.0
        %v3059 = vmax.f32 %v2995, 0.0
        %v3060 = vmax.f32 %v2996, 0.0
        %v3061 = vmax.f32 %v2997, 0.0
        %v3062 = vmax.f32 %v2998, 0.0
        %v3063 = vmax.f32 %v2999, 0.0
        %v3064 = vmax.f32 %v3000, 0.0
        %v3065 = vmax.f32 %v3001, 0.0
        %v3066 = vmax.f32 %v3002, 0.0
        %v3067 = vmax.f32 %v3003, 0.0
        %v3068 = vmax.f32 %v3004, 0.0
        %v3069 = vmax.f32 %v3005, 0.0
        %v3070 = vmax.f32 %v3006, 0.0
        %v3071 = vmax.f32 %v3007, 0.0
        %v3072 = vmax.f32 %v3008, 0.0
        %v3073 = vmax.f32 %v3009, 0.0
        %v3074 = vmax.f32 %v3010, 0.0
        %v3075 = vmax.f32 %v3011, 0.0
        %v3076 = vmax.f32 %v3012, 0.0
        %v3077 = vmax.f32 %v3013, 0.0
        %v3078 = vmax.f32 %v3014, 0.0
        %v3079 = vmax.f32 %v3015, 0.0
        %v3080 = vmax.f32 %v3016, 0.0
        %v3081 = vmax.f32 %v3017, 0.0
        %v3082 = vmax.f32 %v3018, 0.0
        %v3083 = vmax.f32 %v3019, 0.0
        %v3084 = vmax.f32 %v3020, 0.0
        %v3085 = vmax.f32 %v3021, 0.0
        %v3086 = vmax.f32 %v3022, 0.0
        %v3087 = vmax.f32 %v3023, 0.0
        %v3088 = vmax.f32 %v3024, 0.0
        %v3089 = vmax.f32 %v3025, 0.0
        %v3090 = vld [vmem:[%s570] sm:$0xff]
        %v3091 = vld [vmem:[%s570 + $0x8] sm:$0xff]
        %v3092 = vld [vmem:[%s570 + $0x10] sm:$0xff]
        %v3093 = vld [vmem:[%s570 + $0x18] sm:$0xff]
        %v3094 = vld [vmem:[%s570 + $0x20] sm:$0xff]
        %v3095 = vld [vmem:[%s570 + $0x28] sm:$0xff]
        %v3096 = vld [vmem:[%s570 + $0x30] sm:$0xff]
        %v3097 = vld [vmem:[%s570 + $0x38] sm:$0xff]
        %v3098 = vld [vmem:[%s570 + $0x40] sm:$0xff]
        %v3099 = vld [vmem:[%s570 + $0x48] sm:$0xff]
        %v3100 = vld [vmem:[%s570 + $0x50] sm:$0xff]
        %v3101 = vld [vmem:[%s570 + $0x58] sm:$0xff]
        %v3102 = vld [vmem:[%s570 + $0x60] sm:$0xff]
        %v3103 = vld [vmem:[%s570 + $0x68] sm:$0xff]
        %v3104 = vld [vmem:[%s570 + $0x70] sm:$0xff]
        %v3105 = vld [vmem:[%s570 + $0x78] sm:$0xff]
        %v3106 = vld [vmem:[%s570 + $0x80] sm:$0xff]
        %v3107 = vld [vmem:[%s570 + $0x88] sm:$0xff]
        %v3108 = vld [vmem:[%s570 + $0x90] sm:$0xff]
        %v3109 = vld [vmem:[%s570 + $0x98] sm:$0xff]
        %v3110 = vld [vmem:[%s570 + $0xa0] sm:$0xff]
        %v3111 = vld [vmem:[%s570 + $0xa8] sm:$0xff]
        %v3112 = vld [vmem:[%s570 + $0xb0] sm:$0xff]
        %v3113 = vld [vmem:[%s570 + $0xb8] sm:$0xff]
        %v3114 = vld [vmem:[%s570 + $0xc0] sm:$0xff]
        %v3115 = vld [vmem:[%s570 + $0xc8] sm:$0xff]
        %v3116 = vld [vmem:[%s570 + $0xd0] sm:$0xff]
        %v3117 = vld [vmem:[%s570 + $0xd8] sm:$0xff]
        %v3118 = vld [vmem:[%s570 + $0xe0] sm:$0xff]
        %v3119 = vld [vmem:[%s570 + $0xe8] sm:$0xff]
        %v3120 = vld [vmem:[%s570 + $0xf0] sm:$0xff]
        %v3121 = vld [vmem:[%s570 + $0xf8] sm:$0xff]
        %v3122 = vld [vmem:[%s570 + $0x100] sm:$0xff]
        %v3123 = vld [vmem:[%s570 + $0x108] sm:$0xff]
        %v3124 = vld [vmem:[%s570 + $0x110] sm:$0xff]
        %v3125 = vld [vmem:[%s570 + $0x118] sm:$0xff]
        %v3126 = vld [vmem:[%s570 + $0x120] sm:$0xff]
        %v3127 = vld [vmem:[%s570 + $0x128] sm:$0xff]
        %v3128 = vld [vmem:[%s570 + $0x130] sm:$0xff]
        %v3129 = vld [vmem:[%s570 + $0x138] sm:$0xff]
        %v3130 = vld [vmem:[%s570 + $0x140] sm:$0xff]
        %v3131 = vld [vmem:[%s570 + $0x148] sm:$0xff]
        %v3132 = vld [vmem:[%s570 + $0x150] sm:$0xff]
        %v3133 = vld [vmem:[%s570 + $0x158] sm:$0xff]
        %v3134 = vld [vmem:[%s570 + $0x160] sm:$0xff]
        %v3135 = vld [vmem:[%s570 + $0x168] sm:$0xff]
        %v3136 = vld [vmem:[%s570 + $0x170] sm:$0xff]
        %v3137 = vld [vmem:[%s570 + $0x178] sm:$0xff]
        %v3138 = vld [vmem:[%s570 + $0x180] sm:$0xff]
        %v3139 = vld [vmem:[%s570 + $0x188] sm:$0xff]
        %v3140 = vld [vmem:[%s570 + $0x190] sm:$0xff]
        %v3141 = vld [vmem:[%s570 + $0x198] sm:$0xff]
        %v3142 = vld [vmem:[%s570 + $0x1a0] sm:$0xff]
        %v3143 = vld [vmem:[%s570 + $0x1a8] sm:$0xff]
        %v3144 = vld [vmem:[%s570 + $0x1b0] sm:$0xff]
        %v3145 = vld [vmem:[%s570 + $0x1b8] sm:$0xff]
        %v3146 = vld [vmem:[%s570 + $0x1c0] sm:$0xff]
        %v3147 = vld [vmem:[%s570 + $0x1c8] sm:$0xff]
        %v3148 = vld [vmem:[%s570 + $0x1d0] sm:$0xff]
        %v3149 = vld [vmem:[%s570 + $0x1d8] sm:$0xff]
        %v3150 = vld [vmem:[%s570 + $0x1e0] sm:$0xff]
        %v3151 = vld [vmem:[%s570 + $0x1e8] sm:$0xff]
        %v3152 = vld [vmem:[%s570 + $0x1f0] sm:$0xff]
        %v3153 = vld [vmem:[%s570 + $0x1f8] sm:$0xff]
        %v3154 = vpack.c.bf16 %v3028, %v3026
        %v3155 = vpack.c.bf16 %v3029, %v3027
        %v3156 = vpack.c.bf16 %v3032, %v3030
        %v3157 = vpack.c.bf16 %v3033, %v3031
        %v3158 = vpack.c.bf16 %v3036, %v3034
        %v3159 = vpack.c.bf16 %v3037, %v3035
        %v3160 = vpack.c.bf16 %v3040, %v3038
        %v3161 = vpack.c.bf16 %v3041, %v3039
        %v3162 = vpack.c.bf16 %v3044, %v3042
        %v3163 = vpack.c.bf16 %v3045, %v3043
        %v3164 = vpack.c.bf16 %v3048, %v3046
        %v3165 = vpack.c.bf16 %v3049, %v3047
        %v3166 = vpack.c.bf16 %v3052, %v3050
        %v3167 = vpack.c.bf16 %v3053, %v3051
        %v3168 = vpack.c.bf16 %v3056, %v3054
        %v3169 = vpack.c.bf16 %v3057, %v3055
        %v3170 = vpack.c.bf16 %v3060, %v3058
        %v3171 = vpack.c.bf16 %v3061, %v3059
        %v3172 = vpack.c.bf16 %v3064, %v3062
        %v3173 = vpack.c.bf16 %v3065, %v3063
        %v3174 = vpack.c.bf16 %v3068, %v3066
        %v3175 = vpack.c.bf16 %v3069, %v3067
        %v3176 = vpack.c.bf16 %v3072, %v3070
        %v3177 = vpack.c.bf16 %v3073, %v3071
        %v3178 = vpack.c.bf16 %v3076, %v3074
        %v3179 = vpack.c.bf16 %v3077, %v3075
        %v3180 = vpack.c.bf16 %v3080, %v3078
        %v3181 = vpack.c.bf16 %v3081, %v3079
        %v3182 = vpack.c.bf16 %v3084, %v3082
        %v3183 = vpack.c.bf16 %v3085, %v3083
        %v3184 = vpack.c.bf16 %v3088, %v3086
        %v3185 = vpack.c.bf16 %v3089, %v3087
        %v3250 = vunpack.c.l.b16 %v3090
        %v3251 = vunpack.c.h.b16 %v3090
        %v3252 = vunpack.c.l.b16 %v3091
        %v3253 = vunpack.c.h.b16 %v3091
        %v3254 = vunpack.c.l.b16 %v3092
        %v3255 = vunpack.c.h.b16 %v3092
        %v3256 = vunpack.c.l.b16 %v3093
        %v3257 = vunpack.c.h.b16 %v3093
        %v3258 = vunpack.c.l.b16 %v3094
        %v3259 = vunpack.c.h.b16 %v3094
        %v3260 = vunpack.c.l.b16 %v3095
        %v3261 = vunpack.c.h.b16 %v3095
        %v3262 = vunpack.c.l.b16 %v3096
        %v3263 = vunpack.c.h.b16 %v3096
        %v3264 = vunpack.c.l.b16 %v3097
        %v3265 = vunpack.c.h.b16 %v3097
        %v3266 = vunpack.c.l.b16 %v3098
        %v3267 = vunpack.c.h.b16 %v3098
        %v3268 = vunpack.c.l.b16 %v3099
        %v3269 = vunpack.c.h.b16 %v3099
        %v3270 = vunpack.c.l.b16 %v3100
        %v3271 = vunpack.c.h.b16 %v3100
        %v3272 = vunpack.c.l.b16 %v3101
        %v3273 = vunpack.c.h.b16 %v3101
        %v3274 = vunpack.c.l.b16 %v3102
        %v3275 = vunpack.c.h.b16 %v3102
        %v3276 = vunpack.c.l.b16 %v3103
        %v3277 = vunpack.c.h.b16 %v3103
        %v3278 = vunpack.c.l.b16 %v3104
        %v3279 = vunpack.c.h.b16 %v3104
        %v3280 = vunpack.c.l.b16 %v3105
        %v3281 = vunpack.c.h.b16 %v3105
        %v3282 = vunpack.c.l.b16 %v3106
        %v3283 = vunpack.c.h.b16 %v3106
        %v3284 = vunpack.c.l.b16 %v3107
        %v3285 = vunpack.c.h.b16 %v3107
        %v3286 = vunpack.c.l.b16 %v3108
        %v3287 = vunpack.c.h.b16 %v3108
        %v3288 = vunpack.c.l.b16 %v3109
        %v3289 = vunpack.c.h.b16 %v3109
        %v3290 = vunpack.c.l.b16 %v3110
        %v3291 = vunpack.c.h.b16 %v3110
        %v3292 = vunpack.c.l.b16 %v3111
        %v3293 = vunpack.c.h.b16 %v3111
        %v3294 = vunpack.c.l.b16 %v3112
        %v3295 = vunpack.c.h.b16 %v3112
        %v3296 = vunpack.c.l.b16 %v3113
        %v3297 = vunpack.c.h.b16 %v3113
        %v3298 = vunpack.c.l.b16 %v3114
        %v3299 = vunpack.c.h.b16 %v3114
        %v3300 = vunpack.c.l.b16 %v3115
        %v3301 = vunpack.c.h.b16 %v3115
        %v3302 = vunpack.c.l.b16 %v3116
        %v3303 = vunpack.c.h.b16 %v3116
        %v3304 = vunpack.c.l.b16 %v3117
        %v3305 = vunpack.c.h.b16 %v3117
        %v3306 = vunpack.c.l.b16 %v3118
        %v3307 = vunpack.c.h.b16 %v3118
        %v3308 = vunpack.c.l.b16 %v3119
        %v3309 = vunpack.c.h.b16 %v3119
        %v3310 = vunpack.c.l.b16 %v3120
        %v3311 = vunpack.c.h.b16 %v3120
        %v3312 = vunpack.c.l.b16 %v3121
        %v3313 = vunpack.c.h.b16 %v3121
        %v3314 = vunpack.c.l.b16 %v3122
        %v3315 = vunpack.c.h.b16 %v3122
        %v3316 = vunpack.c.l.b16 %v3123
        %v3317 = vunpack.c.h.b16 %v3123
        %v3318 = vunpack.c.l.b16 %v3124
        %v3319 = vunpack.c.h.b16 %v3124
        %v3320 = vunpack.c.l.b16 %v3125
        %v3321 = vunpack.c.h.b16 %v3125
        %v3322 = vunpack.c.l.b16 %v3126
        %v3323 = vunpack.c.h.b16 %v3126
        %v3324 = vunpack.c.l.b16 %v3127
        %v3325 = vunpack.c.h.b16 %v3127
        %v3326 = vunpack.c.l.b16 %v3128
        %v3327 = vunpack.c.h.b16 %v3128
        %v3328 = vunpack.c.l.b16 %v3129
        %v3329 = vunpack.c.h.b16 %v3129
        %v3330 = vunpack.c.l.b16 %v3130
        %v3331 = vunpack.c.h.b16 %v3130
        %v3332 = vunpack.c.l.b16 %v3131
        %v3333 = vunpack.c.h.b16 %v3131
        %v3334 = vunpack.c.l.b16 %v3132
        %v3335 = vunpack.c.h.b16 %v3132
        %v3336 = vunpack.c.l.b16 %v3133
        %v3337 = vunpack.c.h.b16 %v3133
        %v3338 = vunpack.c.l.b16 %v3134
        %v3339 = vunpack.c.h.b16 %v3134
        %v3340 = vunpack.c.l.b16 %v3135
        %v3341 = vunpack.c.h.b16 %v3135
        %v3342 = vunpack.c.l.b16 %v3136
        %v3343 = vunpack.c.h.b16 %v3136
        %v3344 = vunpack.c.l.b16 %v3137
        %v3345 = vunpack.c.h.b16 %v3137
        %v3346 = vunpack.c.l.b16 %v3138
        %v3347 = vunpack.c.h.b16 %v3138
        %v3348 = vunpack.c.l.b16 %v3139
        %v3349 = vunpack.c.h.b16 %v3139
        %v3350 = vunpack.c.l.b16 %v3140
        %v3351 = vunpack.c.h.b16 %v3140
        %v3352 = vunpack.c.l.b16 %v3141
        %v3353 = vunpack.c.h.b16 %v3141
        %v3354 = vunpack.c.l.b16 %v3142
        %v3355 = vunpack.c.h.b16 %v3142
        %v3356 = vunpack.c.l.b16 %v3143
        %v3357 = vunpack.c.h.b16 %v3143
        %v3358 = vunpack.c.l.b16 %v3144
        %v3359 = vunpack.c.h.b16 %v3144
        %v3360 = vunpack.c.l.b16 %v3145
        %v3361 = vunpack.c.h.b16 %v3145
        %v3362 = vunpack.c.l.b16 %v3146
        %v3363 = vunpack.c.h.b16 %v3146
        %v3364 = vunpack.c.l.b16 %v3147
        %v3365 = vunpack.c.h.b16 %v3147
        %v3366 = vunpack.c.l.b16 %v3148
        %v3367 = vunpack.c.h.b16 %v3148
        %v3368 = vunpack.c.l.b16 %v3149
        %v3369 = vunpack.c.h.b16 %v3149
        %v3370 = vunpack.c.l.b16 %v3150
        %v3371 = vunpack.c.h.b16 %v3150
        %v3372 = vunpack.c.l.b16 %v3151
        %v3373 = vunpack.c.h.b16 %v3151
        %v3374 = vunpack.c.l.b16 %v3152
        %v3375 = vunpack.c.h.b16 %v3152
        %v3376 = vunpack.c.l.b16 %v3153
        %v3377 = vunpack.c.h.b16 %v3153
        %v3378 = vpack.c.b16 %v3252, %v3250
        %v3379 = vpack.c.b16 %v3253, %v3251
        %v3380 = vpack.c.b16 %v3256, %v3254
        %v3381 = vpack.c.b16 %v3257, %v3255
        %v3382 = vpack.c.b16 %v3260, %v3258
        %v3383 = vpack.c.b16 %v3261, %v3259
        %v3384 = vpack.c.b16 %v3264, %v3262
        %v3385 = vpack.c.b16 %v3265, %v3263
        %v3386 = vpack.c.b16 %v3268, %v3266
        %v3387 = vpack.c.b16 %v3269, %v3267
        %v3388 = vpack.c.b16 %v3272, %v3270
        %v3389 = vpack.c.b16 %v3273, %v3271
        %v3390 = vpack.c.b16 %v3276, %v3274
        %v3391 = vpack.c.b16 %v3277, %v3275
        %v3392 = vpack.c.b16 %v3280, %v3278
        %v3393 = vpack.c.b16 %v3281, %v3279
        %v3394 = vpack.c.b16 %v3284, %v3282
        %v3395 = vpack.c.b16 %v3285, %v3283
        %v3396 = vpack.c.b16 %v3288, %v3286
        %v3397 = vpack.c.b16 %v3289, %v3287
        %v3398 = vpack.c.b16 %v3292, %v3290
        %v3399 = vpack.c.b16 %v3293, %v3291
        %v3400 = vpack.c.b16 %v3296, %v3294
        %v3401 = vpack.c.b16 %v3297, %v3295
        %v3402 = vpack.c.b16 %v3300, %v3298
        %v3403 = vpack.c.b16 %v3301, %v3299
        %v3404 = vpack.c.b16 %v3304, %v3302
        %v3405 = vpack.c.b16 %v3305, %v3303
        %v3406 = vpack.c.b16 %v3308, %v3306
        %v3407 = vpack.c.b16 %v3309, %v3307
        %v3408 = vpack.c.b16 %v3312, %v3310
        %v3409 = vpack.c.b16 %v3313, %v3311
        %v3410 = vpack.c.b16 %v3316, %v3314
        %v3411 = vpack.c.b16 %v3317, %v3315
        %v3412 = vpack.c.b16 %v3320, %v3318
        %v3413 = vpack.c.b16 %v3321, %v3319
        %v3414 = vpack.c.b16 %v3324, %v3322
        %v3415 = vpack.c.b16 %v3325, %v3323
        %v3416 = vpack.c.b16 %v3328, %v3326
        %v3417 = vpack.c.b16 %v3329, %v3327
        %v3418 = vpack.c.b16 %v3332, %v3330
        %v3419 = vpack.c.b16 %v3333, %v3331
        %v3420 = vpack.c.b16 %v3336, %v3334
        %v3421 = vpack.c.b16 %v3337, %v3335
        %v3422 = vpack.c.b16 %v3340, %v3338
        %v3423 = vpack.c.b16 %v3341, %v3339
        %v3424 = vpack.c.b16 %v3344, %v3342
        %v3425 = vpack.c.b16 %v3345, %v3343
        %v3426 = vpack.c.b16 %v3348, %v3346
        %v3427 = vpack.c.b16 %v3349, %v3347
        %v3428 = vpack.c.b16 %v3352, %v3350
        %v3429 = vpack.c.b16 %v3353, %v3351
        %v3430 = vpack.c.b16 %v3356, %v3354
        %v3431 = vpack.c.b16 %v3357, %v3355
        %v3432 = vpack.c.b16 %v3360, %v3358
        %v3433 = vpack.c.b16 %v3361, %v3359
        %v3434 = vpack.c.b16 %v3364, %v3362
        %v3435 = vpack.c.b16 %v3365, %v3363
        %v3436 = vpack.c.b16 %v3368, %v3366
        %v3437 = vpack.c.b16 %v3369, %v3367
        %v3438 = vpack.c.b16 %v3372, %v3370
        %v3439 = vpack.c.b16 %v3373, %v3371
        %v3440 = vpack.c.b16 %v3376, %v3374
        %v3441 = vpack.c.b16 %v3377, %v3375
        %3506 = vmatprep.subr.bf16.mxu0 %v3155
        %3507 = vmatpush1.bf16.msra.mxu0 %v3154
        %3508 = vmatprep.subr.bf16.mxu0 %v3157
        %3509 = vmatpush1.bf16.msra.mxu0 %v3156
        %3510 = vmatprep.subr.bf16.mxu0 %v3159
        %3511 = vmatpush1.bf16.msra.mxu0 %v3158
        %3512 = vmatprep.subr.bf16.mxu0 %v3161
        %3513 = vmatpush1.bf16.msra.mxu0 %v3160
        %3514 = vmatprep.subr.bf16.mxu0 %v3163
        %3515 = vmatpush1.bf16.msra.mxu0 %v3162
        %3516 = vmatprep.subr.bf16.mxu0 %v3165
        %3517 = vmatpush1.bf16.msra.mxu0 %v3164
        %3518 = vmatprep.subr.bf16.mxu0 %v3167
        %3519 = vmatpush1.bf16.msra.mxu0 %v3166
        %3520 = vmatprep.subr.bf16.mxu0 %v3169
        %3521 = vmatpush1.bf16.msra.mxu0 %v3168
        %3522 = vmatprep.subr.bf16.mxu0 %v3171
        %3523 = vmatpush1.bf16.msra.mxu0 %v3170
        %3524 = vmatprep.subr.bf16.mxu0 %v3173
        %3525 = vmatpush1.bf16.msra.mxu0 %v3172
        %3526 = vmatprep.subr.bf16.mxu0 %v3175
        %3527 = vmatpush1.bf16.msra.mxu0 %v3174
        %3528 = vmatprep.subr.bf16.mxu0 %v3177
        %3529 = vmatpush1.bf16.msra.mxu0 %v3176
        %3530 = vmatprep.subr.bf16.mxu0 %v3179
        %3531 = vmatpush1.bf16.msra.mxu0 %v3178
        %3532 = vmatprep.subr.bf16.mxu0 %v3181
        %3533 = vmatpush1.bf16.msra.mxu0 %v3180
        %3534 = vmatprep.subr.bf16.mxu0 %v3183
        %3535 = vmatpush1.bf16.msra.mxu0 %v3182
        %3536 = vmatprep.subr.bf16.mxu0 %v3185
        %3537 = vmatpush1.bf16.msra.mxu0 %v3184
        %3538 = vmatprep.mubr.bf16.mxu0 %v3379
        %3539 = vmatmul.mubr.bf16.gmra.mrb[0].mxu0 %v3378
        %v3540 = vpop.f32.mrb[0].mxu0
        %v3541 = vadd.f32 0.0, %v3540
        %v3542 = vpop.f32.mrb[0].mxu0
        %v3543 = vadd.f32 0.0, %v3542
        %v3544 = vpop.f32.mrb[0].mxu0
        %v3545 = vadd.f32 0.0, %v3544
        %v3546 = vpop.f32.mrb[0].mxu0
        %v3547 = vadd.f32 0.0, %v3546
        %3548 = vmatprep.mubr.bf16.mxu0 %v3381
        %3549 = vmatmul.mubr.bf16.gmra.mrb[0].mxu0 %v3380
        %v3550 = vpop.f32.mrb[0].mxu0
        %v3551 = vadd.f32 0.0, %v3550
        %v3552 = vpop.f32.mrb[0].mxu0
        %v3553 = vadd.f32 0.0, %v3552
        %v3554 = vpop.f32.mrb[0].mxu0
        %v3555 = vadd.f32 0.0, %v3554
        %v3556 = vpop.f32.mrb[0].mxu0
        %v3557 = vadd.f32 0.0, %v3556
        %3558 = vmatprep.mubr.bf16.mxu0 %v3383
        %3559 = vmatmul.mubr.bf16.gmra.mrb[0].mxu0 %v3382
        %v3560 = vpop.f32.mrb[0].mxu0
        %v3561 = vadd.f32 0.0, %v3560
        %v3562 = vpop.f32.mrb[0].mxu0
        %v3563 = vadd.f32 0.0, %v3562
        %v3564 = vpop.f32.mrb[0].mxu0
        %v3565 = vadd.f32 0.0, %v3564
        %v3566 = vpop.f32.mrb[0].mxu0
        %v3567 = vadd.f32 0.0, %v3566
        %3568 = vmatprep.mubr.bf16.mxu0 %v3385
        %3569 = vmatmul.mubr.bf16.gmra.mrb[0].mxu0 %v3384
        %v3570 = vpop.f32.mrb[0].mxu0
        %v3571 = vadd.f32 0.0, %v3570
        %v3572 = vpop.f32.mrb[0].mxu0
        %v3573 = vadd.f32 0.0, %v3572
        %v3574 = vpop.f32.mrb[0].mxu0
        %v3575 = vadd.f32 0.0, %v3574
        %v3576 = vpop.f32.mrb[0].mxu0
        %v3577 = vadd.f32 0.0, %v3576
        %3578 = vmatprep.mubr.bf16.mxu0 %v3387
        %3579 = vmatmul.mubr.bf16.gmra.mrb[0].mxu0 %v3386
        %v3580 = vpop.f32.mrb[0].mxu0
        %v3581 = vadd.f32 0.0, %v3580
        %v3582 = vpop.f32.mrb[0].mxu0
        %v3583 = vadd.f32 0.0, %v3582
        %v3584 = vpop.f32.mrb[0].mxu0
        %v3585 = vadd.f32 0.0, %v3584
        %v3586 = vpop.f32.mrb[0].mxu0
        %v3587 = vadd.f32 0.0, %v3586
        %3588 = vmatprep.mubr.bf16.mxu0 %v3389
        %3589 = vmatmul.mubr.bf16.gmra.mrb[0].mxu0 %v3388
        %v3590 = vpop.f32.mrb[0].mxu0
        %v3591 = vadd.f32 0.0, %v3590
        %v3592 = vpop.f32.mrb[0].mxu0
        %v3593 = vadd.f32 0.0, %v3592
        %v3594 = vpop.f32.mrb[0].mxu0
        %v3595 = vadd.f32 0.0, %v3594
        %v3596 = vpop.f32.mrb[0].mxu0
        %v3597 = vadd.f32 0.0, %v3596
        %3598 = vmatprep.mubr.bf16.mxu0 %v3391
        %3599 = vmatmul.mubr.bf16.gmra.mrb[0].mxu0 %v3390
        %v3600 = vpop.f32.mrb[0].mxu0
        %v3601 = vadd.f32 0.0, %v3600
        %v3602 = vpop.f32.mrb[0].mxu0
        %v3603 = vadd.f32 0.0, %v3602
        %v3604 = vpop.f32.mrb[0].mxu0
        %v3605 = vadd.f32 0.0, %v3604
        %v3606 = vpop.f32.mrb[0].mxu0
        %v3607 = vadd.f32 0.0, %v3606
        %3608 = vmatprep.mubr.bf16.mxu0 %v3393
        %3609 = vmatmul.mubr.bf16.gmra.mrb[0].mxu0 %v3392
        %v3610 = vpop.f32.mrb[0].mxu0
        %v3611 = vadd.f32 0.0, %v3610
        %v3612 = vpop.f32.mrb[0].mxu0
        %v3613 = vadd.f32 0.0, %v3612
        %v3614 = vpop.f32.mrb[0].mxu0
        %v3615 = vadd.f32 0.0, %v3614
        %v3616 = vpop.f32.mrb[0].mxu0
        %v3617 = vadd.f32 0.0, %v3616
        %3618 = vmatprep.mubr.bf16.mxu0 %v3395
        %3619 = vmatmul.mubr.bf16.gmra.mrb[0].mxu0 %v3394
        %v3620 = vpop.f32.mrb[0].mxu0
        %v3621 = vadd.f32 0.0, %v3620
        %v3622 = vpop.f32.mrb[0].mxu0
        %v3623 = vadd.f32 0.0, %v3622
        %v3624 = vpop.f32.mrb[0].mxu0
        %v3625 = vadd.f32 0.0, %v3624
        %v3626 = vpop.f32.mrb[0].mxu0
        %v3627 = vadd.f32 0.0, %v3626
        %3628 = vmatprep.mubr.bf16.mxu0 %v3397
        %3629 = vmatmul.mubr.bf16.gmra.mrb[0].mxu0 %v3396
        %v3630 = vpop.f32.mrb[0].mxu0
        %v3631 = vadd.f32 0.0, %v3630
        %v3632 = vpop.f32.mrb[0].mxu0
        %v3633 = vadd.f32 0.0, %v3632
        %v3634 = vpop.f32.mrb[0].mxu0
        %v3635 = vadd.f32 0.0, %v3634
        %v3636 = vpop.f32.mrb[0].mxu0
        %v3637 = vadd.f32 0.0, %v3636
        %3638 = vmatprep.mubr.bf16.mxu0 %v3399
        %3639 = vmatmul.mubr.bf16.gmra.mrb[0].mxu0 %v3398
        %v3640 = vpop.f32.mrb[0].mxu0
        %v3641 = vadd.f32 0.0, %v3640
        %v3642 = vpop.f32.mrb[0].mxu0
        %v3643 = vadd.f32 0.0, %v3642
        %v3644 = vpop.f32.mrb[0].mxu0
        %v3645 = vadd.f32 0.0, %v3644
        %v3646 = vpop.f32.mrb[0].mxu0
        %v3647 = vadd.f32 0.0, %v3646
        %3648 = vmatprep.mubr.bf16.mxu0 %v3401
        %3649 = vmatmul.mubr.bf16.gmra.mrb[0].mxu0 %v3400
        %v3650 = vpop.f32.mrb[0].mxu0
        %v3651 = vadd.f32 0.0, %v3650
        %v3652 = vpop.f32.mrb[0].mxu0
        %v3653 = vadd.f32 0.0, %v3652
        %v3654 = vpop.f32.mrb[0].mxu0
        %v3655 = vadd.f32 0.0, %v3654
        %v3656 = vpop.f32.mrb[0].mxu0
        %v3657 = vadd.f32 0.0, %v3656
        %3658 = vmatprep.mubr.bf16.mxu0 %v3403
        %3659 = vmatmul.mubr.bf16.gmra.mrb[0].mxu0 %v3402
        %v3660 = vpop.f32.mrb[0].mxu0
        %v3661 = vadd.f32 0.0, %v3660
        %v3662 = vpop.f32.mrb[0].mxu0
        %v3663 = vadd.f32 0.0, %v3662
        %v3664 = vpop.f32.mrb[0].mxu0
        %v3665 = vadd.f32 0.0, %v3664
        %v3666 = vpop.f32.mrb[0].mxu0
        %v3667 = vadd.f32 0.0, %v3666
        %3668 = vmatprep.mubr.bf16.mxu0 %v3405
        %3669 = vmatmul.mubr.bf16.gmra.mrb[0].mxu0 %v3404
        %v3670 = vpop.f32.mrb[0].mxu0
        %v3671 = vadd.f32 0.0, %v3670
        %v3672 = vpop.f32.mrb[0].mxu0
        %v3673 = vadd.f32 0.0, %v3672
        %v3674 = vpop.f32.mrb[0].mxu0
        %v3675 = vadd.f32 0.0, %v3674
        %v3676 = vpop.f32.mrb[0].mxu0
        %v3677 = vadd.f32 0.0, %v3676
        %3678 = vmatprep.mubr.bf16.mxu0 %v3407
        %3679 = vmatmul.mubr.bf16.gmra.mrb[0].mxu0 %v3406
        %v3680 = vpop.f32.mrb[0].mxu0
        %v3681 = vadd.f32 0.0, %v3680
        %v3682 = vpop.f32.mrb[0].mxu0
        %v3683 = vadd.f32 0.0, %v3682
        %v3684 = vpop.f32.mrb[0].mxu0
        %v3685 = vadd.f32 0.0, %v3684
        %v3686 = vpop.f32.mrb[0].mxu0
        %v3687 = vadd.f32 0.0, %v3686
        %3688 = vmatprep.mubr.bf16.mxu0 %v3409
        %3689 = vmatmul.mubr.bf16.gmra.mrb[0].mxu0 %v3408
        %v3690 = vpop.f32.mrb[0].mxu0
        %v3691 = vadd.f32 0.0, %v3690
        %v3692 = vpop.f32.mrb[0].mxu0
        %v3693 = vadd.f32 0.0, %v3692
        %v3694 = vpop.f32.mrb[0].mxu0
        %v3695 = vadd.f32 0.0, %v3694
        %v3696 = vpop.f32.mrb[0].mxu0
        %v3697 = vadd.f32 0.0, %v3696
        %3698 = vmatprep.mubr.bf16.mxu0 %v3411
        %3699 = vmatmul.mubr.bf16.gmra.mrb[0].mxu0 %v3410
        %v3700 = vpop.f32.mrb[0].mxu0
        %v3701 = vadd.f32 0.0, %v3700
        %v3702 = vpop.f32.mrb[0].mxu0
        %v3703 = vadd.f32 0.0, %v3702
        %v3704 = vpop.f32.mrb[0].mxu0
        %v3705 = vadd.f32 0.0, %v3704
        %v3706 = vpop.f32.mrb[0].mxu0
        %v3707 = vadd.f32 0.0, %v3706
        %3708 = vmatprep.mubr.bf16.mxu0 %v3413
        %3709 = vmatmul.mubr.bf16.gmra.mrb[0].mxu0 %v3412
        %v3710 = vpop.f32.mrb[0].mxu0
        %v3711 = vadd.f32 0.0, %v3710
        %v3712 = vpop.f32.mrb[0].mxu0
        %v3713 = vadd.f32 0.0, %v3712
        %v3714 = vpop.f32.mrb[0].mxu0
        %v3715 = vadd.f32 0.0, %v3714
        %v3716 = vpop.f32.mrb[0].mxu0
        %v3717 = vadd.f32 0.0, %v3716
        %3718 = vmatprep.mubr.bf16.mxu0 %v3415
        %3719 = vmatmul.mubr.bf16.gmra.mrb[0].mxu0 %v3414
        %v3720 = vpop.f32.mrb[0].mxu0
        %v3721 = vadd.f32 0.0, %v3720
        %v3722 = vpop.f32.mrb[0].mxu0
        %v3723 = vadd.f32 0.0, %v3722
        %v3724 = vpop.f32.mrb[0].mxu0
        %v3725 = vadd.f32 0.0, %v3724
        %v3726 = vpop.f32.mrb[0].mxu0
        %v3727 = vadd.f32 0.0, %v3726
        %3728 = vmatprep.mubr.bf16.mxu0 %v3417
        %3729 = vmatmul.mubr.bf16.gmra.mrb[0].mxu0 %v3416
        %v3730 = vpop.f32.mrb[0].mxu0
        %v3731 = vadd.f32 0.0, %v3730
        %v3732 = vpop.f32.mrb[0].mxu0
        %v3733 = vadd.f32 0.0, %v3732
        %v3734 = vpop.f32.mrb[0].mxu0
        %v3735 = vadd.f32 0.0, %v3734
        %v3736 = vpop.f32.mrb[0].mxu0
        %v3737 = vadd.f32 0.0, %v3736
        %3738 = vmatprep.mubr.bf16.mxu0 %v3419
        %3739 = vmatmul.mubr.bf16.gmra.mrb[0].mxu0 %v3418
        %v3740 = vpop.f32.mrb[0].mxu0
        %v3741 = vadd.f32 0.0, %v3740
        %v3742 = vpop.f32.mrb[0].mxu0
        %v3743 = vadd.f32 0.0, %v3742
        %v3744 = vpop.f32.mrb[0].mxu0
        %v3745 = vadd.f32 0.0, %v3744
        %v3746 = vpop.f32.mrb[0].mxu0
        %v3747 = vadd.f32 0.0, %v3746
        %3748 = vmatprep.mubr.bf16.mxu0 %v3421
        %3749 = vmatmul.mubr.bf16.gmra.mrb[0].mxu0 %v3420
        %v3750 = vpop.f32.mrb[0].mxu0
        %v3751 = vadd.f32 0.0, %v3750
        %v3752 = vpop.f32.mrb[0].mxu0
        %v3753 = vadd.f32 0.0, %v3752
        %v3754 = vpop.f32.mrb[0].mxu0
        %v3755 = vadd.f32 0.0, %v3754
        %v3756 = vpop.f32.mrb[0].mxu0
        %v3757 = vadd.f32 0.0, %v3756
        %3758 = vmatprep.mubr.bf16.mxu0 %v3423
        %3759 = vmatmul.mubr.bf16.gmra.mrb[0].mxu0 %v3422
        %v3760 = vpop.f32.mrb[0].mxu0
        %v3761 = vadd.f32 0.0, %v3760
        %v3762 = vpop.f32.mrb[0].mxu0
        %v3763 = vadd.f32 0.0, %v3762
        %v3764 = vpop.f32.mrb[0].mxu0
        %v3765 = vadd.f32 0.0, %v3764
        %v3766 = vpop.f32.mrb[0].mxu0
        %v3767 = vadd.f32 0.0, %v3766
        %3768 = vmatprep.mubr.bf16.mxu0 %v3425
        %3769 = vmatmul.mubr.bf16.gmra.mrb[0].mxu0 %v3424
        %v3770 = vpop.f32.mrb[0].mxu0
        %v3771 = vadd.f32 0.0, %v3770
        %v3772 = vpop.f32.mrb[0].mxu0
        %v3773 = vadd.f32 0.0, %v3772
        %v3774 = vpop.f32.mrb[0].mxu0
        %v3775 = vadd.f32 0.0, %v3774
        %v3776 = vpop.f32.mrb[0].mxu0
        %v3777 = vadd.f32 0.0, %v3776
        %3778 = vmatprep.mubr.bf16.mxu0 %v3427
        %3779 = vmatmul.mubr.bf16.gmra.mrb[0].mxu0 %v3426
        %v3780 = vpop.f32.mrb[0].mxu0
        %v3781 = vadd.f32 0.0, %v3780
        %v3782 = vpop.f32.mrb[0].mxu0
        %v3783 = vadd.f32 0.0, %v3782
        %v3784 = vpop.f32.mrb[0].mxu0
        %v3785 = vadd.f32 0.0, %v3784
        %v3786 = vpop.f32.mrb[0].mxu0
        %v3787 = vadd.f32 0.0, %v3786
        %3788 = vmatprep.mubr.bf16.mxu0 %v3429
        %3789 = vmatmul.mubr.bf16.gmra.mrb[0].mxu0 %v3428
        %v3790 = vpop.f32.mrb[0].mxu0
        %v3791 = vadd.f32 0.0, %v3790
        %v3792 = vpop.f32.mrb[0].mxu0
        %v3793 = vadd.f32 0.0, %v3792
        %v3794 = vpop.f32.mrb[0].mxu0
        %v3795 = vadd.f32 0.0, %v3794
        %v3796 = vpop.f32.mrb[0].mxu0
        %v3797 = vadd.f32 0.0, %v3796
        %3798 = vmatprep.mubr.bf16.mxu0 %v3431
        %3799 = vmatmul.mubr.bf16.gmra.mrb[0].mxu0 %v3430
        %v3800 = vpop.f32.mrb[0].mxu0
        %v3801 = vadd.f32 0.0, %v3800
        %v3802 = vpop.f32.mrb[0].mxu0
        %v3803 = vadd.f32 0.0, %v3802
        %v3804 = vpop.f32.mrb[0].mxu0
        %v3805 = vadd.f32 0.0, %v3804
        %v3806 = vpop.f32.mrb[0].mxu0
        %v3807 = vadd.f32 0.0, %v3806
        %3808 = vmatprep.mubr.bf16.mxu0 %v3433
        %3809 = vmatmul.mubr.bf16.gmra.mrb[0].mxu0 %v3432
        %v3810 = vpop.f32.mrb[0].mxu0
        %v3811 = vadd.f32 0.0, %v3810
        %v3812 = vpop.f32.mrb[0].mxu0
        %v3813 = vadd.f32 0.0, %v3812
        %v3814 = vpop.f32.mrb[0].mxu0
        %v3815 = vadd.f32 0.0, %v3814
        %v3816 = vpop.f32.mrb[0].mxu0
        %v3817 = vadd.f32 0.0, %v3816
        %3818 = vmatprep.mubr.bf16.mxu0 %v3435
        %3819 = vmatmul.mubr.bf16.gmra.mrb[0].mxu0 %v3434
        %v3820 = vpop.f32.mrb[0].mxu0
        %v3821 = vadd.f32 0.0, %v3820
        %v3822 = vpop.f32.mrb[0].mxu0
        %v3823 = vadd.f32 0.0, %v3822
        %v3824 = vpop.f32.mrb[0].mxu0
        %v3825 = vadd.f32 0.0, %v3824
        %v3826 = vpop.f32.mrb[0].mxu0
        %v3827 = vadd.f32 0.0, %v3826
        %3828 = vmatprep.mubr.bf16.mxu0 %v3437
        %3829 = vmatmul.mubr.bf16.gmra.mrb[0].mxu0 %v3436
        %v3830 = vpop.f32.mrb[0].mxu0
        %v3831 = vadd.f32 0.0, %v3830
        %v3832 = vpop.f32.mrb[0].mxu0
        %v3833 = vadd.f32 0.0, %v3832
        %v3834 = vpop.f32.mrb[0].mxu0
        %v3835 = vadd.f32 0.0, %v3834
        %v3836 = vpop.f32.mrb[0].mxu0
        %v3837 = vadd.f32 0.0, %v3836
        %3838 = vmatprep.mubr.bf16.mxu0 %v3439
        %3839 = vmatmul.mubr.bf16.gmra.mrb[0].mxu0 %v3438
        %v3840 = vpop.f32.mrb[0].mxu0
        %v3841 = vadd.f32 0.0, %v3840
        %v3842 = vpop.f32.mrb[0].mxu0
        %v3843 = vadd.f32 0.0, %v3842
        %v3844 = vpop.f32.mrb[0].mxu0
        %v3845 = vadd.f32 0.0, %v3844
        %v3846 = vpop.f32.mrb[0].mxu0
        %v3847 = vadd.f32 0.0, %v3846
        %3848 = vmatprep.mubr.bf16.mxu0 %v3441
        %3849 = vmatmul.mubr.bf16.gmra.mrb[0].mxu0 %v3440
        %v3850 = vpop.f32.mrb[0].mxu0
        %v3851 = vadd.f32 0.0, %v3850
        %v3852 = vpop.f32.mrb[0].mxu0
        %v3853 = vadd.f32 0.0, %v3852
        %v3854 = vpop.f32.mrb[0].mxu0
        %v3855 = vadd.f32 0.0, %v3854
        %v3856 = vpop.f32.mrb[0].mxu0
        %v3857 = vadd.f32 0.0, %v3856
        %3858 = vdwg.mxu0
        %p3859 = scmp.eq.s32.totalorder %s22, 0
        // Predicated region
        $region83: #{module_forward.1} parent=77 // pred_check
          %p3860 = pneg %p3859
        $region84: #{module_forward.1} parent=77 // pred_check_branch
          %3862 = sbr.rel (%p3860) target = $region86
        $region85: #{module_forward.1} parent=77 // pred_region
          %3863 = vst [vmem:[%s653] sm:$0xff] 0.0
          %3864 = vst.msk [vmem:[%s653 + $0x8] sm:$0xff] %vm1809, 0.0
          %3865 = vst [vmem:[%s653 + $0x10] sm:$0xff] 0.0
          %3866 = vst.msk [vmem:[%s653 + $0x18] sm:$0xff] %vm1809, 0.0
          %3867 = vst [vmem:[%s653 + $0x20] sm:$0xff] 0.0
          %3868 = vst.msk [vmem:[%s653 + $0x28] sm:$0xff] %vm1809, 0.0
          %3869 = vst [vmem:[%s653 + $0x30] sm:$0xff] 0.0
          %3870 = vst.msk [vmem:[%s653 + $0x38] sm:$0xff] %vm1809, 0.0
          %3871 = vst [vmem:[%s653 + $0x40] sm:$0xff] 0.0
          %3872 = vst.msk [vmem:[%s653 + $0x48] sm:$0xff] %vm1809, 0.0
          %3873 = vst [vmem:[%s653 + $0x50] sm:$0xff] 0.0
          %3874 = vst.msk [vmem:[%s653 + $0x58] sm:$0xff] %vm1809, 0.0
          %3875 = vst [vmem:[%s653 + $0x60] sm:$0xff] 0.0
          %3876 = vst.msk [vmem:[%s653 + $0x68] sm:$0xff] %vm1809, 0.0
          %3877 = vst [vmem:[%s653 + $0x70] sm:$0xff] 0.0
          %3878 = vst.msk [vmem:[%s653 + $0x78] sm:$0xff] %vm1809, 0.0
          %3879 = vst [vmem:[%s653 + $0x80] sm:$0xff] 0.0
          %3880 = vst.msk [vmem:[%s653 + $0x88] sm:$0xff] %vm1809, 0.0
          %3881 = vst [vmem:[%s653 + $0x90] sm:$0xff] 0.0
          %3882 = vst.msk [vmem:[%s653 + $0x98] sm:$0xff] %vm1809, 0.0
          %3883 = vst [vmem:[%s653 + $0xa0] sm:$0xff] 0.0
          %3884 = vst.msk [vmem:[%s653 + $0xa8] sm:$0xff] %vm1809, 0.0
          %3885 = vst [vmem:[%s653 + $0xb0] sm:$0xff] 0.0
          %3886 = vst.msk [vmem:[%s653 + $0xb8] sm:$0xff] %vm1809, 0.0
          %3887 = vst [vmem:[%s653 + $0xc0] sm:$0xff] 0.0
          %3888 = vst.msk [vmem:[%s653 + $0xc8] sm:$0xff] %vm1809, 0.0
          %3889 = vst [vmem:[%s653 + $0xd0] sm:$0xff] 0.0
          %3890 = vst.msk [vmem:[%s653 + $0xd8] sm:$0xff] %vm1809, 0.0
          %3891 = vst [vmem:[%s653 + $0xe0] sm:$0xff] 0.0
          %3892 = vst.msk [vmem:[%s653 + $0xe8] sm:$0xff] %vm1809, 0.0
          %3893 = vst [vmem:[%s653 + $0xf0] sm:$0xff] 0.0
          %3894 = vst.msk [vmem:[%s653 + $0xf8] sm:$0xff] %vm1809, 0.0
          %3895 = vst [vmem:[%s653 + $0x100] sm:$0xff] 0.0
          %3896 = vst.msk [vmem:[%s653 + $0x108] sm:$0xff] %vm1809, 0.0
          %3897 = vst [vmem:[%s653 + $0x110] sm:$0xff] 0.0
          %3898 = vst.msk [vmem:[%s653 + $0x118] sm:$0xff] %vm1809, 0.0
          %3899 = vst [vmem:[%s653 + $0x120] sm:$0xff] 0.0
          %3900 = vst.msk [vmem:[%s653 + $0x128] sm:$0xff] %vm1809, 0.0
          %3901 = vst [vmem:[%s653 + $0x130] sm:$0xff] 0.0
          %3902 = vst.msk [vmem:[%s653 + $0x138] sm:$0xff] %vm1809, 0.0
          %3903 = vst [vmem:[%s653 + $0x140] sm:$0xff] 0.0
          %3904 = vst.msk [vmem:[%s653 + $0x148] sm:$0xff] %vm1809, 0.0
          %3905 = vst [vmem:[%s653 + $0x150] sm:$0xff] 0.0
          %3906 = vst.msk [vmem:[%s653 + $0x158] sm:$0xff] %vm1809, 0.0
          %3907 = vst [vmem:[%s653 + $0x160] sm:$0xff] 0.0
          %3908 = vst.msk [vmem:[%s653 + $0x168] sm:$0xff] %vm1809, 0.0
          %3909 = vst [vmem:[%s653 + $0x170] sm:$0xff] 0.0
          %3910 = vst.msk [vmem:[%s653 + $0x178] sm:$0xff] %vm1809, 0.0
          %3911 = vst [vmem:[%s653 + $0x180] sm:$0xff] 0.0
          %3912 = vst.msk [vmem:[%s653 + $0x188] sm:$0xff] %vm1809, 0.0
          %3913 = vst [vmem:[%s653 + $0x190] sm:$0xff] 0.0
          %3914 = vst.msk [vmem:[%s653 + $0x198] sm:$0xff] %vm1809, 0.0
          %3915 = vst [vmem:[%s653 + $0x1a0] sm:$0xff] 0.0
          %3916 = vst.msk [vmem:[%s653 + $0x1a8] sm:$0xff] %vm1809, 0.0
          %3917 = vst [vmem:[%s653 + $0x1b0] sm:$0xff] 0.0
          %3918 = vst.msk [vmem:[%s653 + $0x1b8] sm:$0xff] %vm1809, 0.0
          %3919 = vst [vmem:[%s653 + $0x1c0] sm:$0xff] 0.0
          %3920 = vst.msk [vmem:[%s653 + $0x1c8] sm:$0xff] %vm1809, 0.0
          %3921 = vst [vmem:[%s653 + $0x1d0] sm:$0xff] 0.0
          %3922 = vst.msk [vmem:[%s653 + $0x1d8] sm:$0xff] %vm1809, 0.0
          %3923 = vst [vmem:[%s653 + $0x1e0] sm:$0xff] 0.0
          %3924 = vst.msk [vmem:[%s653 + $0x1e8] sm:$0xff] %vm1809, 0.0
          %3925 = vst [vmem:[%s653 + $0x1f0] sm:$0xff] 0.0
          %3926 = vst.msk [vmem:[%s653 + $0x1f8] sm:$0xff] %vm1809, 0.0
          %3927 = vst [vmem:[%s653 + $0x200] sm:$0xff] 0.0
          %3928 = vst.msk [vmem:[%s653 + $0x208] sm:$0xff] %vm1809, 0.0
          %3929 = vst [vmem:[%s653 + $0x210] sm:$0xff] 0.0
          %3930 = vst.msk [vmem:[%s653 + $0x218] sm:$0xff] %vm1809, 0.0
          %3931 = vst [vmem:[%s653 + $0x220] sm:$0xff] 0.0
          %3932 = vst.msk [vmem:[%s653 + $0x228] sm:$0xff] %vm1809, 0.0
          %3933 = vst [vmem:[%s653 + $0x230] sm:$0xff] 0.0
          %3934 = vst.msk [vmem:[%s653 + $0x238] sm:$0xff] %vm1809, 0.0
          %3935 = vst [vmem:[%s653 + $0x240] sm:$0xff] 0.0
          %3936 = vst.msk [vmem:[%s653 + $0x248] sm:$0xff] %vm1809, 0.0
          %3937 = vst [vmem:[%s653 + $0x250] sm:$0xff] 0.0
          %3938 = vst.msk [vmem:[%s653 + $0x258] sm:$0xff] %vm1809, 0.0
          %3939 = vst [vmem:[%s653 + $0x260] sm:$0xff] 0.0
          %3940 = vst.msk [vmem:[%s653 + $0x268] sm:$0xff] %vm1809, 0.0
          %3941 = vst [vmem:[%s653 + $0x270] sm:$0xff] 0.0
          %3942 = vst.msk [vmem:[%s653 + $0x278] sm:$0xff] %vm1809, 0.0
          %3943 = vst [vmem:[%s653 + $0x280] sm:$0xff] 0.0
          %3944 = vst.msk [vmem:[%s653 + $0x288] sm:$0xff] %vm1809, 0.0
          %3945 = vst [vmem:[%s653 + $0x290] sm:$0xff] 0.0
          %3946 = vst.msk [vmem:[%s653 + $0x298] sm:$0xff] %vm1809, 0.0
          %3947 = vst [vmem:[%s653 + $0x2a0] sm:$0xff] 0.0
          %3948 = vst.msk [vmem:[%s653 + $0x2a8] sm:$0xff] %vm1809, 0.0
          %3949 = vst [vmem:[%s653 + $0x2b0] sm:$0xff] 0.0
          %3950 = vst.msk [vmem:[%s653 + $0x2b8] sm:$0xff] %vm1809, 0.0
          %3951 = vst [vmem:[%s653 + $0x2c0] sm:$0xff] 0.0
          %3952 = vst.msk [vmem:[%s653 + $0x2c8] sm:$0xff] %vm1809, 0.0
          %3953 = vst [vmem:[%s653 + $0x2d0] sm:$0xff] 0.0
          %3954 = vst.msk [vmem:[%s653 + $0x2d8] sm:$0xff] %vm1809, 0.0
          %3955 = vst [vmem:[%s653 + $0x2e0] sm:$0xff] 0.0
          %3956 = vst.msk [vmem:[%s653 + $0x2e8] sm:$0xff] %vm1809, 0.0
          %3957 = vst [vmem:[%s653 + $0x2f0] sm:$0xff] 0.0
          %3958 = vst.msk [vmem:[%s653 + $0x2f8] sm:$0xff] %vm1809, 0.0
          %3959 = vst [vmem:[%s653 + $0x300] sm:$0xff] 0.0
          %3960 = vst.msk [vmem:[%s653 + $0x308] sm:$0xff] %vm1809, 0.0
          %3961 = vst [vmem:[%s653 + $0x310] sm:$0xff] 0.0
          %3962 = vst.msk [vmem:[%s653 + $0x318] sm:$0xff] %vm1809, 0.0
          %3963 = vst [vmem:[%s653 + $0x320] sm:$0xff] 0.0
          %3964 = vst.msk [vmem:[%s653 + $0x328] sm:$0xff] %vm1809, 0.0
          %3965 = vst [vmem:[%s653 + $0x330] sm:$0xff] 0.0
          %3966 = vst.msk [vmem:[%s653 + $0x338] sm:$0xff] %vm1809, 0.0
          %3967 = vst [vmem:[%s653 + $0x340] sm:$0xff] 0.0
          %3968 = vst.msk [vmem:[%s653 + $0x348] sm:$0xff] %vm1809, 0.0
          %3969 = vst [vmem:[%s653 + $0x350] sm:$0xff] 0.0
          %3970 = vst.msk [vmem:[%s653 + $0x358] sm:$0xff] %vm1809, 0.0
          %3971 = vst [vmem:[%s653 + $0x360] sm:$0xff] 0.0
          %3972 = vst.msk [vmem:[%s653 + $0x368] sm:$0xff] %vm1809, 0.0
          %3973 = vst [vmem:[%s653 + $0x370] sm:$0xff] 0.0
          %3974 = vst.msk [vmem:[%s653 + $0x378] sm:$0xff] %vm1809, 0.0
          %3975 = vst [vmem:[%s653 + $0x380] sm:$0xff] 0.0
          %3976 = vst.msk [vmem:[%s653 + $0x388] sm:$0xff] %vm1809, 0.0
          %3977 = vst [vmem:[%s653 + $0x390] sm:$0xff] 0.0
          %3978 = vst.msk [vmem:[%s653 + $0x398] sm:$0xff] %vm1809, 0.0
          %3979 = vst [vmem:[%s653 + $0x3a0] sm:$0xff] 0.0
          %3980 = vst.msk [vmem:[%s653 + $0x3a8] sm:$0xff] %vm1809, 0.0
          %3981 = vst [vmem:[%s653 + $0x3b0] sm:$0xff] 0.0
          %3982 = vst.msk [vmem:[%s653 + $0x3b8] sm:$0xff] %vm1809, 0.0
          %3983 = vst [vmem:[%s653 + $0x3c0] sm:$0xff] 0.0
          %3984 = vst.msk [vmem:[%s653 + $0x3c8] sm:$0xff] %vm1809, 0.0
          %3985 = vst [vmem:[%s653 + $0x3d0] sm:$0xff] 0.0
          %3986 = vst.msk [vmem:[%s653 + $0x3d8] sm:$0xff] %vm1809, 0.0
          %3987 = vst [vmem:[%s653 + $0x3e0] sm:$0xff] 0.0
          %3988 = vst.msk [vmem:[%s653 + $0x3e8] sm:$0xff] %vm1809, 0.0
          %3989 = vst [vmem:[%s653 + $0x3f0] sm:$0xff] 0.0
          %3990 = vst.msk [vmem:[%s653 + $0x3f8] sm:$0xff] %vm1809, 0.0
        $region86: #{module_forward.1} parent=77 // pred_fallthru
          _
        %v3991 = vld [vmem:[%s653] sm:$0xff]
        %v3992 = vld [vmem:[%s653 + $0x8] sm:$0xff]
        %v3993 = vld [vmem:[%s653 + $0x10] sm:$0xff]
        %v3994 = vld [vmem:[%s653 + $0x18] sm:$0xff]
        %v3995 = vld [vmem:[%s653 + $0x20] sm:$0xff]
        %v3996 = vld [vmem:[%s653 + $0x28] sm:$0xff]
        %v3997 = vld [vmem:[%s653 + $0x30] sm:$0xff]
        %v3998 = vld [vmem:[%s653 + $0x38] sm:$0xff]
        %v3999 = vld [vmem:[%s653 + $0x40] sm:$0xff]
        %v4000 = vld [vmem:[%s653 + $0x48] sm:$0xff]
        %v4001 = vld [vmem:[%s653 + $0x50] sm:$0xff]
        %v4002 = vld [vmem:[%s653 + $0x58] sm:$0xff]
        %v4003 = vld [vmem:[%s653 + $0x60] sm:$0xff]
        %v4004 = vld [vmem:[%s653 + $0x68] sm:$0xff]
        %v4005 = vld [vmem:[%s653 + $0x70] sm:$0xff]
        %v4006 = vld [vmem:[%s653 + $0x78] sm:$0xff]
        %v4007 = vld [vmem:[%s653 + $0x80] sm:$0xff]
        %v4008 = vld [vmem:[%s653 + $0x88] sm:$0xff]
        %v4009 = vld [vmem:[%s653 + $0x90] sm:$0xff]
        %v4010 = vld [vmem:[%s653 + $0x98] sm:$0xff]
        %v4011 = vld [vmem:[%s653 + $0xa0] sm:$0xff]
        %v4012 = vld [vmem:[%s653 + $0xa8] sm:$0xff]
        %v4013 = vld [vmem:[%s653 + $0xb0] sm:$0xff]
        %v4014 = vld [vmem:[%s653 + $0xb8] sm:$0xff]
        %v4015 = vld [vmem:[%s653 + $0xc0] sm:$0xff]
        %v4016 = vld [vmem:[%s653 + $0xc8] sm:$0xff]
        %v4017 = vld [vmem:[%s653 + $0xd0] sm:$0xff]
        %v4018 = vld [vmem:[%s653 + $0xd8] sm:$0xff]
        %v4019 = vld [vmem:[%s653 + $0xe0] sm:$0xff]
        %v4020 = vld [vmem:[%s653 + $0xe8] sm:$0xff]
        %v4021 = vld [vmem:[%s653 + $0xf0] sm:$0xff]
        %v4022 = vld [vmem:[%s653 + $0xf8] sm:$0xff]
        %v4023 = vld [vmem:[%s653 + $0x100] sm:$0xff]
        %v4024 = vld [vmem:[%s653 + $0x108] sm:$0xff]
        %v4025 = vld [vmem:[%s653 + $0x110] sm:$0xff]
        %v4026 = vld [vmem:[%s653 + $0x118] sm:$0xff]
        %v4027 = vld [vmem:[%s653 + $0x120] sm:$0xff]
        %v4028 = vld [vmem:[%s653 + $0x128] sm:$0xff]
        %v4029 = vld [vmem:[%s653 + $0x130] sm:$0xff]
        %v4030 = vld [vmem:[%s653 + $0x138] sm:$0xff]
        %v4031 = vld [vmem:[%s653 + $0x140] sm:$0xff]
        %v4032 = vld [vmem:[%s653 + $0x148] sm:$0xff]
        %v4033 = vld [vmem:[%s653 + $0x150] sm:$0xff]
        %v4034 = vld [vmem:[%s653 + $0x158] sm:$0xff]
        %v4035 = vld [vmem:[%s653 + $0x160] sm:$0xff]
        %v4036 = vld [vmem:[%s653 + $0x168] sm:$0xff]
        %v4037 = vld [vmem:[%s653 + $0x170] sm:$0xff]
        %v4038 = vld [vmem:[%s653 + $0x178] sm:$0xff]
        %v4039 = vld [vmem:[%s653 + $0x180] sm:$0xff]
        %v4040 = vld [vmem:[%s653 + $0x188] sm:$0xff]
        %v4041 = vld [vmem:[%s653 + $0x190] sm:$0xff]
        %v4042 = vld [vmem:[%s653 + $0x198] sm:$0xff]
        %v4043 = vld [vmem:[%s653 + $0x1a0] sm:$0xff]
        %v4044 = vld [vmem:[%s653 + $0x1a8] sm:$0xff]
        %v4045 = vld [vmem:[%s653 + $0x1b0] sm:$0xff]
        %v4046 = vld [vmem:[%s653 + $0x1b8] sm:$0xff]
        %v4047 = vld [vmem:[%s653 + $0x1c0] sm:$0xff]
        %v4048 = vld [vmem:[%s653 + $0x1c8] sm:$0xff]
        %v4049 = vld [vmem:[%s653 + $0x1d0] sm:$0xff]
        %v4050 = vld [vmem:[%s653 + $0x1d8] sm:$0xff]
        %v4051 = vld [vmem:[%s653 + $0x1e0] sm:$0xff]
        %v4052 = vld [vmem:[%s653 + $0x1e8] sm:$0xff]
        %v4053 = vld [vmem:[%s653 + $0x1f0] sm:$0xff]
        %v4054 = vld [vmem:[%s653 + $0x1f8] sm:$0xff]
        %v4055 = vld [vmem:[%s653 + $0x200] sm:$0xff]
        %v4056 = vld [vmem:[%s653 + $0x208] sm:$0xff]
        %v4057 = vld [vmem:[%s653 + $0x210] sm:$0xff]
        %v4058 = vld [vmem:[%s653 + $0x218] sm:$0xff]
        %v4059 = vld [vmem:[%s653 + $0x220] sm:$0xff]
        %v4060 = vld [vmem:[%s653 + $0x228] sm:$0xff]
        %v4061 = vld [vmem:[%s653 + $0x230] sm:$0xff]
        %v4062 = vld [vmem:[%s653 + $0x238] sm:$0xff]
        %v4063 = vld [vmem:[%s653 + $0x240] sm:$0xff]
        %v4064 = vld [vmem:[%s653 + $0x248] sm:$0xff]
        %v4065 = vld [vmem:[%s653 + $0x250] sm:$0xff]
        %v4066 = vld [vmem:[%s653 + $0x258] sm:$0xff]
        %v4067 = vld [vmem:[%s653 + $0x260] sm:$0xff]
        %v4068 = vld [vmem:[%s653 + $0x268] sm:$0xff]
        %v4069 = vld [vmem:[%s653 + $0x270] sm:$0xff]
        %v4070 = vld [vmem:[%s653 + $0x278] sm:$0xff]
        %v4071 = vld [vmem:[%s653 + $0x280] sm:$0xff]
        %v4072 = vld [vmem:[%s653 + $0x288] sm:$0xff]
        %v4073 = vld [vmem:[%s653 + $0x290] sm:$0xff]
        %v4074 = vld [vmem:[%s653 + $0x298] sm:$0xff]
        %v4075 = vld [vmem:[%s653 + $0x2a0] sm:$0xff]
        %v4076 = vld [vmem:[%s653 + $0x2a8] sm:$0xff]
        %v4077 = vld [vmem:[%s653 + $0x2b0] sm:$0xff]
        %v4078 = vld [vmem:[%s653 + $0x2b8] sm:$0xff]
        %v4079 = vld [vmem:[%s653 + $0x2c0] sm:$0xff]
        %v4080 = vld [vmem:[%s653 + $0x2c8] sm:$0xff]
        %v4081 = vld [vmem:[%s653 + $0x2d0] sm:$0xff]
        %v4082 = vld [vmem:[%s653 + $0x2d8] sm:$0xff]
        %v4083 = vld [vmem:[%s653 + $0x2e0] sm:$0xff]
        %v4084 = vld [vmem:[%s653 + $0x2e8] sm:$0xff]
        %v4085 = vld [vmem:[%s653 + $0x2f0] sm:$0xff]
        %v4086 = vld [vmem:[%s653 + $0x2f8] sm:$0xff]
        %v4087 = vld [vmem:[%s653 + $0x300] sm:$0xff]
        %v4088 = vld [vmem:[%s653 + $0x308] sm:$0xff]
        %v4089 = vld [vmem:[%s653 + $0x310] sm:$0xff]
        %v4090 = vld [vmem:[%s653 + $0x318] sm:$0xff]
        %v4091 = vld [vmem:[%s653 + $0x320] sm:$0xff]
        %v4092 = vld [vmem:[%s653 + $0x328] sm:$0xff]
        %v4093 = vld [vmem:[%s653 + $0x330] sm:$0xff]
        %v4094 = vld [vmem:[%s653 + $0x338] sm:$0xff]
        %v4095 = vld [vmem:[%s653 + $0x340] sm:$0xff]
        %v4096 = vld [vmem:[%s653 + $0x348] sm:$0xff]
        %v4097 = vld [vmem:[%s653 + $0x350] sm:$0xff]
        %v4098 = vld [vmem:[%s653 + $0x358] sm:$0xff]
        %v4099 = vld [vmem:[%s653 + $0x360] sm:$0xff]
        %v4100 = vld [vmem:[%s653 + $0x368] sm:$0xff]
        %v4101 = vld [vmem:[%s653 + $0x370] sm:$0xff]
        %v4102 = vld [vmem:[%s653 + $0x378] sm:$0xff]
        %v4103 = vld [vmem:[%s653 + $0x380] sm:$0xff]
        %v4104 = vld [vmem:[%s653 + $0x388] sm:$0xff]
        %v4105 = vld [vmem:[%s653 + $0x390] sm:$0xff]
        %v4106 = vld [vmem:[%s653 + $0x398] sm:$0xff]
        %v4107 = vld [vmem:[%s653 + $0x3a0] sm:$0xff]
        %v4108 = vld [vmem:[%s653 + $0x3a8] sm:$0xff]
        %v4109 = vld [vmem:[%s653 + $0x3b0] sm:$0xff]
        %v4110 = vld [vmem:[%s653 + $0x3b8] sm:$0xff]
        %v4111 = vld [vmem:[%s653 + $0x3c0] sm:$0xff]
        %v4112 = vld [vmem:[%s653 + $0x3c8] sm:$0xff]
        %v4113 = vld [vmem:[%s653 + $0x3d0] sm:$0xff]
        %v4114 = vld [vmem:[%s653 + $0x3d8] sm:$0xff]
        %v4115 = vld [vmem:[%s653 + $0x3e0] sm:$0xff]
        %v4116 = vld [vmem:[%s653 + $0x3e8] sm:$0xff]
        %v4117 = vld [vmem:[%s653 + $0x3f0] sm:$0xff]
        %v4118 = vld [vmem:[%s653 + $0x3f8] sm:$0xff]
        %v4119 = vadd.f32 %v3991, %v3541
        %v4120 = vadd.f32 %v3992, %v3543
        %v4121 = vadd.f32 %v3993, %v3545
        %v4122 = vadd.f32 %v3994, %v3547
        %v4123 = vadd.f32 %v3995, %v3551
        %v4124 = vadd.f32 %v3996, %v3553
        %v4125 = vadd.f32 %v3997, %v3555
        %v4126 = vadd.f32 %v3998, %v3557
        %v4127 = vadd.f32 %v3999, %v3561
        %v4128 = vadd.f32 %v4000, %v3563
        %v4129 = vadd.f32 %v4001, %v3565
        %v4130 = vadd.f32 %v4002, %v3567
        %v4131 = vadd.f32 %v4003, %v3571
        %v4132 = vadd.f32 %v4004, %v3573
        %v4133 = vadd.f32 %v4005, %v3575
        %v4134 = vadd.f32 %v4006, %v3577
        %v4135 = vadd.f32 %v4007, %v3581
        %v4136 = vadd.f32 %v4008, %v3583
        %v4137 = vadd.f32 %v4009, %v3585
        %v4138 = vadd.f32 %v4010, %v3587
        %v4139 = vadd.f32 %v4011, %v3591
        %v4140 = vadd.f32 %v4012, %v3593
        %v4141 = vadd.f32 %v4013, %v3595
        %v4142 = vadd.f32 %v4014, %v3597
        %v4143 = vadd.f32 %v4015, %v3601
        %v4144 = vadd.f32 %v4016, %v3603
        %v4145 = vadd.f32 %v4017, %v3605
        %v4146 = vadd.f32 %v4018, %v3607
        %v4147 = vadd.f32 %v4019, %v3611
        %v4148 = vadd.f32 %v4020, %v3613
        %v4149 = vadd.f32 %v4021, %v3615
        %v4150 = vadd.f32 %v4022, %v3617
        %v4151 = vadd.f32 %v4023, %v3621
        %v4152 = vadd.f32 %v4024, %v3623
        %v4153 = vadd.f32 %v4025, %v3625
        %v4154 = vadd.f32 %v4026, %v3627
        %v4155 = vadd.f32 %v4027, %v3631
        %v4156 = vadd.f32 %v4028, %v3633
        %v4157 = vadd.f32 %v4029, %v3635
        %v4158 = vadd.f32 %v4030, %v3637
        %v4159 = vadd.f32 %v4031, %v3641
        %v4160 = vadd.f32 %v4032, %v3643
        %v4161 = vadd.f32 %v4033, %v3645
        %v4162 = vadd.f32 %v4034, %v3647
        %v4163 = vadd.f32 %v4035, %v3651
        %v4164 = vadd.f32 %v4036, %v3653
        %v4165 = vadd.f32 %v4037, %v3655
        %v4166 = vadd.f32 %v4038, %v3657
        %v4167 = vadd.f32 %v4039, %v3661
        %v4168 = vadd.f32 %v4040, %v3663
        %v4169 = vadd.f32 %v4041, %v3665
        %v4170 = vadd.f32 %v4042, %v3667
        %v4171 = vadd.f32 %v4043, %v3671
        %v4172 = vadd.f32 %v4044, %v3673
        %v4173 = vadd.f32 %v4045, %v3675
        %v4174 = vadd.f32 %v4046, %v3677
        %v4175 = vadd.f32 %v4047, %v3681
        %v4176 = vadd.f32 %v4048, %v3683
        %v4177 = vadd.f32 %v4049, %v3685
        %v4178 = vadd.f32 %v4050, %v3687
        %v4179 = vadd.f32 %v4051, %v3691
        %v4180 = vadd.f32 %v4052, %v3693
        %v4181 = vadd.f32 %v4053, %v3695
        %v4182 = vadd.f32 %v4054, %v3697
        %v4183 = vadd.f32 %v4055, %v3701
        %v4184 = vadd.f32 %v4056, %v3703
        %v4185 = vadd.f32 %v4057, %v3705
        %v4186 = vadd.f32 %v4058, %v3707
        %v4187 = vadd.f32 %v4059, %v3711
        %v4188 = vadd.f32 %v4060, %v3713
        %v4189 = vadd.f32 %v4061, %v3715
        %v4190 = vadd.f32 %v4062, %v3717
        %v4191 = vadd.f32 %v4063, %v3721
        %v4192 = vadd.f32 %v4064, %v3723
        %v4193 = vadd.f32 %v4065, %v3725
        %v4194 = vadd.f32 %v4066, %v3727
        %v4195 = vadd.f32 %v4067, %v3731
        %v4196 = vadd.f32 %v4068, %v3733
        %v4197 = vadd.f32 %v4069, %v3735
        %v4198 = vadd.f32 %v4070, %v3737
        %v4199 = vadd.f32 %v4071, %v3741
        %v4200 = vadd.f32 %v4072, %v3743
        %v4201 = vadd.f32 %v4073, %v3745
        %v4202 = vadd.f32 %v4074, %v3747
        %v4203 = vadd.f32 %v4075, %v3751
        %v4204 = vadd.f32 %v4076, %v3753
        %v4205 = vadd.f32 %v4077, %v3755
        %v4206 = vadd.f32 %v4078, %v3757
        %v4207 = vadd.f32 %v4079, %v3761
        %v4208 = vadd.f32 %v4080, %v3763
        %v4209 = vadd.f32 %v4081, %v3765
        %v4210 = vadd.f32 %v4082, %v3767
        %v4211 = vadd.f32 %v4083, %v3771
        %v4212 = vadd.f32 %v4084, %v3773
        %v4213 = vadd.f32 %v4085, %v3775
        %v4214 = vadd.f32 %v4086, %v3777
        %v4215 = vadd.f32 %v4087, %v3781
        %v4216 = vadd.f32 %v4088, %v3783
        %v4217 = vadd.f32 %v4089, %v3785
        %v4218 = vadd.f32 %v4090, %v3787
        %v4219 = vadd.f32 %v4091, %v3791
        %v4220 = vadd.f32 %v4092, %v3793
        %v4221 = vadd.f32 %v4093, %v3795
        %v4222 = vadd.f32 %v4094, %v3797
        %v4223 = vadd.f32 %v4095, %v3801
        %v4224 = vadd.f32 %v4096, %v3803
        %v4225 = vadd.f32 %v4097, %v3805
        %v4226 = vadd.f32 %v4098, %v3807
        %v4227 = vadd.f32 %v4099, %v3811
        %v4228 = vadd.f32 %v4100, %v3813
        %v4229 = vadd.f32 %v4101, %v3815
        %v4230 = vadd.f32 %v4102, %v3817
        %v4231 = vadd.f32 %v4103, %v3821
        %v4232 = vadd.f32 %v4104, %v3823
        %v4233 = vadd.f32 %v4105, %v3825
        %v4234 = vadd.f32 %v4106, %v3827
        %v4235 = vadd.f32 %v4107, %v3831
        %v4236 = vadd.f32 %v4108, %v3833
        %v4237 = vadd.f32 %v4109, %v3835
        %v4238 = vadd.f32 %v4110, %v3837
        %v4239 = vadd.f32 %v4111, %v3841
        %v4240 = vadd.f32 %v4112, %v3843
        %v4241 = vadd.f32 %v4113, %v3845
        %v4242 = vadd.f32 %v4114, %v3847
        %v4243 = vadd.f32 %v4115, %v3851
        %v4244 = vadd.f32 %v4116, %v3853
        %v4245 = vadd.f32 %v4117, %v3855
        %v4246 = vadd.f32 %v4118, %v3857
        %4247 = vst [vmem:[%s653] sm:$0xff] %v4119
        %4248 = vst.msk [vmem:[%s653 + $0x8] sm:$0xff] %vm1809, %v4120
        %4249 = vst [vmem:[%s653 + $0x10] sm:$0xff] %v4121
        %4250 = vst.msk [vmem:[%s653 + $0x18] sm:$0xff] %vm1809, %v4122
        %4251 = vst [vmem:[%s653 + $0x20] sm:$0xff] %v4123
        %4252 = vst.msk [vmem:[%s653 + $0x28] sm:$0xff] %vm1809, %v4124
        %4253 = vst [vmem:[%s653 + $0x30] sm:$0xff] %v4125
        %4254 = vst.msk [vmem:[%s653 + $0x38] sm:$0xff] %vm1809, %v4126
        %4255 = vst [vmem:[%s653 + $0x40] sm:$0xff] %v4127
        %4256 = vst.msk [vmem:[%s653 + $0x48] sm:$0xff] %vm1809, %v4128
        %4257 = vst [vmem:[%s653 + $0x50] sm:$0xff] %v4129
        %4258 = vst.msk [vmem:[%s653 + $0x58] sm:$0xff] %vm1809, %v4130
        %4259 = vst [vmem:[%s653 + $0x60] sm:$0xff] %v4131
        %4260 = vst.msk [vmem:[%s653 + $0x68] sm:$0xff] %vm1809, %v4132
        %4261 = vst [vmem:[%s653 + $0x70] sm:$0xff] %v4133
        %4262 = vst.msk [vmem:[%s653 + $0x78] sm:$0xff] %vm1809, %v4134
        %4263 = vst [vmem:[%s653 + $0x80] sm:$0xff] %v4135
        %4264 = vst.msk [vmem:[%s653 + $0x88] sm:$0xff] %vm1809, %v4136
        %4265 = vst [vmem:[%s653 + $0x90] sm:$0xff] %v4137
        %4266 = vst.msk [vmem:[%s653 + $0x98] sm:$0xff] %vm1809, %v4138
        %4267 = vst [vmem:[%s653 + $0xa0] sm:$0xff] %v4139
        %4268 = vst.msk [vmem:[%s653 + $0xa8] sm:$0xff] %vm1809, %v4140
        %4269 = vst [vmem:[%s653 + $0xb0] sm:$0xff] %v4141
        %4270 = vst.msk [vmem:[%s653 + $0xb8] sm:$0xff] %vm1809, %v4142
        %4271 = vst [vmem:[%s653 + $0xc0] sm:$0xff] %v4143
        %4272 = vst.msk [vmem:[%s653 + $0xc8] sm:$0xff] %vm1809, %v4144
        %4273 = vst [vmem:[%s653 + $0xd0] sm:$0xff] %v4145
        %4274 = vst.msk [vmem:[%s653 + $0xd8] sm:$0xff] %vm1809, %v4146
        %4275 = vst [vmem:[%s653 + $0xe0] sm:$0xff] %v4147
        %4276 = vst.msk [vmem:[%s653 + $0xe8] sm:$0xff] %vm1809, %v4148
        %4277 = vst [vmem:[%s653 + $0xf0] sm:$0xff] %v4149
        %4278 = vst.msk [vmem:[%s653 + $0xf8] sm:$0xff] %vm1809, %v4150
        %4279 = vst [vmem:[%s653 + $0x100] sm:$0xff] %v4151
        %4280 = vst.msk [vmem:[%s653 + $0x108] sm:$0xff] %vm1809, %v4152
        %4281 = vst [vmem:[%s653 + $0x110] sm:$0xff] %v4153
        %4282 = vst.msk [vmem:[%s653 + $0x118] sm:$0xff] %vm1809, %v4154
        %4283 = vst [vmem:[%s653 + $0x120] sm:$0xff] %v4155
        %4284 = vst.msk [vmem:[%s653 + $0x128] sm:$0xff] %vm1809, %v4156
        %4285 = vst [vmem:[%s653 + $0x130] sm:$0xff] %v4157
        %4286 = vst.msk [vmem:[%s653 + $0x138] sm:$0xff] %vm1809, %v4158
        %4287 = vst [vmem:[%s653 + $0x140] sm:$0xff] %v4159
        %4288 = vst.msk [vmem:[%s653 + $0x148] sm:$0xff] %vm1809, %v4160
        %4289 = vst [vmem:[%s653 + $0x150] sm:$0xff] %v4161
        %4290 = vst.msk [vmem:[%s653 + $0x158] sm:$0xff] %vm1809, %v4162
        %4291 = vst [vmem:[%s653 + $0x160] sm:$0xff] %v4163
        %4292 = vst.msk [vmem:[%s653 + $0x168] sm:$0xff] %vm1809, %v4164
        %4293 = vst [vmem:[%s653 + $0x170] sm:$0xff] %v4165
        %4294 = vst.msk [vmem:[%s653 + $0x178] sm:$0xff] %vm1809, %v4166
        %4295 = vst [vmem:[%s653 + $0x180] sm:$0xff] %v4167
        %4296 = vst.msk [vmem:[%s653 + $0x188] sm:$0xff] %vm1809, %v4168
        %4297 = vst [vmem:[%s653 + $0x190] sm:$0xff] %v4169
        %4298 = vst.msk [vmem:[%s653 + $0x198] sm:$0xff] %vm1809, %v4170
        %4299 = vst [vmem:[%s653 + $0x1a0] sm:$0xff] %v4171
        %4300 = vst.msk [vmem:[%s653 + $0x1a8] sm:$0xff] %vm1809, %v4172
        %4301 = vst [vmem:[%s653 + $0x1b0] sm:$0xff] %v4173
        %4302 = vst.msk [vmem:[%s653 + $0x1b8] sm:$0xff] %vm1809, %v4174
        %4303 = vst [vmem:[%s653 + $0x1c0] sm:$0xff] %v4175
        %4304 = vst.msk [vmem:[%s653 + $0x1c8] sm:$0xff] %vm1809, %v4176
        %4305 = vst [vmem:[%s653 + $0x1d0] sm:$0xff] %v4177
        %4306 = vst.msk [vmem:[%s653 + $0x1d8] sm:$0xff] %vm1809, %v4178
        %4307 = vst [vmem:[%s653 + $0x1e0] sm:$0xff] %v4179
        %4308 = vst.msk [vmem:[%s653 + $0x1e8] sm:$0xff] %vm1809, %v4180
        %4309 = vst [vmem:[%s653 + $0x1f0] sm:$0xff] %v4181
        %4310 = vst.msk [vmem:[%s653 + $0x1f8] sm:$0xff] %vm1809, %v4182
        %4311 = vst [vmem:[%s653 + $0x200] sm:$0xff] %v4183
        %4312 = vst.msk [vmem:[%s653 + $0x208] sm:$0xff] %vm1809, %v4184
        %4313 = vst [vmem:[%s653 + $0x210] sm:$0xff] %v4185
        %4314 = vst.msk [vmem:[%s653 + $0x218] sm:$0xff] %vm1809, %v4186
        %4315 = vst [vmem:[%s653 + $0x220] sm:$0xff] %v4187
        %4316 = vst.msk [vmem:[%s653 + $0x228] sm:$0xff] %vm1809, %v4188
        %4317 = vst [vmem:[%s653 + $0x230] sm:$0xff] %v4189
        %4318 = vst.msk [vmem:[%s653 + $0x238] sm:$0xff] %vm1809, %v4190
        %4319 = vst [vmem:[%s653 + $0x240] sm:$0xff] %v4191
        %4320 = vst.msk [vmem:[%s653 + $0x248] sm:$0xff] %vm1809, %v4192
        %4321 = vst [vmem:[%s653 + $0x250] sm:$0xff] %v4193
        %4322 = vst.msk [vmem:[%s653 + $0x258] sm:$0xff] %vm1809, %v4194
        %4323 = vst [vmem:[%s653 + $0x260] sm:$0xff] %v4195
        %4324 = vst.msk [vmem:[%s653 + $0x268] sm:$0xff] %vm1809, %v4196
        %4325 = vst [vmem:[%s653 + $0x270] sm:$0xff] %v4197
        %4326 = vst.msk [vmem:[%s653 + $0x278] sm:$0xff] %vm1809, %v4198
        %4327 = vst [vmem:[%s653 + $0x280] sm:$0xff] %v4199
        %4328 = vst.msk [vmem:[%s653 + $0x288] sm:$0xff] %vm1809, %v4200
        %4329 = vst [vmem:[%s653 + $0x290] sm:$0xff] %v4201
        %4330 = vst.msk [vmem:[%s653 + $0x298] sm:$0xff] %vm1809, %v4202
        %4331 = vst [vmem:[%s653 + $0x2a0] sm:$0xff] %v4203
        %4332 = vst.msk [vmem:[%s653 + $0x2a8] sm:$0xff] %vm1809, %v4204
        %4333 = vst [vmem:[%s653 + $0x2b0] sm:$0xff] %v4205
        %4334 = vst.msk [vmem:[%s653 + $0x2b8] sm:$0xff] %vm1809, %v4206
        %4335 = vst [vmem:[%s653 + $0x2c0] sm:$0xff] %v4207
        %4336 = vst.msk [vmem:[%s653 + $0x2c8] sm:$0xff] %vm1809, %v4208
        %4337 = vst [vmem:[%s653 + $0x2d0] sm:$0xff] %v4209
        %4338 = vst.msk [vmem:[%s653 + $0x2d8] sm:$0xff] %vm1809, %v4210
        %4339 = vst [vmem:[%s653 + $0x2e0] sm:$0xff] %v4211
        %4340 = vst.msk [vmem:[%s653 + $0x2e8] sm:$0xff] %vm1809, %v4212
        %4341 = vst [vmem:[%s653 + $0x2f0] sm:$0xff] %v4213
        %4342 = vst.msk [vmem:[%s653 + $0x2f8] sm:$0xff] %vm1809, %v4214
        %4343 = vst [vmem:[%s653 + $0x300] sm:$0xff] %v4215
        %4344 = vst.msk [vmem:[%s653 + $0x308] sm:$0xff] %vm1809, %v4216
        %4345 = vst [vmem:[%s653 + $0x310] sm:$0xff] %v4217
        %4346 = vst.msk [vmem:[%s653 + $0x318] sm:$0xff] %vm1809, %v4218
        %4347 = vst [vmem:[%s653 + $0x320] sm:$0xff] %v4219
        %4348 = vst.msk [vmem:[%s653 + $0x328] sm:$0xff] %vm1809, %v4220
        %4349 = vst [vmem:[%s653 + $0x330] sm:$0xff] %v4221
        %4350 = vst.msk [vmem:[%s653 + $0x338] sm:$0xff] %vm1809, %v4222
        %4351 = vst [vmem:[%s653 + $0x340] sm:$0xff] %v4223
        %4352 = vst.msk [vmem:[%s653 + $0x348] sm:$0xff] %vm1809, %v4224
        %4353 = vst [vmem:[%s653 + $0x350] sm:$0xff] %v4225
        %4354 = vst.msk [vmem:[%s653 + $0x358] sm:$0xff] %vm1809, %v4226
        %4355 = vst [vmem:[%s653 + $0x360] sm:$0xff] %v4227
        %4356 = vst.msk [vmem:[%s653 + $0x368] sm:$0xff] %vm1809, %v4228
        %4357 = vst [vmem:[%s653 + $0x370] sm:$0xff] %v4229
        %4358 = vst.msk [vmem:[%s653 + $0x378] sm:$0xff] %vm1809, %v4230
        %4359 = vst [vmem:[%s653 + $0x380] sm:$0xff] %v4231
        %4360 = vst.msk [vmem:[%s653 + $0x388] sm:$0xff] %vm1809, %v4232
        %4361 = vst [vmem:[%s653 + $0x390] sm:$0xff] %v4233
        %4362 = vst.msk [vmem:[%s653 + $0x398] sm:$0xff] %vm1809, %v4234
        %4363 = vst [vmem:[%s653 + $0x3a0] sm:$0xff] %v4235
        %4364 = vst.msk [vmem:[%s653 + $0x3a8] sm:$0xff] %vm1809, %v4236
        %4365 = vst [vmem:[%s653 + $0x3b0] sm:$0xff] %v4237
        %4366 = vst.msk [vmem:[%s653 + $0x3b8] sm:$0xff] %vm1809, %v4238
        %4367 = vst [vmem:[%s653 + $0x3c0] sm:$0xff] %v4239
        %4368 = vst.msk [vmem:[%s653 + $0x3c8] sm:$0xff] %vm1809, %v4240
        %4369 = vst [vmem:[%s653 + $0x3d0] sm:$0xff] %v4241
        %4370 = vst.msk [vmem:[%s653 + $0x3d8] sm:$0xff] %vm1809, %v4242
        %4371 = vst [vmem:[%s653 + $0x3e0] sm:$0xff] %v4243
        %4372 = vst.msk [vmem:[%s653 + $0x3e8] sm:$0xff] %vm1809, %v4244
        %4373 = vst [vmem:[%s653 + $0x3f0] sm:$0xff] %v4245
        %4374 = vst.msk [vmem:[%s653 + $0x3f8] sm:$0xff] %vm1809, %v4246
        %s4375 = smul.u32 64, %s21
        %p4376 = scmp.lt.s32.totalorder %s4375, 63
        %s4377 = scalar_select %p4376, %s4375, 63
        %s4378 = smul.addr %s4377, 2
        %s4379 = smul.addr %s4378, 8
        %s4380 = scalar_lea.vmem %s6, %s4379
        // Predicated region
        $region87: #{module_forward.1} parent=77 // pred_check
          %p4381 = pneg %p200
        $region88: #{module_forward.1} parent=77 // pred_check_branch
          %4383 = sbr.rel (%p4381) target = $region90
        $region89: #{module_forward.1} parent=77 // pred_region
          %s4384 = smul.u32 64, %s21
        $region90: #{module_forward.1} parent=77 // pred_fallthru
          _
        // Predicated region
        $region91: #{module_forward.1} parent=77 // pred_check
          %p4385 = pneg %p200
        $region92: #{module_forward.1} parent=77 // pred_check_branch
          %4387 = sbr.rel (%p4385) target = $region94
        $region93: #{module_forward.1} parent=77 // pred_region
          %s4388 = smul.u32 64, %s21
          %p4389 = scmp.lt.s32.totalorder %s4388, 63
          %s4390 = scalar_select %p4389, %s4388, 63
          %s4391 = smul.addr %s4390, 2
          %s4392 = smul.addr %s4391, 8
          %s4393 = scalar_lea.vmem %s6, %s4392
        $region94: #{module_forward.1} parent=77 // pred_fallthru
          _
      $region78: #{module_forward.1} parent=5 // pred_fallthru
        _
      %p4394 = scmp.le.s32.totalorder 2, %s12
      // Predicated region
      $region95: #{module_forward.1} parent=5 // pred_check
        %p4395 = pneg %p4394
      $region96: #{module_forward.1} parent=5 // pred_check_branch
        %4397 = sbr.rel (%p4395) target = $region98
      $region97: #{module_forward.1} parent=5 // pred_region
        %s4398 = ssub.s32 %s12, 2
      $region98: #{module_forward.1} parent=5 // pred_fallthru
        _
    $region6: #{module_forward.1} parent=1 // loop_footer
      %s16 = sadd.s32 1, %s12
    $region7: #{module_forward.1} parent=1 // loop_footer_branch
      %11 = sbr.rel target = $region3
    $region8: #{module_forward.1} parent=1 // loop_exit
      _

</llo_original>
